<compile_context>
chip_gen: v7x
topology: tpu7x:2x2x1
jax: 0.10.0
libtpu: 0.0.40
codegen_flags: <defaults>
</compile_context>

<pallas_src>
import functools
import numpy as np
import jax
import jax.numpy as jnp
from jax.experimental import pallas as pl
from jax.experimental.pallas import tpu as pltpu  # noqa: F401  (kept for flags/TODOs)


# ----------------------------------------------------------------------------
# Fused Pallas kernel: entire GraphEncoder forward, batch folded into rows
# ----------------------------------------------------------------------------

def _graph_encoder_kernel(
    adj_ref, blkmask_ref, nf_ref, ef_ref, noise_ref,
    nw1_ref, nb1_ref, nw2_ref, nb2_ref,
    ew1_ref, eb1_ref, ew2_ref, eb2_ref,
    gw_ref, cw_ref, cb_ref,
    hw1_ref, hb1_ref, hw2_ref, hb2_ref,
    out_ref,
    *, num_layers, hidden_dim, z_dim):
  f32 = jnp.float32
  H, Z, L = hidden_dim, z_dim, num_layers
  BN = nf_ref.shape[0]           # B*N rows (batch folded into rows)
  BNN = ef_ref.shape[0]          # B*N*N edge rows
  N = BNN // BN
  B = BN // N
  OUT_W = out_ref.shape[1]

  adj_bd = adj_ref[...]          # (BN, BN) block-diagonal adjacency
  blkmask = blkmask_ref[...]     # (BN, BN) 1.0 inside diagonal N x N blocks
  nf = nf_ref[...]               # (BN, node_dim)
  ef = ef_ref[...]               # (BNN, edge_dim)
  noise = noise_ref[...]         # (BN, Z)

  # ---- node MLP (fc1 + tanh + fc2 + tanh), all batches at once ----
  nh = jnp.tanh(jnp.dot(nf, nw1_ref[...], preferred_element_type=f32)
                + nb1_ref[...])
  nh = jnp.tanh(jnp.dot(nh, nw2_ref[...], preferred_element_type=f32)
                + nb2_ref[...])                           # (BN, H)

  # ---- edge MLP; the (BNN, 128) hidden never leaves VMEM ----
  eh = jnp.tanh(jnp.dot(ef, ew1_ref[...], preferred_element_type=f32)
                + eb1_ref[...])                           # (BNN, 128)
  eh = jnp.tanh(jnp.dot(eh, ew2_ref[...], preferred_element_type=f32)
                + eb2_ref[...])                           # (BNN, H)

  # Loop-invariant edge reduction, hoisted: esum[b,i,j] = sum_c eh[b,i,j,c].
  # Laid out as a block-diagonal (BN, BN) so every layer's einsum becomes one
  # batch-folded matmul.
  esum_rows = jnp.sum(eh.reshape(BN, N, H), axis=-1)      # (BN, N)
  esum_bd = jnp.concatenate([esum_rows] * B, axis=1) * blkmask   # (BN, BN)

  # ---- message-passing layers; head accumulation folded into the loop ----
  hw1 = hw1_ref[...]                                      # ((L+1)*H, 256)
  h = nh
  acc = hb1_ref[...] + jnp.dot(h, hw1[:H, :], preferred_element_type=f32)

  for layer in range(L):
    xw = jnp.dot(h, gw_ref[layer], preferred_element_type=f32)       # (BN, H)
    h1 = jnp.tanh(jnp.dot(adj_bd, xw, preferred_element_type=f32))   # (BN, H)
    e = jnp.tanh(jnp.dot(esum_bd, h1, preferred_element_type=f32))   # (BN, H)
    wc = cw_ref[layer]                                               # (2H, H)
    # concat-free combine: [h1 | e] @ Wc == h1 @ Wc[:H] + e @ Wc[H:]
    h = jnp.tanh(jnp.dot(h1, wc[:H, :], preferred_element_type=f32)
                 + jnp.dot(e, wc[H:, :], preferred_element_type=f32)
                 + cb_ref[layer:layer + 1])
    acc = acc + jnp.dot(h, hw1[(layer + 1) * H:(layer + 2) * H, :],
                        preferred_element_type=f32)

  # ---- merged mean/logstd head: one tanh, one block-diagonal fc2 matmul ----
  head = jnp.tanh(acc)                                    # (BN, 256)
  ml = (jnp.dot(head, hw2_ref[...], preferred_element_type=f32)
        + hb2_ref[...])                                   # (BN, 2Z) = [mean|logstd]
  mean = ml[:, :Z]
  logstd = ml[:, Z:]
  latent = noise * jnp.exp(logstd) + mean                 # reparameterization

  # ---- single lane-dense store: [mean | logstd | latent | zero pad] ----
  pieces = [ml, latent]
  pad = OUT_W - 3 * Z
  if pad > 0:
    pieces.append(jnp.zeros((BN, pad), f32))
  out_ref[...] = jnp.concatenate(pieces, axis=1).astype(out_ref.dtype)


# ----------------------------------------------------------------------------
# Wrapper
# ----------------------------------------------------------------------------

@functools.partial(jax.jit, static_argnums=(5, 6, 7))
def graph_encoder_forward(params, adj, node_feat, edge_feat, noise,
                          num_layers, hidden_dim, z_dim):
  B, N, node_dim = node_feat.shape
  edge_dim = edge_feat.shape[-1]
  H, Z, L = hidden_dim, z_dim, num_layers
  f32 = jnp.float32

  BN = B * N
  OUT_W = ((3 * Z + 127) // 128) * 128     # lane-dense output width

  # Batch folded into rows.
  nf2 = node_feat.reshape(BN, node_dim)
  ef2 = edge_feat.reshape(B * N * N, edge_dim)
  noise2 = noise.reshape(BN, Z)

  # Block-diagonal adjacency and block mask (cheap wrapper-side layout work).
  eye_b = jnp.eye(B, dtype=adj.dtype)
  adj_bd = jnp.einsum("bij,bc->bicj", adj, eye_b).reshape(BN, BN)
  blkmask = jnp.kron(jnp.eye(B, dtype=f32), jnp.ones((N, N), f32))

  # Stacked per-layer weights.
  gw = jnp.stack(params["gcn_w"])          # (L, H, H)
  cw = jnp.stack(params["comb_w"])         # (L, 2H, H)
  cb = jnp.stack(params["comb_b"])         # (L, H)

  def rb(b):  # biases as 2-D (1, dim)
    return b.reshape(1, -1)

  # Merged mean/logstd head: fc1 concatenated along outputs, fc2 block-diag.
  hw1 = jnp.concatenate([params["mean_fc1_w"], params["logstd_fc1_w"]], axis=1)
  hb1 = jnp.concatenate([params["mean_fc1_b"], params["logstd_fc1_b"]])[None, :]
  z128 = jnp.zeros((128, Z), f32)
  hw2 = jnp.concatenate(
      [jnp.concatenate([params["mean_fc2_w"], z128], axis=1),
       jnp.concatenate([z128, params["logstd_fc2_w"]], axis=1)], axis=0)
  hb2 = jnp.concatenate([params["mean_fc2_b"], params["logstd_fc2_b"]])[None, :]

  kern = functools.partial(_graph_encoder_kernel,
                           num_layers=L, hidden_dim=H, z_dim=Z)

  # Single invocation, no grid: every operand lives fully in VMEM (a few
  # hundred KiB at these sizes), so there is no per-grid-step overhead.
  packed = pl.pallas_call(
      kern,
      out_shape=jax.ShapeDtypeStruct((BN, OUT_W), f32),
  )(adj_bd, blkmask, nf2, ef2, noise2,
    params["node_fc1_w"], rb(params["node_fc1_b"]),
    params["node_fc2_w"], rb(params["node_fc2_b"]),
    params["edge_fc1_w"], rb(params["edge_fc1_b"]),
    params["edge_fc2_w"], rb(params["edge_fc2_b"]),
    gw, cw, cb,
    hw1, hb1, hw2, hb2)

  mean = packed[:, 0 * Z:1 * Z].reshape(B, N, Z)
  logstd = packed[:, 1 * Z:2 * Z].reshape(B, N, Z)
  latent = packed[:, 2 * Z:3 * Z].reshape(B, N, Z)
  return latent, mean, logstd


# ----------------------------------------------------------------------------
# Pure-JAX reference (for correctness check)
# ----------------------------------------------------------------------------

def graph_encoder_reference(params, adj, node_feat, edge_feat, noise, num_layers):
  tanh = jnp.tanh
  nh = tanh(node_feat @ params["node_fc1_w"] + params["node_fc1_b"])
  nh = tanh(nh @ params["node_fc2_w"] + params["node_fc2_b"])
  eh = tanh(edge_feat @ params["edge_fc1_w"] + params["edge_fc1_b"])
  eh = tanh(eh @ params["edge_fc2_w"] + params["edge_fc2_b"])
  all_hidden = [nh]
  h = nh
  for layer in range(num_layers):
    h = tanh(jnp.einsum("bij,bjk->bik", adj, h @ params["gcn_w"][layer]))
    e = tanh(jnp.einsum("bijc,bjk->bik", eh, h))
    h = tanh(jnp.concatenate([h, e], axis=-1) @ params["comb_w"][layer]
             + params["comb_b"][layer])
    all_hidden.append(h)
  hcat = jnp.concatenate(all_hidden, axis=-1)
  mean = tanh(hcat @ params["mean_fc1_w"] + params["mean_fc1_b"])
  mean = mean @ params["mean_fc2_w"] + params["mean_fc2_b"]
  logstd = tanh(hcat @ params["logstd_fc1_w"] + params["logstd_fc1_b"])
  logstd = logstd @ params["logstd_fc2_w"] + params["logstd_fc2_b"]
  latent = noise * jnp.exp(logstd) + mean
  return latent, mean, logstd


# ----------------------------------------------------------------------------
# Deterministic parameter initialization (synthetic, glorot-style)
# ----------------------------------------------------------------------------

def _glorot(key, fan_in, fan_out):
  lim = np.sqrt(6.0 / (fan_in + fan_out))
  return jax.random.uniform(key, (fan_in, fan_out), jnp.float32, -lim, lim)


def init_params(key, node_dim, edge_dim, hidden_dim, z_dim, num_layers):
  keys = jax.random.split(key, 32)
  ki = iter(range(32))
  p = {}

  def nxt():
    return keys[next(ki)]

  p["node_fc1_w"] = _glorot(nxt(), node_dim, 128)
  p["node_fc1_b"] = jax.random.uniform(nxt(), (128,), jnp.float32, -0.1, 0.1)
  p["node_fc2_w"] = _glorot(nxt(), 128, hidden_dim)
  p["node_fc2_b"] = jax.random.uniform(nxt(), (hidden_dim,), jnp.float32, -0.1, 0.1)
  p["edge_fc1_w"] = _glorot(nxt(), edge_dim, 128)
  p["edge_fc1_b"] = jax.random.uniform(nxt(), (128,), jnp.float32, -0.1, 0.1)
  p["edge_fc2_w"] = _glorot(nxt(), 128, hidden_dim)
  p["edge_fc2_b"] = jax.random.uniform(nxt(), (hidden_dim,), jnp.float32, -0.1, 0.1)

  p["gcn_w"] = [_glorot(nxt(), hidden_dim, hidden_dim) for _ in range(num_layers)]
  p["comb_w"] = [_glorot(nxt(), 2 * hidden_dim, hidden_dim) for _ in range(num_layers)]
  p["comb_b"] = [jax.random.uniform(nxt(), (hidden_dim,), jnp.float32, -0.1, 0.1)
                 for _ in range(num_layers)]

  cat_dim = (num_layers + 1) * hidden_dim
  p["mean_fc1_w"] = _glorot(nxt(), cat_dim, 128)
  p["mean_fc1_b"] = jax.random.uniform(nxt(), (128,), jnp.float32, -0.1, 0.1)
  p["mean_fc2_w"] = _glorot(nxt(), 128, z_dim)
  p["mean_fc2_b"] = jax.random.uniform(nxt(), (z_dim,), jnp.float32, -0.1, 0.1)
  p["logstd_fc1_w"] = _glorot(nxt(), cat_dim, 128)
  p["logstd_fc1_b"] = jax.random.uniform(nxt(), (128,), jnp.float32, -0.1, 0.1)
  p["logstd_fc2_w"] = _glorot(nxt(), 128, z_dim)
  p["logstd_fc2_b"] = jax.random.uniform(nxt(), (z_dim,), jnp.float32, -0.1, 0.1)
  return p


# ----------------------------------------------------------------------------
# Main
# ----------------------------------------------------------------------------

if __name__ == "__main__":
  B, N = 2, 16
  node_dim, edge_dim = 8, 4
  hidden_dim, z_dim = 32, 32
  num_layers = 3

  key = jax.random.PRNGKey(0)
  k_param, k_adj, k_node, k_edge, k_noise = jax.random.split(key, 5)

  params = init_params(k_param, node_dim, edge_dim, hidden_dim, z_dim, num_layers)

  adj = jax.random.bernoulli(k_adj, 0.3, (B, N, N)).astype(jnp.float32)
  node_feat = jax.random.normal(k_node, (B, N, node_dim), jnp.float32)
  edge_feat = jax.random.normal(k_edge, (B, N, N, edge_dim), jnp.float32)
  # gaussian noise for the reparameterization trick (torch.randn equivalent):
  noise = jax.random.normal(k_noise, (B, N, z_dim), jnp.float32)

  latent, mean, logstd = graph_encoder_forward(
      params, adj, node_feat, edge_feat, noise, num_layers, hidden_dim, z_dim)
  jax.block_until_ready((latent, mean, logstd))

  lat_ref, mean_ref, logstd_ref = graph_encoder_reference(
      params, adj, node_feat, edge_feat, noise, num_layers)

  np.testing.assert_allclose(np.asarray(mean), np.asarray(mean_ref),
                             atol=1e-4, rtol=1e-4)
  np.testing.assert_allclose(np.asarray(logstd), np.asarray(logstd_ref),
                             atol=1e-4, rtol=1e-4)
  np.testing.assert_allclose(np.asarray(latent), np.asarray(lat_ref),
                             atol=1e-4, rtol=1e-4)

  print("KERNEL_OK")
</pallas_src>

<mosaic_0001>
module attributes {stable_mosaic.version = 11 : i64} {
  func.func @_graph_encoder_kernel(%arg0: memref<32x32xf32, #tpu.memory_space<vmem>>, %arg1: memref<32x32xf32, #tpu.memory_space<vmem>>, %arg2: memref<32x8xf32, #tpu.memory_space<vmem>>, %arg3: memref<512x4xf32, #tpu.memory_space<vmem>>, %arg4: memref<32x32xf32, #tpu.memory_space<vmem>>, %arg5: memref<8x128xf32, #tpu.memory_space<vmem>>, %arg6: memref<1x128xf32, #tpu.memory_space<vmem>>, %arg7: memref<128x32xf32, #tpu.memory_space<vmem>>, %arg8: memref<1x32xf32, #tpu.memory_space<vmem>>, %arg9: memref<4x128xf32, #tpu.memory_space<vmem>>, %arg10: memref<1x128xf32, #tpu.memory_space<vmem>>, %arg11: memref<128x32xf32, #tpu.memory_space<vmem>>, %arg12: memref<1x32xf32, #tpu.memory_space<vmem>>, %arg13: memref<3x32x32xf32, #tpu.memory_space<vmem>>, %arg14: memref<3x64x32xf32, #tpu.memory_space<vmem>>, %arg15: memref<3x32xf32, #tpu.memory_space<vmem>>, %arg16: memref<128x256xf32, #tpu.memory_space<vmem>>, %arg17: memref<1x256xf32, #tpu.memory_space<vmem>>, %arg18: memref<256x64xf32, #tpu.memory_space<vmem>>, %arg19: memref<1x64xf32, #tpu.memory_space<vmem>>, %arg20: memref<32x128xf32, #tpu.memory_space<vmem>>) attributes {dimension_semantics = [], scalar_prefetch = 0 : i64, scratch_operands = 0 : i64, tpu.core_type = #tpu.core_type<tc>} {
    %c0 = arith.constant 0 : index
    %c0_0 = arith.constant 0 : index
    %0 = vector.load %arg0[%c0, %c0_0] : memref<32x32xf32, #tpu.memory_space<vmem>>, vector<32x32xf32>
    %c0_1 = arith.constant 0 : index
    %c0_2 = arith.constant 0 : index
    %1 = vector.load %arg1[%c0_1, %c0_2] : memref<32x32xf32, #tpu.memory_space<vmem>>, vector<32x32xf32>
    %c0_3 = arith.constant 0 : index
    %c0_4 = arith.constant 0 : index
    %2 = vector.load %arg2[%c0_3, %c0_4] : memref<32x8xf32, #tpu.memory_space<vmem>>, vector<32x8xf32>
    %c0_5 = arith.constant 0 : index
    %c0_6 = arith.constant 0 : index
    %3 = vector.load %arg3[%c0_5, %c0_6] : memref<512x4xf32, #tpu.memory_space<vmem>>, vector<512x4xf32>
    %c0_7 = arith.constant 0 : index
    %c0_8 = arith.constant 0 : index
    %4 = vector.load %arg4[%c0_7, %c0_8] : memref<32x32xf32, #tpu.memory_space<vmem>>, vector<32x32xf32>
    %c0_9 = arith.constant 0 : index
    %c0_10 = arith.constant 0 : index
    %5 = vector.load %arg5[%c0_9, %c0_10] : memref<8x128xf32, #tpu.memory_space<vmem>>, vector<8x128xf32>
    %cst = arith.constant dense<0.000000e+00> : vector<32x128xf32>
    %6 = tpu.matmul %2, %5, %cst {dimension_numbers = #tpu.dot_dimension_numbers<[1], [0], [0], [1], [0, 0, 1, 1], [], []>} : vector<32x8xf32>, vector<8x128xf32>, vector<32x128xf32> -> vector<32x128xf32>
    %c0_11 = arith.constant 0 : index
    %c0_12 = arith.constant 0 : index
    %7 = vector.load %arg6[%c0_11, %c0_12] : memref<1x128xf32, #tpu.memory_space<vmem>>, vector<1x128xf32>
    %8 = vector.broadcast %7 : vector<1x128xf32> to vector<32x128xf32>
    %9 = arith.addf %6, %8 : vector<32x128xf32>
    %10 = math.tanh %9 : vector<32x128xf32>
    %c0_13 = arith.constant 0 : index
    %c0_14 = arith.constant 0 : index
    %11 = vector.load %arg7[%c0_13, %c0_14] : memref<128x32xf32, #tpu.memory_space<vmem>>, vector<128x32xf32>
    %cst_15 = arith.constant dense<0.000000e+00> : vector<32x32xf32>
    %12 = tpu.matmul %10, %11, %cst_15 {dimension_numbers = #tpu.dot_dimension_numbers<[1], [0], [0], [1], [0, 0, 1, 1], [], []>} : vector<32x128xf32>, vector<128x32xf32>, vector<32x32xf32> -> vector<32x32xf32>
    %c0_16 = arith.constant 0 : index
    %c0_17 = arith.constant 0 : index
    %13 = vector.load %arg8[%c0_16, %c0_17] : memref<1x32xf32, #tpu.memory_space<vmem>>, vector<1x32xf32>
    %14 = vector.broadcast %13 : vector<1x32xf32> to vector<32x32xf32>
    %15 = arith.addf %12, %14 : vector<32x32xf32>
    %16 = math.tanh %15 : vector<32x32xf32>
    %c0_18 = arith.constant 0 : index
    %c0_19 = arith.constant 0 : index
    %17 = vector.load %arg9[%c0_18, %c0_19] : memref<4x128xf32, #tpu.memory_space<vmem>>, vector<4x128xf32>
    %cst_20 = arith.constant dense<0.000000e+00> : vector<512x128xf32>
    %18 = tpu.matmul %3, %17, %cst_20 {dimension_numbers = #tpu.dot_dimension_numbers<[1], [0], [0], [1], [0, 0, 1, 1], [], []>} : vector<512x4xf32>, vector<4x128xf32>, vector<512x128xf32> -> vector<512x128xf32>
    %c0_21 = arith.constant 0 : index
    %c0_22 = arith.constant 0 : index
    %19 = vector.load %arg10[%c0_21, %c0_22] : memref<1x128xf32, #tpu.memory_space<vmem>>, vector<1x128xf32>
    %20 = vector.broadcast %19 : vector<1x128xf32> to vector<512x128xf32>
    %21 = arith.addf %18, %20 : vector<512x128xf32>
    %22 = math.tanh %21 : vector<512x128xf32>
    %c0_23 = arith.constant 0 : index
    %c0_24 = arith.constant 0 : index
    %23 = vector.load %arg11[%c0_23, %c0_24] : memref<128x32xf32, #tpu.memory_space<vmem>>, vector<128x32xf32>
    %cst_25 = arith.constant dense<0.000000e+00> : vector<512x32xf32>
    %24 = tpu.matmul %22, %23, %cst_25 {dimension_numbers = #tpu.dot_dimension_numbers<[1], [0], [0], [1], [0, 0, 1, 1], [], []>} : vector<512x128xf32>, vector<128x32xf32>, vector<512x32xf32> -> vector<512x32xf32>
    %c0_26 = arith.constant 0 : index
    %c0_27 = arith.constant 0 : index
    %25 = vector.load %arg12[%c0_26, %c0_27] : memref<1x32xf32, #tpu.memory_space<vmem>>, vector<1x32xf32>
    %26 = vector.broadcast %25 : vector<1x32xf32> to vector<512x32xf32>
    %27 = arith.addf %24, %26 : vector<512x32xf32>
    %28 = math.tanh %27 : vector<512x32xf32>
    %29 = vector.shape_cast %28 : vector<512x32xf32> to vector<32x16x32xf32>
    %cst_28 = arith.constant dense<0.000000e+00> : vector<32x16xf32>
    %30 = vector.multi_reduction <add>, %29, %cst_28 [2] : vector<32x16x32xf32> to vector<32x16xf32>
    %31 = tpu.concatenate %30, %30 in 1 : vector<32x16xf32>, vector<32x16xf32> -> vector<32x32xf32>
    %32 = arith.mulf %31, %1 : vector<32x32xf32>
    %c0_29 = arith.constant 0 : index
    %c0_30 = arith.constant 0 : index
    %33 = vector.load %arg16[%c0_29, %c0_30] : memref<128x256xf32, #tpu.memory_space<vmem>>, vector<128x256xf32>
    %c0_31 = arith.constant 0 : index
    %c0_32 = arith.constant 0 : index
    %34 = vector.load %arg17[%c0_31, %c0_32] : memref<1x256xf32, #tpu.memory_space<vmem>>, vector<1x256xf32>
    %35 = vector.extract_strided_slice %33 {offsets = [0, 0], sizes = [32, 256], strides = [1, 1]} : vector<128x256xf32> to vector<32x256xf32>
    %cst_33 = arith.constant dense<0.000000e+00> : vector<32x256xf32>
    %36 = tpu.matmul %16, %35, %cst_33 {dimension_numbers = #tpu.dot_dimension_numbers<[1], [0], [0], [1], [0, 0, 1, 1], [], []>} : vector<32x32xf32>, vector<32x256xf32>, vector<32x256xf32> -> vector<32x256xf32>
    %37 = vector.broadcast %34 : vector<1x256xf32> to vector<32x256xf32>
    %38 = arith.addf %37, %36 : vector<32x256xf32>
    %c0_34 = arith.constant 0 : index
    %c0_35 = arith.constant 0 : index
    %c0_36 = arith.constant 0 : index
    %39 = vector.load %arg13[%c0_34, %c0_35, %c0_36] : memref<3x32x32xf32, #tpu.memory_space<vmem>>, vector<1x32x32xf32>
    %40 = vector.shape_cast %39 : vector<1x32x32xf32> to vector<32x32xf32>
    %cst_37 = arith.constant dense<0.000000e+00> : vector<32x32xf32>
    %41 = tpu.matmul %16, %40, %cst_37 {dimension_numbers = #tpu.dot_dimension_numbers<[1], [0], [0], [1], [0, 0, 1, 1], [], []>} : vector<32x32xf32>, vector<32x32xf32>, vector<32x32xf32> -> vector<32x32xf32>
    %cst_38 = arith.constant dense<0.000000e+00> : vector<32x32xf32>
    %42 = tpu.matmul %0, %41, %cst_38 {dimension_numbers = #tpu.dot_dimension_numbers<[1], [0], [0], [1], [0, 0, 1, 1], [], []>} : vector<32x32xf32>, vector<32x32xf32>, vector<32x32xf32> -> vector<32x32xf32>
    %43 = math.tanh %42 : vector<32x32xf32>
    %cst_39 = arith.constant dense<0.000000e+00> : vector<32x32xf32>
    %44 = tpu.matmul %32, %43, %cst_39 {dimension_numbers = #tpu.dot_dimension_numbers<[1], [0], [0], [1], [0, 0, 1, 1], [], []>} : vector<32x32xf32>, vector<32x32xf32>, vector<32x32xf32> -> vector<32x32xf32>
    %45 = math.tanh %44 : vector<32x32xf32>
    %c0_40 = arith.constant 0 : index
    %c0_41 = arith.constant 0 : index
    %c0_42 = arith.constant 0 : index
    %46 = vector.load %arg14[%c0_40, %c0_41, %c0_42] : memref<3x64x32xf32, #tpu.memory_space<vmem>>, vector<1x64x32xf32>
    %47 = vector.shape_cast %46 : vector<1x64x32xf32> to vector<64x32xf32>
    %48 = vector.extract_strided_slice %47 {offsets = [0, 0], sizes = [32, 32], strides = [1, 1]} : vector<64x32xf32> to vector<32x32xf32>
    %cst_43 = arith.constant dense<0.000000e+00> : vector<32x32xf32>
    %49 = tpu.matmul %43, %48, %cst_43 {dimension_numbers = #tpu.dot_dimension_numbers<[1], [0], [0], [1], [0, 0, 1, 1], [], []>} : vector<32x32xf32>, vector<32x32xf32>, vector<32x32xf32> -> vector<32x32xf32>
    %50 = vector.extract_strided_slice %47 {offsets = [32, 0], sizes = [32, 32], strides = [1, 1]} : vector<64x32xf32> to vector<32x32xf32>
    %cst_44 = arith.constant dense<0.000000e+00> : vector<32x32xf32>
    %51 = tpu.matmul %45, %50, %cst_44 {dimension_numbers = #tpu.dot_dimension_numbers<[1], [0], [0], [1], [0, 0, 1, 1], [], []>} : vector<32x32xf32>, vector<32x32xf32>, vector<32x32xf32> -> vector<32x32xf32>
    %52 = arith.addf %49, %51 : vector<32x32xf32>
    %c0_45 = arith.constant 0 : index
    %c0_46 = arith.constant 0 : index
    %53 = vector.load %arg15[%c0_45, %c0_46] : memref<3x32xf32, #tpu.memory_space<vmem>>, vector<1x32xf32>
    %54 = vector.broadcast %53 : vector<1x32xf32> to vector<32x32xf32>
    %55 = arith.addf %52, %54 : vector<32x32xf32>
    %56 = math.tanh %55 : vector<32x32xf32>
    %57 = vector.extract_strided_slice %33 {offsets = [32, 0], sizes = [32, 256], strides = [1, 1]} : vector<128x256xf32> to vector<32x256xf32>
    %cst_47 = arith.constant dense<0.000000e+00> : vector<32x256xf32>
    %58 = tpu.matmul %56, %57, %cst_47 {dimension_numbers = #tpu.dot_dimension_numbers<[1], [0], [0], [1], [0, 0, 1, 1], [], []>} : vector<32x32xf32>, vector<32x256xf32>, vector<32x256xf32> -> vector<32x256xf32>
    %59 = arith.addf %38, %58 : vector<32x256xf32>
    %c1 = arith.constant 1 : index
    %c0_48 = arith.constant 0 : index
    %c0_49 = arith.constant 0 : index
    %60 = vector.load %arg13[%c1, %c0_48, %c0_49] : memref<3x32x32xf32, #tpu.memory_space<vmem>>, vector<1x32x32xf32>
    %61 = vector.shape_cast %60 : vector<1x32x32xf32> to vector<32x32xf32>
    %cst_50 = arith.constant dense<0.000000e+00> : vector<32x32xf32>
    %62 = tpu.matmul %56, %61, %cst_50 {dimension_numbers = #tpu.dot_dimension_numbers<[1], [0], [0], [1], [0, 0, 1, 1], [], []>} : vector<32x32xf32>, vector<32x32xf32>, vector<32x32xf32> -> vector<32x32xf32>
    %cst_51 = arith.constant dense<0.000000e+00> : vector<32x32xf32>
    %63 = tpu.matmul %0, %62, %cst_51 {dimension_numbers = #tpu.dot_dimension_numbers<[1], [0], [0], [1], [0, 0, 1, 1], [], []>} : vector<32x32xf32>, vector<32x32xf32>, vector<32x32xf32> -> vector<32x32xf32>
    %64 = math.tanh %63 : vector<32x32xf32>
    %cst_52 = arith.constant dense<0.000000e+00> : vector<32x32xf32>
    %65 = tpu.matmul %32, %64, %cst_52 {dimension_numbers = #tpu.dot_dimension_numbers<[1], [0], [0], [1], [0, 0, 1, 1], [], []>} : vector<32x32xf32>, vector<32x32xf32>, vector<32x32xf32> -> vector<32x32xf32>
    %66 = math.tanh %65 : vector<32x32xf32>
    %c1_53 = arith.constant 1 : index
    %c0_54 = arith.constant 0 : index
    %c0_55 = arith.constant 0 : index
    %67 = vector.load %arg14[%c1_53, %c0_54, %c0_55] : memref<3x64x32xf32, #tpu.memory_space<vmem>>, vector<1x64x32xf32>
    %68 = vector.shape_cast %67 : vector<1x64x32xf32> to vector<64x32xf32>
    %69 = vector.extract_strided_slice %68 {offsets = [0, 0], sizes = [32, 32], strides = [1, 1]} : vector<64x32xf32> to vector<32x32xf32>
    %cst_56 = arith.constant dense<0.000000e+00> : vector<32x32xf32>
    %70 = tpu.matmul %64, %69, %cst_56 {dimension_numbers = #tpu.dot_dimension_numbers<[1], [0], [0], [1], [0, 0, 1, 1], [], []>} : vector<32x32xf32>, vector<32x32xf32>, vector<32x32xf32> -> vector<32x32xf32>
    %71 = vector.extract_strided_slice %68 {offsets = [32, 0], sizes = [32, 32], strides = [1, 1]} : vector<64x32xf32> to vector<32x32xf32>
    %cst_57 = arith.constant dense<0.000000e+00> : vector<32x32xf32>
    %72 = tpu.matmul %66, %71, %cst_57 {dimension_numbers = #tpu.dot_dimension_numbers<[1], [0], [0], [1], [0, 0, 1, 1], [], []>} : vector<32x32xf32>, vector<32x32xf32>, vector<32x32xf32> -> vector<32x32xf32>
    %73 = arith.addf %70, %72 : vector<32x32xf32>
    %c1_58 = arith.constant 1 : index
    %c0_59 = arith.constant 0 : index
    %74 = vector.load %arg15[%c1_58, %c0_59] : memref<3x32xf32, #tpu.memory_space<vmem>>, vector<1x32xf32>
    %75 = vector.broadcast %74 : vector<1x32xf32> to vector<32x32xf32>
    %76 = arith.addf %73, %75 : vector<32x32xf32>
    %77 = math.tanh %76 : vector<32x32xf32>
    %78 = vector.extract_strided_slice %33 {offsets = [64, 0], sizes = [32, 256], strides = [1, 1]} : vector<128x256xf32> to vector<32x256xf32>
    %cst_60 = arith.constant dense<0.000000e+00> : vector<32x256xf32>
    %79 = tpu.matmul %77, %78, %cst_60 {dimension_numbers = #tpu.dot_dimension_numbers<[1], [0], [0], [1], [0, 0, 1, 1], [], []>} : vector<32x32xf32>, vector<32x256xf32>, vector<32x256xf32> -> vector<32x256xf32>
    %80 = arith.addf %59, %79 : vector<32x256xf32>
    %c2 = arith.constant 2 : index
    %c0_61 = arith.constant 0 : index
    %c0_62 = arith.constant 0 : index
    %81 = vector.load %arg13[%c2, %c0_61, %c0_62] : memref<3x32x32xf32, #tpu.memory_space<vmem>>, vector<1x32x32xf32>
    %82 = vector.shape_cast %81 : vector<1x32x32xf32> to vector<32x32xf32>
    %cst_63 = arith.constant dense<0.000000e+00> : vector<32x32xf32>
    %83 = tpu.matmul %77, %82, %cst_63 {dimension_numbers = #tpu.dot_dimension_numbers<[1], [0], [0], [1], [0, 0, 1, 1], [], []>} : vector<32x32xf32>, vector<32x32xf32>, vector<32x32xf32> -> vector<32x32xf32>
    %cst_64 = arith.constant dense<0.000000e+00> : vector<32x32xf32>
    %84 = tpu.matmul %0, %83, %cst_64 {dimension_numbers = #tpu.dot_dimension_numbers<[1], [0], [0], [1], [0, 0, 1, 1], [], []>} : vector<32x32xf32>, vector<32x32xf32>, vector<32x32xf32> -> vector<32x32xf32>
    %85 = math.tanh %84 : vector<32x32xf32>
    %cst_65 = arith.constant dense<0.000000e+00> : vector<32x32xf32>
    %86 = tpu.matmul %32, %85, %cst_65 {dimension_numbers = #tpu.dot_dimension_numbers<[1], [0], [0], [1], [0, 0, 1, 1], [], []>} : vector<32x32xf32>, vector<32x32xf32>, vector<32x32xf32> -> vector<32x32xf32>
    %87 = math.tanh %86 : vector<32x32xf32>
    %c2_66 = arith.constant 2 : index
    %c0_67 = arith.constant 0 : index
    %c0_68 = arith.constant 0 : index
    %88 = vector.load %arg14[%c2_66, %c0_67, %c0_68] : memref<3x64x32xf32, #tpu.memory_space<vmem>>, vector<1x64x32xf32>
    %89 = vector.shape_cast %88 : vector<1x64x32xf32> to vector<64x32xf32>
    %90 = vector.extract_strided_slice %89 {offsets = [0, 0], sizes = [32, 32], strides = [1, 1]} : vector<64x32xf32> to vector<32x32xf32>
    %cst_69 = arith.constant dense<0.000000e+00> : vector<32x32xf32>
    %91 = tpu.matmul %85, %90, %cst_69 {dimension_numbers = #tpu.dot_dimension_numbers<[1], [0], [0], [1], [0, 0, 1, 1], [], []>} : vector<32x32xf32>, vector<32x32xf32>, vector<32x32xf32> -> vector<32x32xf32>
    %92 = vector.extract_strided_slice %89 {offsets = [32, 0], sizes = [32, 32], strides = [1, 1]} : vector<64x32xf32> to vector<32x32xf32>
    %cst_70 = arith.constant dense<0.000000e+00> : vector<32x32xf32>
    %93 = tpu.matmul %87, %92, %cst_70 {dimension_numbers = #tpu.dot_dimension_numbers<[1], [0], [0], [1], [0, 0, 1, 1], [], []>} : vector<32x32xf32>, vector<32x32xf32>, vector<32x32xf32> -> vector<32x32xf32>
    %94 = arith.addf %91, %93 : vector<32x32xf32>
    %c2_71 = arith.constant 2 : index
    %c0_72 = arith.constant 0 : index
    %95 = vector.load %arg15[%c2_71, %c0_72] : memref<3x32xf32, #tpu.memory_space<vmem>>, vector<1x32xf32>
    %96 = vector.broadcast %95 : vector<1x32xf32> to vector<32x32xf32>
    %97 = arith.addf %94, %96 : vector<32x32xf32>
    %98 = math.tanh %97 : vector<32x32xf32>
    %99 = vector.extract_strided_slice %33 {offsets = [96, 0], sizes = [32, 256], strides = [1, 1]} : vector<128x256xf32> to vector<32x256xf32>
    %cst_73 = arith.constant dense<0.000000e+00> : vector<32x256xf32>
    %100 = tpu.matmul %98, %99, %cst_73 {dimension_numbers = #tpu.dot_dimension_numbers<[1], [0], [0], [1], [0, 0, 1, 1], [], []>} : vector<32x32xf32>, vector<32x256xf32>, vector<32x256xf32> -> vector<32x256xf32>
    %101 = arith.addf %80, %100 : vector<32x256xf32>
    %102 = math.tanh %101 : vector<32x256xf32>
    %c0_74 = arith.constant 0 : index
    %c0_75 = arith.constant 0 : index
    %103 = vector.load %arg18[%c0_74, %c0_75] : memref<256x64xf32, #tpu.memory_space<vmem>>, vector<256x64xf32>
    %cst_76 = arith.constant dense<0.000000e+00> : vector<32x64xf32>
    %104 = tpu.matmul %102, %103, %cst_76 {dimension_numbers = #tpu.dot_dimension_numbers<[1], [0], [0], [1], [0, 0, 1, 1], [], []>} : vector<32x256xf32>, vector<256x64xf32>, vector<32x64xf32> -> vector<32x64xf32>
    %c0_77 = arith.constant 0 : index
    %c0_78 = arith.constant 0 : index
    %105 = vector.load %arg19[%c0_77, %c0_78] : memref<1x64xf32, #tpu.memory_space<vmem>>, vector<1x64xf32>
    %106 = vector.broadcast %105 : vector<1x64xf32> to vector<32x64xf32>
    %107 = arith.addf %104, %106 : vector<32x64xf32>
    %108 = vector.extract_strided_slice %107 {offsets = [0, 0], sizes = [32, 32], strides = [1, 1]} : vector<32x64xf32> to vector<32x32xf32>
    %109 = vector.extract_strided_slice %107 {offsets = [0, 32], sizes = [32, 32], strides = [1, 1]} : vector<32x64xf32> to vector<32x32xf32>
    %110 = math.exp %109 : vector<32x32xf32>
    %111 = arith.mulf %4, %110 : vector<32x32xf32>
    %112 = arith.addf %111, %108 : vector<32x32xf32>
    %cst_79 = arith.constant 0.000000e+00 : f32
    %113 = vector.broadcast %cst_79 : f32 to vector<32x32xf32>
    %114 = tpu.concatenate %107, %112, %113 in 1 : vector<32x64xf32>, vector<32x32xf32>, vector<32x32xf32> -> vector<32x128xf32>
    %c0_80 = arith.constant 0 : index
    %c0_81 = arith.constant 0 : index
    %115 = vector.load %arg20[%c0_80, %c0_81] : memref<32x128xf32, #tpu.memory_space<vmem>>, vector<32x128xf32>
    tpu.vector_store %arg20[%c0_80, %c0_81], %114 {strides = array<i32>} : memref<32x128xf32, #tpu.memory_space<vmem>>, vector<32x128xf32>,
    return
  }
}

</mosaic_0001>

<llo_original>
// kernel: graph_encoder_forward.1
$region0: #{graph_encoder_forward.1}
  #allocation0 [shape = 'u32[]', space=smem, size = 0x4, offset = 0x4, fixed_abs, tag = 'smem constant byte address 0x4 - core index']
  #allocation1 [shape = 'u32[144,128]{1,0:T(1,128)}', space=vmem, size = 0x12000, scoped, tag = 'internal scratch']
  %s0 = inlined_call_operand.vmem [shape: f32[32,32], index: 0, kind: input, shape index: {}]
  %s1 = inlined_call_operand.vmem [shape: f32[32,32], index: 1, kind: input, shape index: {}]
  %s2 = inlined_call_operand.vmem [shape: f32[32,8], index: 2, kind: input, shape index: {}]
  %s3 = inlined_call_operand.vmem [shape: f32[512,4], index: 3, kind: input, shape index: {}]
  %s4 = inlined_call_operand.vmem [shape: f32[32,32], index: 4, kind: input, shape index: {}]
  %s5 = inlined_call_operand.vmem [shape: f32[8,128], index: 5, kind: input, shape index: {}]
  %s6 = inlined_call_operand.vmem [shape: f32[1,128], index: 6, kind: input, shape index: {}]
  %s7 = inlined_call_operand.vmem [shape: f32[128,32], index: 7, kind: input, shape index: {}]
  %s8 = inlined_call_operand.vmem [shape: f32[1,32], index: 8, kind: input, shape index: {}]
  %s9 = inlined_call_operand.vmem [shape: f32[4,128], index: 9, kind: input, shape index: {}]
  %s10 = inlined_call_operand.vmem [shape: f32[1,128], index: 10, kind: input, shape index: {}]
  %s11 = inlined_call_operand.vmem [shape: f32[128,32], index: 11, kind: input, shape index: {}]
  %s12 = inlined_call_operand.vmem [shape: f32[1,32], index: 12, kind: input, shape index: {}]
  %s13 = inlined_call_operand.vmem [shape: f32[3,32,32], index: 13, kind: input, shape index: {}]
  %s14 = inlined_call_operand.vmem [shape: f32[3,64,32], index: 14, kind: input, shape index: {}]
  %s15 = inlined_call_operand.vmem [shape: f32[3,32], index: 15, kind: input, shape index: {}]
  %s16 = inlined_call_operand.vmem [shape: f32[128,256], index: 16, kind: input, shape index: {}]
  %s17 = inlined_call_operand.vmem [shape: f32[1,256], index: 17, kind: input, shape index: {}]
  %s18 = inlined_call_operand.vmem [shape: f32[256,64], index: 18, kind: input, shape index: {}]
  %s19 = inlined_call_operand.vmem [shape: f32[1,64], index: 19, kind: input, shape index: {}]
  %s20 = inlined_call_operand.vmem [shape: f32[32,128], index: 20, kind: output, shape index: {}]
  %s21 = sld [smem:[#allocation0]]
  $region90: #{graph_encoder_forward.1} parent=0
    _
  %s23 = ssub.s32 1, %s21
  %s24 = scalar_select 0, %s23, %s21
  // Predicated region
  $region2: #{graph_encoder_forward.1} parent=0 // pred_check
    _
  $region3: #{graph_encoder_forward.1} parent=0 // pred_check_branch
    %26 = sbr.rel (0) target = $region5
  $region4: #{graph_encoder_forward.1} parent=0 // pred_region
    _
  $region5: #{graph_encoder_forward.1} parent=0 // pred_fallthru
    _
  // Predicated region
  $region6: #{graph_encoder_forward.1} parent=0 // pred_check
    _
  $region7: #{graph_encoder_forward.1} parent=0 // pred_check_branch
    %28 = sbr.rel (0) target = $region9
  $region8: #{graph_encoder_forward.1} parent=0 // pred_region
    _
  $region9: #{graph_encoder_forward.1} parent=0 // pred_fallthru
    _
  // Predicated region
  $region10: #{graph_encoder_forward.1} parent=0 // pred_check
    _
  $region11: #{graph_encoder_forward.1} parent=0 // pred_check_branch
    %30 = sbr.rel (0) target = $region13
  $region12: #{graph_encoder_forward.1} parent=0 // pred_region
    _
  $region13: #{graph_encoder_forward.1} parent=0 // pred_fallthru
    _
  // Predicated region
  $region14: #{graph_encoder_forward.1} parent=0 // pred_check
    _
  $region15: #{graph_encoder_forward.1} parent=0 // pred_check_branch
    %32 = sbr.rel (0) target = $region17
  $region16: #{graph_encoder_forward.1} parent=0 // pred_region
    _
  $region17: #{graph_encoder_forward.1} parent=0 // pred_fallthru
    _
  // Predicated region
  $region18: #{graph_encoder_forward.1} parent=0 // pred_check
    _
  $region19: #{graph_encoder_forward.1} parent=0 // pred_check_branch
    %34 = sbr.rel (0) target = $region21
  $region20: #{graph_encoder_forward.1} parent=0 // pred_region
    _
  $region21: #{graph_encoder_forward.1} parent=0 // pred_fallthru
    _
  // Predicated region
  $region22: #{graph_encoder_forward.1} parent=0 // pred_check
    _
  $region23: #{graph_encoder_forward.1} parent=0 // pred_check_branch
    %36 = sbr.rel (0) target = $region25
  $region24: #{graph_encoder_forward.1} parent=0 // pred_region
    _
  $region25: #{graph_encoder_forward.1} parent=0 // pred_fallthru
    _
  // Predicated region
  $region26: #{graph_encoder_forward.1} parent=0 // pred_check
    _
  $region27: #{graph_encoder_forward.1} parent=0 // pred_check_branch
    %38 = sbr.rel (0) target = $region29
  $region28: #{graph_encoder_forward.1} parent=0 // pred_region
    _
  $region29: #{graph_encoder_forward.1} parent=0 // pred_fallthru
    _
  // Predicated region
  $region30: #{graph_encoder_forward.1} parent=0 // pred_check
    _
  $region31: #{graph_encoder_forward.1} parent=0 // pred_check_branch
    %40 = sbr.rel (0) target = $region33
  $region32: #{graph_encoder_forward.1} parent=0 // pred_region
    _
  $region33: #{graph_encoder_forward.1} parent=0 // pred_fallthru
    _
  // Predicated region
  $region34: #{graph_encoder_forward.1} parent=0 // pred_check
    _
  $region35: #{graph_encoder_forward.1} parent=0 // pred_check_branch
    %42 = sbr.rel (0) target = $region37
  $region36: #{graph_encoder_forward.1} parent=0 // pred_region
    _
  $region37: #{graph_encoder_forward.1} parent=0 // pred_fallthru
    _
  // Predicated region
  $region38: #{graph_encoder_forward.1} parent=0 // pred_check
    _
  $region39: #{graph_encoder_forward.1} parent=0 // pred_check_branch
    %44 = sbr.rel (0) target = $region41
  $region40: #{graph_encoder_forward.1} parent=0 // pred_region
    _
  $region41: #{graph_encoder_forward.1} parent=0 // pred_fallthru
    _
  // Predicated region
  $region42: #{graph_encoder_forward.1} parent=0 // pred_check
    _
  $region43: #{graph_encoder_forward.1} parent=0 // pred_check_branch
    %46 = sbr.rel (0) target = $region45
  $region44: #{graph_encoder_forward.1} parent=0 // pred_region
    _
  $region45: #{graph_encoder_forward.1} parent=0 // pred_fallthru
    _
  // Predicated region
  $region46: #{graph_encoder_forward.1} parent=0 // pred_check
    _
  $region47: #{graph_encoder_forward.1} parent=0 // pred_check_branch
    %48 = sbr.rel (0) target = $region49
  $region48: #{graph_encoder_forward.1} parent=0 // pred_region
    _
  $region49: #{graph_encoder_forward.1} parent=0 // pred_fallthru
    _
  // Predicated region
  $region50: #{graph_encoder_forward.1} parent=0 // pred_check
    _
  $region51: #{graph_encoder_forward.1} parent=0 // pred_check_branch
    %50 = sbr.rel (0) target = $region53
  $region52: #{graph_encoder_forward.1} parent=0 // pred_region
    _
  $region53: #{graph_encoder_forward.1} parent=0 // pred_fallthru
    _
  // Predicated region
  $region54: #{graph_encoder_forward.1} parent=0 // pred_check
    _
  $region55: #{graph_encoder_forward.1} parent=0 // pred_check_branch
    %52 = sbr.rel (0) target = $region57
  $region56: #{graph_encoder_forward.1} parent=0 // pred_region
    _
  $region57: #{graph_encoder_forward.1} parent=0 // pred_fallthru
    _
  // Predicated region
  $region58: #{graph_encoder_forward.1} parent=0 // pred_check
    _
  $region59: #{graph_encoder_forward.1} parent=0 // pred_check_branch
    %54 = sbr.rel (0) target = $region61
  $region60: #{graph_encoder_forward.1} parent=0 // pred_region
    _
  $region61: #{graph_encoder_forward.1} parent=0 // pred_fallthru
    _
  // Predicated region
  $region62: #{graph_encoder_forward.1} parent=0 // pred_check
    _
  $region63: #{graph_encoder_forward.1} parent=0 // pred_check_branch
    %56 = sbr.rel (0) target = $region65
  $region64: #{graph_encoder_forward.1} parent=0 // pred_region
    _
  $region65: #{graph_encoder_forward.1} parent=0 // pred_fallthru
    _
  // Predicated region
  $region66: #{graph_encoder_forward.1} parent=0 // pred_check
    _
  $region67: #{graph_encoder_forward.1} parent=0 // pred_check_branch
    %58 = sbr.rel (0) target = $region69
  $region68: #{graph_encoder_forward.1} parent=0 // pred_region
    _
  $region69: #{graph_encoder_forward.1} parent=0 // pred_fallthru
    _
  // Predicated region
  $region70: #{graph_encoder_forward.1} parent=0 // pred_check
    _
  $region71: #{graph_encoder_forward.1} parent=0 // pred_check_branch
    %60 = sbr.rel (0) target = $region73
  $region72: #{graph_encoder_forward.1} parent=0 // pred_region
    _
  $region73: #{graph_encoder_forward.1} parent=0 // pred_fallthru
    _
  // Predicated region
  $region74: #{graph_encoder_forward.1} parent=0 // pred_check
    _
  $region75: #{graph_encoder_forward.1} parent=0 // pred_check_branch
    %62 = sbr.rel (0) target = $region77
  $region76: #{graph_encoder_forward.1} parent=0 // pred_region
    _
  $region77: #{graph_encoder_forward.1} parent=0 // pred_fallthru
    _
  // Predicated region
  $region78: #{graph_encoder_forward.1} parent=0 // pred_check
    _
  $region79: #{graph_encoder_forward.1} parent=0 // pred_check_branch
    %64 = sbr.rel (0) target = $region81
  $region80: #{graph_encoder_forward.1} parent=0 // pred_region
    _
  $region81: #{graph_encoder_forward.1} parent=0 // pred_fallthru
    _
  %v65 = vld [vmem:[%s0] sm:$0xff]
  %v66 = vld [vmem:[%s0 + $0x8] sm:$0xff]
  %v67 = vld [vmem:[%s0 + $0x10] sm:$0xff]
  %v68 = vld [vmem:[%s0 + $0x18] sm:$0xff]
  %v69 = vld [vmem:[%s1] sm:$0xff]
  %v70 = vld [vmem:[%s1 + $0x8] sm:$0xff]
  %v71 = vld [vmem:[%s1 + $0x10] sm:$0xff]
  %v72 = vld [vmem:[%s1 + $0x18] sm:$0xff]
  %v73 = vld [vmem:[%s2] sm:$0xff]
  %v74 = vld [vmem:[%s2 + $0x8] sm:$0xff]
  %v75 = vld [vmem:[%s2 + $0x10] sm:$0xff]
  %v76 = vld [vmem:[%s2 + $0x18] sm:$0xff]
  %v77 = vld [vmem:[%s3] sm:$0xff]
  %v78 = vld [vmem:[%s3 + $0x8] sm:$0xff]
  %v79 = vld [vmem:[%s3 + $0x10] sm:$0xff]
  %v80 = vld [vmem:[%s3 + $0x18] sm:$0xff]
  %v81 = vld [vmem:[%s3 + $0x20] sm:$0xff]
  %v82 = vld [vmem:[%s3 + $0x28] sm:$0xff]
  %v83 = vld [vmem:[%s3 + $0x30] sm:$0xff]
  %v84 = vld [vmem:[%s3 + $0x38] sm:$0xff]
  %v85 = vld [vmem:[%s3 + $0x40] sm:$0xff]
  %v86 = vld [vmem:[%s3 + $0x48] sm:$0xff]
  %v87 = vld [vmem:[%s3 + $0x50] sm:$0xff]
  %v88 = vld [vmem:[%s3 + $0x58] sm:$0xff]
  %v89 = vld [vmem:[%s3 + $0x60] sm:$0xff]
  %v90 = vld [vmem:[%s3 + $0x68] sm:$0xff]
  %v91 = vld [vmem:[%s3 + $0x70] sm:$0xff]
  %v92 = vld [vmem:[%s3 + $0x78] sm:$0xff]
  %v93 = vld [vmem:[%s3 + $0x80] sm:$0xff]
  %v94 = vld [vmem:[%s3 + $0x88] sm:$0xff]
  %v95 = vld [vmem:[%s3 + $0x90] sm:$0xff]
  %v96 = vld [vmem:[%s3 + $0x98] sm:$0xff]
  %v97 = vld [vmem:[%s3 + $0xa0] sm:$0xff]
  %v98 = vld [vmem:[%s3 + $0xa8] sm:$0xff]
  %v99 = vld [vmem:[%s3 + $0xb0] sm:$0xff]
  %v100 = vld [vmem:[%s3 + $0xb8] sm:$0xff]
  %v101 = vld [vmem:[%s3 + $0xc0] sm:$0xff]
  %v102 = vld [vmem:[%s3 + $0xc8] sm:$0xff]
  %v103 = vld [vmem:[%s3 + $0xd0] sm:$0xff]
  %v104 = vld [vmem:[%s3 + $0xd8] sm:$0xff]
  %v105 = vld [vmem:[%s3 + $0xe0] sm:$0xff]
  %v106 = vld [vmem:[%s3 + $0xe8] sm:$0xff]
  %v107 = vld [vmem:[%s3 + $0xf0] sm:$0xff]
  %v108 = vld [vmem:[%s3 + $0xf8] sm:$0xff]
  %v109 = vld [vmem:[%s3 + $0x100] sm:$0xff]
  %v110 = vld [vmem:[%s3 + $0x108] sm:$0xff]
  %v111 = vld [vmem:[%s3 + $0x110] sm:$0xff]
  %v112 = vld [vmem:[%s3 + $0x118] sm:$0xff]
  %v113 = vld [vmem:[%s3 + $0x120] sm:$0xff]
  %v114 = vld [vmem:[%s3 + $0x128] sm:$0xff]
  %v115 = vld [vmem:[%s3 + $0x130] sm:$0xff]
  %v116 = vld [vmem:[%s3 + $0x138] sm:$0xff]
  %v117 = vld [vmem:[%s3 + $0x140] sm:$0xff]
  %v118 = vld [vmem:[%s3 + $0x148] sm:$0xff]
  %v119 = vld [vmem:[%s3 + $0x150] sm:$0xff]
  %v120 = vld [vmem:[%s3 + $0x158] sm:$0xff]
  %v121 = vld [vmem:[%s3 + $0x160] sm:$0xff]
  %v122 = vld [vmem:[%s3 + $0x168] sm:$0xff]
  %v123 = vld [vmem:[%s3 + $0x170] sm:$0xff]
  %v124 = vld [vmem:[%s3 + $0x178] sm:$0xff]
  %v125 = vld [vmem:[%s3 + $0x180] sm:$0xff]
  %v126 = vld [vmem:[%s3 + $0x188] sm:$0xff]
  %v127 = vld [vmem:[%s3 + $0x190] sm:$0xff]
  %v128 = vld [vmem:[%s3 + $0x198] sm:$0xff]
  %v129 = vld [vmem:[%s3 + $0x1a0] sm:$0xff]
  %v130 = vld [vmem:[%s3 + $0x1a8] sm:$0xff]
  %v131 = vld [vmem:[%s3 + $0x1b0] sm:$0xff]
  %v132 = vld [vmem:[%s3 + $0x1b8] sm:$0xff]
  %v133 = vld [vmem:[%s3 + $0x1c0] sm:$0xff]
  %v134 = vld [vmem:[%s3 + $0x1c8] sm:$0xff]
  %v135 = vld [vmem:[%s3 + $0x1d0] sm:$0xff]
  %v136 = vld [vmem:[%s3 + $0x1d8] sm:$0xff]
  %v137 = vld [vmem:[%s3 + $0x1e0] sm:$0xff]
  %v138 = vld [vmem:[%s3 + $0x1e8] sm:$0xff]
  %v139 = vld [vmem:[%s3 + $0x1f0] sm:$0xff]
  %v140 = vld [vmem:[%s3 + $0x1f8] sm:$0xff]
  %v141 = vld [vmem:[%s4] sm:$0xff]
  %v142 = vld [vmem:[%s4 + $0x8] sm:$0xff]
  %v143 = vld [vmem:[%s4 + $0x10] sm:$0xff]
  %v144 = vld [vmem:[%s4 + $0x18] sm:$0xff]
  %v145 = vld [vmem:[%s5] sm:$0xff]
  %v146 = vld [vmem:[%s6] sm:$0x1]
  %v148 = vlaneseq
  %v149 = vshrl.u32 %v148, 7
  %v150 = vsub.s32 0, %v149
  %v151 = vrot.slane %v146, %v150
  %vm153 = vcmask 64512
  %v155 = vsel %vm153, %v73, 0
  %v158 = vsel %vm153, %v74, 0
  %v161 = vsel %vm153, %v75, 0
  %v164 = vsel %vm153, %v76, 0
  %166 = vmatprep.subr.mxu0 0.0
  %167 = vmatpush1.msra.mxu0 %v145
  %168 = vmatprep.subr.mxu0 0.0
  %169 = vmatpush1.msra.mxu0 0.0
  %170 = vmatprep.subr.mxu0 0.0
  %171 = vmatpush1.msra.mxu0 0.0
  %172 = vmatprep.subr.mxu0 0.0
  %173 = vmatpush1.msra.mxu0 0.0
  %174 = vmatprep.subr.mxu0 0.0
  %175 = vmatpush1.msra.mxu0 0.0
  %176 = vmatprep.subr.mxu0 0.0
  %177 = vmatpush1.msra.mxu0 0.0
  %178 = vmatprep.subr.mxu0 0.0
  %179 = vmatpush1.msra.mxu0 0.0
  %180 = vmatprep.subr.mxu0 0.0
  %181 = vmatpush1.msra.mxu0 0.0
  %182 = vmatprep.subr.mxu0 0.0
  %183 = vmatpush1.msra.mxu0 0.0
  %184 = vmatprep.subr.mxu0 0.0
  %185 = vmatpush1.msra.mxu0 0.0
  %186 = vmatprep.subr.mxu0 0.0
  %187 = vmatpush1.msra.mxu0 0.0
  %188 = vmatprep.subr.mxu0 0.0
  %189 = vmatpush1.msra.mxu0 0.0
  %190 = vmatprep.subr.mxu0 0.0
  %191 = vmatpush1.msra.mxu0 0.0
  %192 = vmatprep.subr.mxu0 0.0
  %193 = vmatpush1.msra.mxu0 0.0
  %194 = vmatprep.subr.mxu0 0.0
  %195 = vmatpush1.msra.mxu0 0.0
  %196 = vmatprep.subr.mxu0 0.0
  %197 = vmatpush1.msra.mxu0 0.0
  %198 = vmatprep.subr.mxu0 0.0
  %199 = vmatpush1.msra.mxu0 0.0
  %200 = vmatprep.subr.mxu0 0.0
  %201 = vmatpush1.msra.mxu0 0.0
  %202 = vmatprep.subr.mxu0 0.0
  %203 = vmatpush1.msra.mxu0 0.0
  %204 = vmatprep.subr.mxu0 0.0
  %205 = vmatpush1.msra.mxu0 0.0
  %206 = vmatprep.subr.mxu0 0.0
  %207 = vmatpush1.msra.mxu0 0.0
  %208 = vmatprep.subr.mxu0 0.0
  %209 = vmatpush1.msra.mxu0 0.0
  %210 = vmatprep.subr.mxu0 0.0
  %211 = vmatpush1.msra.mxu0 0.0
  %212 = vmatprep.subr.mxu0 0.0
  %213 = vmatpush1.msra.mxu0 0.0
  %214 = vmatprep.subr.mxu0 0.0
  %215 = vmatpush1.msra.mxu0 0.0
  %216 = vmatprep.subr.mxu0 0.0
  %217 = vmatpush1.msra.mxu0 0.0
  %218 = vmatprep.subr.mxu0 0.0
  %219 = vmatpush1.msra.mxu0 0.0
  %220 = vmatprep.subr.mxu0 0.0
  %221 = vmatpush1.msra.mxu0 0.0
  %222 = vmatprep.subr.mxu0 0.0
  %223 = vmatpush1.msra.mxu0 0.0
  %224 = vmatprep.subr.mxu0 0.0
  %225 = vmatpush1.msra.mxu0 0.0
  %226 = vmatprep.subr.mxu0 0.0
  %227 = vmatpush1.msra.mxu0 0.0
  %228 = vmatprep.subr.mxu0 0.0
  %229 = vmatpush1.msra.mxu0 0.0
  %230 = vmatprep.mubr.f32.mxu0 0.0
  %231 = vmatmul.mubr.f32.gmra.mrb[0].mxu0 %v155
  %v232 = vpop.f32.mrb[0].mxu0
  %v233 = vadd.f32 %v151, %v232
  %v234 = vpop.f32.mrb[0].mxu0
  %235 = vmatprep.mubr.f32.mxu0 0.0
  %236 = vmatmul.mubr.f32.gmra.mrb[0].mxu0 %v158
  %v237 = vpop.f32.mrb[0].mxu0
  %v238 = vadd.f32 %v151, %v237
  %v239 = vpop.f32.mrb[0].mxu0
  %240 = vmatprep.mubr.f32.mxu0 0.0
  %241 = vmatmul.mubr.f32.gmra.mrb[0].mxu0 %v161
  %v242 = vpop.f32.mrb[0].mxu0
  %v243 = vadd.f32 %v151, %v242
  %v244 = vpop.f32.mrb[0].mxu0
  %245 = vmatprep.mubr.f32.mxu0 0.0
  %246 = vmatmul.mubr.f32.gmra.mrb[0].mxu0 %v164
  %v247 = vpop.f32.mrb[0].mxu0
  %v248 = vadd.f32 %v151, %v247
  %v249 = vpop.f32.mrb[0].mxu0
  %250 = vdwg.mxu0
  %v251 = vtanh.pop %v233
  %v252 = vtanh.pop %v238
  %v253 = vtanh.pop %v243
  %v254 = vtanh.pop %v248
  %v255 = vld [vmem:[%s7] sm:$0xff]
  %v256 = vld [vmem:[%s7 + $0x8] sm:$0xff]
  %v257 = vld [vmem:[%s7 + $0x10] sm:$0xff]
  %v258 = vld [vmem:[%s7 + $0x18] sm:$0xff]
  %v259 = vld [vmem:[%s7 + $0x20] sm:$0xff]
  %v260 = vld [vmem:[%s7 + $0x28] sm:$0xff]
  %v261 = vld [vmem:[%s7 + $0x30] sm:$0xff]
  %v262 = vld [vmem:[%s7 + $0x38] sm:$0xff]
  %v263 = vld [vmem:[%s7 + $0x40] sm:$0xff]
  %v264 = vld [vmem:[%s7 + $0x48] sm:$0xff]
  %v265 = vld [vmem:[%s7 + $0x50] sm:$0xff]
  %v266 = vld [vmem:[%s7 + $0x58] sm:$0xff]
  %v267 = vld [vmem:[%s7 + $0x60] sm:$0xff]
  %v268 = vld [vmem:[%s7 + $0x68] sm:$0xff]
  %v269 = vld [vmem:[%s7 + $0x70] sm:$0xff]
  %v270 = vld [vmem:[%s7 + $0x78] sm:$0xff]
  %v271 = vld [vmem:[%s8] sm:$0x1]
  %v273 = vlaneseq
  %v274 = vshrl.u32 %v273, 7
  %v275 = vsub.s32 0, %v274
  %v276 = vrot.slane %v271, %v275
  %278 = vmatprep.subr.mxu0 0.0
  %279 = vmatpush1.msra.mxu0 %v255
  %280 = vmatprep.subr.mxu0 0.0
  %281 = vmatpush1.msra.mxu0 %v256
  %282 = vmatprep.subr.mxu0 0.0
  %283 = vmatpush1.msra.mxu0 %v257
  %284 = vmatprep.subr.mxu0 0.0
  %285 = vmatpush1.msra.mxu0 %v258
  %286 = vmatprep.subr.mxu0 0.0
  %287 = vmatpush1.msra.mxu0 %v259
  %288 = vmatprep.subr.mxu0 0.0
  %289 = vmatpush1.msra.mxu0 %v260
  %290 = vmatprep.subr.mxu0 0.0
  %291 = vmatpush1.msra.mxu0 %v261
  %292 = vmatprep.subr.mxu0 0.0
  %293 = vmatpush1.msra.mxu0 %v262
  %294 = vmatprep.subr.mxu0 0.0
  %295 = vmatpush1.msra.mxu0 %v263
  %296 = vmatprep.subr.mxu0 0.0
  %297 = vmatpush1.msra.mxu0 %v264
  %298 = vmatprep.subr.mxu0 0.0
  %299 = vmatpush1.msra.mxu0 %v265
  %300 = vmatprep.subr.mxu0 0.0
  %301 = vmatpush1.msra.mxu0 %v266
  %302 = vmatprep.subr.mxu0 0.0
  %303 = vmatpush1.msra.mxu0 %v267
  %304 = vmatprep.subr.mxu0 0.0
  %305 = vmatpush1.msra.mxu0 %v268
  %306 = vmatprep.subr.mxu0 0.0
  %307 = vmatpush1.msra.mxu0 %v269
  %308 = vmatprep.subr.mxu0 0.0
  %309 = vmatpush1.msra.mxu0 %v270
  %310 = vmatprep.subr.mxu0 0.0
  %311 = vmatpush1.msra.mxu0 0.0
  %312 = vmatprep.subr.mxu0 0.0
  %313 = vmatpush1.msra.mxu0 0.0
  %314 = vmatprep.subr.mxu0 0.0
  %315 = vmatpush1.msra.mxu0 0.0
  %316 = vmatprep.subr.mxu0 0.0
  %317 = vmatpush1.msra.mxu0 0.0
  %318 = vmatprep.subr.mxu0 0.0
  %319 = vmatpush1.msra.mxu0 0.0
  %320 = vmatprep.subr.mxu0 0.0
  %321 = vmatpush1.msra.mxu0 0.0
  %322 = vmatprep.subr.mxu0 0.0
  %323 = vmatpush1.msra.mxu0 0.0
  %324 = vmatprep.subr.mxu0 0.0
  %325 = vmatpush1.msra.mxu0 0.0
  %326 = vmatprep.subr.mxu0 0.0
  %327 = vmatpush1.msra.mxu0 0.0
  %328 = vmatprep.subr.mxu0 0.0
  %329 = vmatpush1.msra.mxu0 0.0
  %330 = vmatprep.subr.mxu0 0.0
  %331 = vmatpush1.msra.mxu0 0.0
  %332 = vmatprep.subr.mxu0 0.0
  %333 = vmatpush1.msra.mxu0 0.0
  %334 = vmatprep.subr.mxu0 0.0
  %335 = vmatpush1.msra.mxu0 0.0
  %336 = vmatprep.subr.mxu0 0.0
  %337 = vmatpush1.msra.mxu0 0.0
  %338 = vmatprep.subr.mxu0 0.0
  %339 = vmatpush1.msra.mxu0 0.0
  %340 = vmatprep.subr.mxu0 0.0
  %341 = vmatpush1.msra.mxu0 0.0
  %342 = vmatprep.mubr.f32.mxu0 0.0
  %343 = vmatmul.mubr.f32.gmra.mrb[0].mxu0 %v251
  %v344 = vpop.f32.mrb[0].mxu0
  %v345 = vadd.f32 %v276, %v344
  %v346 = vpop.f32.mrb[0].mxu0
  %347 = vmatprep.mubr.f32.mxu0 0.0
  %348 = vmatmul.mubr.f32.gmra.mrb[0].mxu0 %v252
  %v349 = vpop.f32.mrb[0].mxu0
  %v350 = vadd.f32 %v276, %v349
  %v351 = vpop.f32.mrb[0].mxu0
  %352 = vmatprep.mubr.f32.mxu0 0.0
  %353 = vmatmul.mubr.f32.gmra.mrb[0].mxu0 %v253
  %v354 = vpop.f32.mrb[0].mxu0
  %v355 = vadd.f32 %v276, %v354
  %v356 = vpop.f32.mrb[0].mxu0
  %357 = vmatprep.mubr.f32.mxu0 0.0
  %358 = vmatmul.mubr.f32.gmra.mrb[0].mxu0 %v254
  %v359 = vpop.f32.mrb[0].mxu0
  %v360 = vadd.f32 %v276, %v359
  %v361 = vpop.f32.mrb[0].mxu0
  %362 = vdwg.mxu0
  %v363 = vtanh.pop %v345
  %v364 = vtanh.pop %v350
  %v365 = vtanh.pop %v355
  %v366 = vtanh.pop %v360
  %v367 = vld [vmem:[%s9] sm:$0xf]
  %v368 = vld [vmem:[%s10] sm:$0x1]
  %v370 = vlaneseq
  %v371 = vshrl.u32 %v370, 7
  %v372 = vsub.s32 0, %v371
  %v373 = vrot.slane %v368, %v372
  %vm375 = vcmask 31744
  %v377 = vsel %vm375, %v77, 0
  %v380 = vsel %vm375, %v78, 0
  %v383 = vsel %vm375, %v79, 0
  %v386 = vsel %vm375, %v80, 0
  %v389 = vsel %vm375, %v81, 0
  %v392 = vsel %vm375, %v82, 0
  %v395 = vsel %vm375, %v83, 0
  %v398 = vsel %vm375, %v84, 0
  %v401 = vsel %vm375, %v85, 0
  %v404 = vsel %vm375, %v86, 0
  %v407 = vsel %vm375, %v87, 0
  %v410 = vsel %vm375, %v88, 0
  %v413 = vsel %vm375, %v89, 0
  %v416 = vsel %vm375, %v90, 0
  %v419 = vsel %vm375, %v91, 0
  %v422 = vsel %vm375, %v92, 0
  %v425 = vsel %vm375, %v93, 0
  %v428 = vsel %vm375, %v94, 0
  %v431 = vsel %vm375, %v95, 0
  %v434 = vsel %vm375, %v96, 0
  %v437 = vsel %vm375, %v97, 0
  %v440 = vsel %vm375, %v98, 0
  %v443 = vsel %vm375, %v99, 0
  %v446 = vsel %vm375, %v100, 0
  %v449 = vsel %vm375, %v101, 0
  %v452 = vsel %vm375, %v102, 0
  %v455 = vsel %vm375, %v103, 0
  %v458 = vsel %vm375, %v104, 0
  %v461 = vsel %vm375, %v105, 0
  %v464 = vsel %vm375, %v106, 0
  %v467 = vsel %vm375, %v107, 0
  %v470 = vsel %vm375, %v108, 0
  %v473 = vsel %vm375, %v109, 0
  %v476 = vsel %vm375, %v110, 0
  %v479 = vsel %vm375, %v111, 0
  %v482 = vsel %vm375, %v112, 0
  %v485 = vsel %vm375, %v113, 0
  %v488 = vsel %vm375, %v114, 0
  %v491 = vsel %vm375, %v115, 0
  %v494 = vsel %vm375, %v116, 0
  %v497 = vsel %vm375, %v117, 0
  %v500 = vsel %vm375, %v118, 0
  %v503 = vsel %vm375, %v119, 0
  %v506 = vsel %vm375, %v120, 0
  %v509 = vsel %vm375, %v121, 0
  %v512 = vsel %vm375, %v122, 0
  %v515 = vsel %vm375, %v123, 0
  %v518 = vsel %vm375, %v124, 0
  %v521 = vsel %vm375, %v125, 0
  %v524 = vsel %vm375, %v126, 0
  %v527 = vsel %vm375, %v127, 0
  %v530 = vsel %vm375, %v128, 0
  %v533 = vsel %vm375, %v129, 0
  %v536 = vsel %vm375, %v130, 0
  %v539 = vsel %vm375, %v131, 0
  %v542 = vsel %vm375, %v132, 0
  %v545 = vsel %vm375, %v133, 0
  %v548 = vsel %vm375, %v134, 0
  %v551 = vsel %vm375, %v135, 0
  %v554 = vsel %vm375, %v136, 0
  %v557 = vsel %vm375, %v137, 0
  %v560 = vsel %vm375, %v138, 0
  %v563 = vsel %vm375, %v139, 0
  %v566 = vsel %vm375, %v140, 0
  %vm568 = vcmask 1043456
  %v570 = vsel %vm568, %v367, 0
  %572 = vmatprep.subr.mxu0 0.0
  %573 = vmatpush1.msra.mxu0 %v570
  %574 = vmatprep.subr.mxu0 0.0
  %575 = vmatpush1.msra.mxu0 0.0
  %576 = vmatprep.subr.mxu0 0.0
  %577 = vmatpush1.msra.mxu0 0.0
  %578 = vmatprep.subr.mxu0 0.0
  %579 = vmatpush1.msra.mxu0 0.0
  %580 = vmatprep.subr.mxu0 0.0
  %581 = vmatpush1.msra.mxu0 0.0
  %582 = vmatprep.subr.mxu0 0.0
  %583 = vmatpush1.msra.mxu0 0.0
  %584 = vmatprep.subr.mxu0 0.0
  %585 = vmatpush1.msra.mxu0 0.0
  %586 = vmatprep.subr.mxu0 0.0
  %587 = vmatpush1.msra.mxu0 0.0
  %588 = vmatprep.subr.mxu0 0.0
  %589 = vmatpush1.msra.mxu0 0.0
  %590 = vmatprep.subr.mxu0 0.0
  %591 = vmatpush1.msra.mxu0 0.0
  %592 = vmatprep.subr.mxu0 0.0
  %593 = vmatpush1.msra.mxu0 0.0
  %594 = vmatprep.subr.mxu0 0.0
  %595 = vmatpush1.msra.mxu0 0.0
  %596 = vmatprep.subr.mxu0 0.0
  %597 = vmatpush1.msra.mxu0 0.0
  %598 = vmatprep.subr.mxu0 0.0
  %599 = vmatpush1.msra.mxu0 0.0
  %600 = vmatprep.subr.mxu0 0.0
  %601 = vmatpush1.msra.mxu0 0.0
  %602 = vmatprep.subr.mxu0 0.0
  %603 = vmatpush1.msra.mxu0 0.0
  %604 = vmatprep.subr.mxu0 0.0
  %605 = vmatpush1.msra.mxu0 0.0
  %606 = vmatprep.subr.mxu0 0.0
  %607 = vmatpush1.msra.mxu0 0.0
  %608 = vmatprep.subr.mxu0 0.0
  %609 = vmatpush1.msra.mxu0 0.0
  %610 = vmatprep.subr.mxu0 0.0
  %611 = vmatpush1.msra.mxu0 0.0
  %612 = vmatprep.subr.mxu0 0.0
  %613 = vmatpush1.msra.mxu0 0.0
  %614 = vmatprep.subr.mxu0 0.0
  %615 = vmatpush1.msra.mxu0 0.0
  %616 = vmatprep.subr.mxu0 0.0
  %617 = vmatpush1.msra.mxu0 0.0
  %618 = vmatprep.subr.mxu0 0.0
  %619 = vmatpush1.msra.mxu0 0.0
  %620 = vmatprep.subr.mxu0 0.0
  %621 = vmatpush1.msra.mxu0 0.0
  %622 = vmatprep.subr.mxu0 0.0
  %623 = vmatpush1.msra.mxu0 0.0
  %624 = vmatprep.subr.mxu0 0.0
  %625 = vmatpush1.msra.mxu0 0.0
  %626 = vmatprep.subr.mxu0 0.0
  %627 = vmatpush1.msra.mxu0 0.0
  %628 = vmatprep.subr.mxu0 0.0
  %629 = vmatpush1.msra.mxu0 0.0
  %630 = vmatprep.subr.mxu0 0.0
  %631 = vmatpush1.msra.mxu0 0.0
  %632 = vmatprep.subr.mxu0 0.0
  %633 = vmatpush1.msra.mxu0 0.0
  %634 = vmatprep.subr.mxu0 0.0
  %635 = vmatpush1.msra.mxu0 0.0
  %636 = vmatprep.mubr.f32.mxu0 0.0
  %637 = vmatmul.mubr.f32.gmra.mrb[0].mxu0 %v377
  %v638 = vpop.f32.mrb[0].mxu0
  %v639 = vadd.f32 %v373, %v638
  %v640 = vpop.f32.mrb[0].mxu0
  %641 = vmatprep.mubr.f32.mxu0 0.0
  %642 = vmatmul.mubr.f32.gmra.mrb[0].mxu0 %v380
  %v643 = vpop.f32.mrb[0].mxu0
  %v644 = vadd.f32 %v373, %v643
  %v645 = vpop.f32.mrb[0].mxu0
  %646 = vmatprep.mubr.f32.mxu0 0.0
  %647 = vmatmul.mubr.f32.gmra.mrb[0].mxu0 %v383
  %v648 = vpop.f32.mrb[0].mxu0
  %v649 = vadd.f32 %v373, %v648
  %v650 = vpop.f32.mrb[0].mxu0
  %651 = vmatprep.mubr.f32.mxu0 0.0
  %652 = vmatmul.mubr.f32.gmra.mrb[0].mxu0 %v386
  %v653 = vpop.f32.mrb[0].mxu0
  %v654 = vadd.f32 %v373, %v653
  %v655 = vpop.f32.mrb[0].mxu0
  %656 = vmatprep.mubr.f32.mxu0 0.0
  %657 = vmatmul.mubr.f32.gmra.mrb[0].mxu0 %v389
  %v658 = vpop.f32.mrb[0].mxu0
  %v659 = vadd.f32 %v373, %v658
  %v660 = vpop.f32.mrb[0].mxu0
  %661 = vmatprep.mubr.f32.mxu0 0.0
  %662 = vmatmul.mubr.f32.gmra.mrb[0].mxu0 %v392
  %v663 = vpop.f32.mrb[0].mxu0
  %v664 = vadd.f32 %v373, %v663
  %v665 = vpop.f32.mrb[0].mxu0
  %666 = vmatprep.mubr.f32.mxu0 0.0
  %667 = vmatmul.mubr.f32.gmra.mrb[0].mxu0 %v395
  %v668 = vpop.f32.mrb[0].mxu0
  %v669 = vadd.f32 %v373, %v668
  %v670 = vpop.f32.mrb[0].mxu0
  %671 = vmatprep.mubr.f32.mxu0 0.0
  %672 = vmatmul.mubr.f32.gmra.mrb[0].mxu0 %v398
  %v673 = vpop.f32.mrb[0].mxu0
  %v674 = vadd.f32 %v373, %v673
  %v675 = vpop.f32.mrb[0].mxu0
  %676 = vmatprep.mubr.f32.mxu0 0.0
  %677 = vmatmul.mubr.f32.gmra.mrb[0].mxu0 %v401
  %v678 = vpop.f32.mrb[0].mxu0
  %v679 = vadd.f32 %v373, %v678
  %v680 = vpop.f32.mrb[0].mxu0
  %681 = vmatprep.mubr.f32.mxu0 0.0
  %682 = vmatmul.mubr.f32.gmra.mrb[0].mxu0 %v404
  %v683 = vpop.f32.mrb[0].mxu0
  %v684 = vadd.f32 %v373, %v683
  %v685 = vpop.f32.mrb[0].mxu0
  %686 = vmatprep.mubr.f32.mxu0 0.0
  %687 = vmatmul.mubr.f32.gmra.mrb[0].mxu0 %v407
  %v688 = vpop.f32.mrb[0].mxu0
  %v689 = vadd.f32 %v373, %v688
  %v690 = vpop.f32.mrb[0].mxu0
  %691 = vmatprep.mubr.f32.mxu0 0.0
  %692 = vmatmul.mubr.f32.gmra.mrb[0].mxu0 %v410
  %v693 = vpop.f32.mrb[0].mxu0
  %v694 = vadd.f32 %v373, %v693
  %v695 = vpop.f32.mrb[0].mxu0
  %696 = vmatprep.mubr.f32.mxu0 0.0
  %697 = vmatmul.mubr.f32.gmra.mrb[0].mxu0 %v413
  %v698 = vpop.f32.mrb[0].mxu0
  %v699 = vadd.f32 %v373, %v698
  %v700 = vpop.f32.mrb[0].mxu0
  %701 = vmatprep.mubr.f32.mxu0 0.0
  %702 = vmatmul.mubr.f32.gmra.mrb[0].mxu0 %v416
  %v703 = vpop.f32.mrb[0].mxu0
  %v704 = vadd.f32 %v373, %v703
  %v705 = vpop.f32.mrb[0].mxu0
  %706 = vmatprep.mubr.f32.mxu0 0.0
  %707 = vmatmul.mubr.f32.gmra.mrb[0].mxu0 %v419
  %v708 = vpop.f32.mrb[0].mxu0
  %v709 = vadd.f32 %v373, %v708
  %v710 = vpop.f32.mrb[0].mxu0
  %711 = vmatprep.mubr.f32.mxu0 0.0
  %712 = vmatmul.mubr.f32.gmra.mrb[0].mxu0 %v422
  %v713 = vpop.f32.mrb[0].mxu0
  %v714 = vadd.f32 %v373, %v713
  %v715 = vpop.f32.mrb[0].mxu0
  %716 = vmatprep.mubr.f32.mxu0 0.0
  %717 = vmatmul.mubr.f32.gmra.mrb[0].mxu0 %v425
  %v718 = vpop.f32.mrb[0].mxu0
  %v719 = vadd.f32 %v373, %v718
  %v720 = vpop.f32.mrb[0].mxu0
  %721 = vmatprep.mubr.f32.mxu0 0.0
  %722 = vmatmul.mubr.f32.gmra.mrb[0].mxu0 %v428
  %v723 = vpop.f32.mrb[0].mxu0
  %v724 = vadd.f32 %v373, %v723
  %v725 = vpop.f32.mrb[0].mxu0
  %726 = vmatprep.mubr.f32.mxu0 0.0
  %727 = vmatmul.mubr.f32.gmra.mrb[0].mxu0 %v431
  %v728 = vpop.f32.mrb[0].mxu0
  %v729 = vadd.f32 %v373, %v728
  %v730 = vpop.f32.mrb[0].mxu0
  %731 = vmatprep.mubr.f32.mxu0 0.0
  %732 = vmatmul.mubr.f32.gmra.mrb[0].mxu0 %v434
  %v733 = vpop.f32.mrb[0].mxu0
  %v734 = vadd.f32 %v373, %v733
  %v735 = vpop.f32.mrb[0].mxu0
  %736 = vmatprep.mubr.f32.mxu0 0.0
  %737 = vmatmul.mubr.f32.gmra.mrb[0].mxu0 %v437
  %v738 = vpop.f32.mrb[0].mxu0
  %v739 = vadd.f32 %v373, %v738
  %v740 = vpop.f32.mrb[0].mxu0
  %741 = vmatprep.mubr.f32.mxu0 0.0
  %742 = vmatmul.mubr.f32.gmra.mrb[0].mxu0 %v440
  %v743 = vpop.f32.mrb[0].mxu0
  %v744 = vadd.f32 %v373, %v743
  %v745 = vpop.f32.mrb[0].mxu0
  %746 = vmatprep.mubr.f32.mxu0 0.0
  %747 = vmatmul.mubr.f32.gmra.mrb[0].mxu0 %v443
  %v748 = vpop.f32.mrb[0].mxu0
  %v749 = vadd.f32 %v373, %v748
  %v750 = vpop.f32.mrb[0].mxu0
  %751 = vmatprep.mubr.f32.mxu0 0.0
  %752 = vmatmul.mubr.f32.gmra.mrb[0].mxu0 %v446
  %v753 = vpop.f32.mrb[0].mxu0
  %v754 = vadd.f32 %v373, %v753
  %v755 = vpop.f32.mrb[0].mxu0
  %756 = vmatprep.mubr.f32.mxu0 0.0
  %757 = vmatmul.mubr.f32.gmra.mrb[0].mxu0 %v449
  %v758 = vpop.f32.mrb[0].mxu0
  %v759 = vadd.f32 %v373, %v758
  %v760 = vpop.f32.mrb[0].mxu0
  %761 = vmatprep.mubr.f32.mxu0 0.0
  %762 = vmatmul.mubr.f32.gmra.mrb[0].mxu0 %v452
  %v763 = vpop.f32.mrb[0].mxu0
  %v764 = vadd.f32 %v373, %v763
  %v765 = vpop.f32.mrb[0].mxu0
  %766 = vmatprep.mubr.f32.mxu0 0.0
  %767 = vmatmul.mubr.f32.gmra.mrb[0].mxu0 %v455
  %v768 = vpop.f32.mrb[0].mxu0
  %v769 = vadd.f32 %v373, %v768
  %v770 = vpop.f32.mrb[0].mxu0
  %771 = vmatprep.mubr.f32.mxu0 0.0
  %772 = vmatmul.mubr.f32.gmra.mrb[0].mxu0 %v458
  %v773 = vpop.f32.mrb[0].mxu0
  %v774 = vadd.f32 %v373, %v773
  %v775 = vpop.f32.mrb[0].mxu0
  %776 = vmatprep.mubr.f32.mxu0 0.0
  %777 = vmatmul.mubr.f32.gmra.mrb[0].mxu0 %v461
  %v778 = vpop.f32.mrb[0].mxu0
  %v779 = vadd.f32 %v373, %v778
  %v780 = vpop.f32.mrb[0].mxu0
  %781 = vmatprep.mubr.f32.mxu0 0.0
  %782 = vmatmul.mubr.f32.gmra.mrb[0].mxu0 %v464
  %v783 = vpop.f32.mrb[0].mxu0
  %v784 = vadd.f32 %v373, %v783
  %v785 = vpop.f32.mrb[0].mxu0
  %786 = vmatprep.mubr.f32.mxu0 0.0
  %787 = vmatmul.mubr.f32.gmra.mrb[0].mxu0 %v467
  %v788 = vpop.f32.mrb[0].mxu0
  %v789 = vadd.f32 %v373, %v788
  %v790 = vpop.f32.mrb[0].mxu0
  %791 = vmatprep.mubr.f32.mxu0 0.0
  %792 = vmatmul.mubr.f32.gmra.mrb[0].mxu0 %v470
  %v793 = vpop.f32.mrb[0].mxu0
  %v794 = vadd.f32 %v373, %v793
  %v795 = vpop.f32.mrb[0].mxu0
  %796 = vmatprep.mubr.f32.mxu0 0.0
  %797 = vmatmul.mubr.f32.gmra.mrb[0].mxu0 %v473
  %v798 = vpop.f32.mrb[0].mxu0
  %v799 = vadd.f32 %v373, %v798
  %v800 = vpop.f32.mrb[0].mxu0
  %801 = vmatprep.mubr.f32.mxu0 0.0
  %802 = vmatmul.mubr.f32.gmra.mrb[0].mxu0 %v476
  %v803 = vpop.f32.mrb[0].mxu0
  %v804 = vadd.f32 %v373, %v803
  %v805 = vpop.f32.mrb[0].mxu0
  %806 = vmatprep.mubr.f32.mxu0 0.0
  %807 = vmatmul.mubr.f32.gmra.mrb[0].mxu0 %v479
  %v808 = vpop.f32.mrb[0].mxu0
  %v809 = vadd.f32 %v373, %v808
  %v810 = vpop.f32.mrb[0].mxu0
  %811 = vmatprep.mubr.f32.mxu0 0.0
  %812 = vmatmul.mubr.f32.gmra.mrb[0].mxu0 %v482
  %v813 = vpop.f32.mrb[0].mxu0
  %v814 = vadd.f32 %v373, %v813
  %v815 = vpop.f32.mrb[0].mxu0
  %816 = vmatprep.mubr.f32.mxu0 0.0
  %817 = vmatmul.mubr.f32.gmra.mrb[0].mxu0 %v485
  %v818 = vpop.f32.mrb[0].mxu0
  %v819 = vadd.f32 %v373, %v818
  %v820 = vpop.f32.mrb[0].mxu0
  %821 = vmatprep.mubr.f32.mxu0 0.0
  %822 = vmatmul.mubr.f32.gmra.mrb[0].mxu0 %v488
  %v823 = vpop.f32.mrb[0].mxu0
  %v824 = vadd.f32 %v373, %v823
  %v825 = vpop.f32.mrb[0].mxu0
  %826 = vmatprep.mubr.f32.mxu0 0.0
  %827 = vmatmul.mubr.f32.gmra.mrb[0].mxu0 %v491
  %v828 = vpop.f32.mrb[0].mxu0
  %v829 = vadd.f32 %v373, %v828
  %v830 = vpop.f32.mrb[0].mxu0
  %831 = vmatprep.mubr.f32.mxu0 0.0
  %832 = vmatmul.mubr.f32.gmra.mrb[0].mxu0 %v494
  %v833 = vpop.f32.mrb[0].mxu0
  %v834 = vadd.f32 %v373, %v833
  %v835 = vpop.f32.mrb[0].mxu0
  %836 = vmatprep.mubr.f32.mxu0 0.0
  %837 = vmatmul.mubr.f32.gmra.mrb[0].mxu0 %v497
  %v838 = vpop.f32.mrb[0].mxu0
  %v839 = vadd.f32 %v373, %v838
  %v840 = vpop.f32.mrb[0].mxu0
  %841 = vmatprep.mubr.f32.mxu0 0.0
  %842 = vmatmul.mubr.f32.gmra.mrb[0].mxu0 %v500
  %v843 = vpop.f32.mrb[0].mxu0
  %v844 = vadd.f32 %v373, %v843
  %v845 = vpop.f32.mrb[0].mxu0
  %846 = vmatprep.mubr.f32.mxu0 0.0
  %847 = vmatmul.mubr.f32.gmra.mrb[0].mxu0 %v503
  %v848 = vpop.f32.mrb[0].mxu0
  %v849 = vadd.f32 %v373, %v848
  %v850 = vpop.f32.mrb[0].mxu0
  %851 = vmatprep.mubr.f32.mxu0 0.0
  %852 = vmatmul.mubr.f32.gmra.mrb[0].mxu0 %v506
  %v853 = vpop.f32.mrb[0].mxu0
  %v854 = vadd.f32 %v373, %v853
  %v855 = vpop.f32.mrb[0].mxu0
  %856 = vmatprep.mubr.f32.mxu0 0.0
  %857 = vmatmul.mubr.f32.gmra.mrb[0].mxu0 %v509
  %v858 = vpop.f32.mrb[0].mxu0
  %v859 = vadd.f32 %v373, %v858
  %v860 = vpop.f32.mrb[0].mxu0
  %861 = vmatprep.mubr.f32.mxu0 0.0
  %862 = vmatmul.mubr.f32.gmra.mrb[0].mxu0 %v512
  %v863 = vpop.f32.mrb[0].mxu0
  %v864 = vadd.f32 %v373, %v863
  %v865 = vpop.f32.mrb[0].mxu0
  %866 = vmatprep.mubr.f32.mxu0 0.0
  %867 = vmatmul.mubr.f32.gmra.mrb[0].mxu0 %v515
  %v868 = vpop.f32.mrb[0].mxu0
  %v869 = vadd.f32 %v373, %v868
  %v870 = vpop.f32.mrb[0].mxu0
  %871 = vmatprep.mubr.f32.mxu0 0.0
  %872 = vmatmul.mubr.f32.gmra.mrb[0].mxu0 %v518
  %v873 = vpop.f32.mrb[0].mxu0
  %v874 = vadd.f32 %v373, %v873
  %v875 = vpop.f32.mrb[0].mxu0
  %876 = vmatprep.mubr.f32.mxu0 0.0
  %877 = vmatmul.mubr.f32.gmra.mrb[0].mxu0 %v521
  %v878 = vpop.f32.mrb[0].mxu0
  %v879 = vadd.f32 %v373, %v878
  %v880 = vpop.f32.mrb[0].mxu0
  %881 = vmatprep.mubr.f32.mxu0 0.0
  %882 = vmatmul.mubr.f32.gmra.mrb[0].mxu0 %v524
  %v883 = vpop.f32.mrb[0].mxu0
  %v884 = vadd.f32 %v373, %v883
  %v885 = vpop.f32.mrb[0].mxu0
  %886 = vmatprep.mubr.f32.mxu0 0.0
  %887 = vmatmul.mubr.f32.gmra.mrb[0].mxu0 %v527
  %v888 = vpop.f32.mrb[0].mxu0
  %v889 = vadd.f32 %v373, %v888
  %v890 = vpop.f32.mrb[0].mxu0
  %891 = vmatprep.mubr.f32.mxu0 0.0
  %892 = vmatmul.mubr.f32.gmra.mrb[0].mxu0 %v530
  %v893 = vpop.f32.mrb[0].mxu0
  %v894 = vadd.f32 %v373, %v893
  %v895 = vpop.f32.mrb[0].mxu0
  %896 = vmatprep.mubr.f32.mxu0 0.0
  %897 = vmatmul.mubr.f32.gmra.mrb[0].mxu0 %v533
  %v898 = vpop.f32.mrb[0].mxu0
  %v899 = vadd.f32 %v373, %v898
  %v900 = vpop.f32.mrb[0].mxu0
  %901 = vmatprep.mubr.f32.mxu0 0.0
  %902 = vmatmul.mubr.f32.gmra.mrb[0].mxu0 %v536
  %v903 = vpop.f32.mrb[0].mxu0
  %v904 = vadd.f32 %v373, %v903
  %v905 = vpop.f32.mrb[0].mxu0
  %906 = vmatprep.mubr.f32.mxu0 0.0
  %907 = vmatmul.mubr.f32.gmra.mrb[0].mxu0 %v539
  %v908 = vpop.f32.mrb[0].mxu0
  %v909 = vadd.f32 %v373, %v908
  %v910 = vpop.f32.mrb[0].mxu0
  %911 = vmatprep.mubr.f32.mxu0 0.0
  %912 = vmatmul.mubr.f32.gmra.mrb[0].mxu0 %v542
  %v913 = vpop.f32.mrb[0].mxu0
  %v914 = vadd.f32 %v373, %v913
  %v915 = vpop.f32.mrb[0].mxu0
  %916 = vmatprep.mubr.f32.mxu0 0.0
  %917 = vmatmul.mubr.f32.gmra.mrb[0].mxu0 %v545
  %v918 = vpop.f32.mrb[0].mxu0
  %v919 = vadd.f32 %v373, %v918
  %v920 = vpop.f32.mrb[0].mxu0
  %921 = vmatprep.mubr.f32.mxu0 0.0
  %922 = vmatmul.mubr.f32.gmra.mrb[0].mxu0 %v548
  %v923 = vpop.f32.mrb[0].mxu0
  %v924 = vadd.f32 %v373, %v923
  %v925 = vpop.f32.mrb[0].mxu0
  %926 = vmatprep.mubr.f32.mxu0 0.0
  %927 = vmatmul.mubr.f32.gmra.mrb[0].mxu0 %v551
  %v928 = vpop.f32.mrb[0].mxu0
  %v929 = vadd.f32 %v373, %v928
  %v930 = vpop.f32.mrb[0].mxu0
  %931 = vmatprep.mubr.f32.mxu0 0.0
  %932 = vmatmul.mubr.f32.gmra.mrb[0].mxu0 %v554
  %v933 = vpop.f32.mrb[0].mxu0
  %v934 = vadd.f32 %v373, %v933
  %v935 = vpop.f32.mrb[0].mxu0
  %936 = vmatprep.mubr.f32.mxu0 0.0
  %937 = vmatmul.mubr.f32.gmra.mrb[0].mxu0 %v557
  %v938 = vpop.f32.mrb[0].mxu0
  %v939 = vadd.f32 %v373, %v938
  %v940 = vpop.f32.mrb[0].mxu0
  %941 = vmatprep.mubr.f32.mxu0 0.0
  %942 = vmatmul.mubr.f32.gmra.mrb[0].mxu0 %v560
  %v943 = vpop.f32.mrb[0].mxu0
  %v944 = vadd.f32 %v373, %v943
  %v945 = vpop.f32.mrb[0].mxu0
  %946 = vmatprep.mubr.f32.mxu0 0.0
  %947 = vmatmul.mubr.f32.gmra.mrb[0].mxu0 %v563
  %v948 = vpop.f32.mrb[0].mxu0
  %v949 = vadd.f32 %v373, %v948
  %v950 = vpop.f32.mrb[0].mxu0
  %951 = vmatprep.mubr.f32.mxu0 0.0
  %952 = vmatmul.mubr.f32.gmra.mrb[0].mxu0 %v566
  %v953 = vpop.f32.mrb[0].mxu0
  %v954 = vadd.f32 %v373, %v953
  %v955 = vpop.f32.mrb[0].mxu0
  %956 = vdwg.mxu0
  %v957 = vtanh.pop %v639
  %v958 = vtanh.pop %v644
  %v959 = vtanh.pop %v649
  %v960 = vtanh.pop %v654
  %v961 = vtanh.pop %v659
  %v962 = vtanh.pop %v664
  %v963 = vtanh.pop %v669
  %v964 = vtanh.pop %v674
  %v965 = vtanh.pop %v679
  %v966 = vtanh.pop %v684
  %v967 = vtanh.pop %v689
  %v968 = vtanh.pop %v694
  %v969 = vtanh.pop %v699
  %v970 = vtanh.pop %v704
  %v971 = vtanh.pop %v709
  %v972 = vtanh.pop %v714
  %v973 = vtanh.pop %v719
  %v974 = vtanh.pop %v724
  %v975 = vtanh.pop %v729
  %v976 = vtanh.pop %v734
  %v977 = vtanh.pop %v739
  %v978 = vtanh.pop %v744
  %v979 = vtanh.pop %v749
  %v980 = vtanh.pop %v754
  %v981 = vtanh.pop %v759
  %v982 = vtanh.pop %v764
  %v983 = vtanh.pop %v769
  %v984 = vtanh.pop %v774
  %v985 = vtanh.pop %v779
  %v986 = vtanh.pop %v784
  %v987 = vtanh.pop %v789
  %v988 = vtanh.pop %v794
  %v989 = vtanh.pop %v799
  %v990 = vtanh.pop %v804
  %v991 = vtanh.pop %v809
  %v992 = vtanh.pop %v814
  %v993 = vtanh.pop %v819
  %v994 = vtanh.pop %v824
  %v995 = vtanh.pop %v829
  %v996 = vtanh.pop %v834
  %v997 = vtanh.pop %v839
  %v998 = vtanh.pop %v844
  %v999 = vtanh.pop %v849
  %v1000 = vtanh.pop %v854
  %v1001 = vtanh.pop %v859
  %v1002 = vtanh.pop %v864
  %v1003 = vtanh.pop %v869
  %v1004 = vtanh.pop %v874
  %v1005 = vtanh.pop %v879
  %v1006 = vtanh.pop %v884
  %v1007 = vtanh.pop %v889
  %v1008 = vtanh.pop %v894
  %v1009 = vtanh.pop %v899
  %v1010 = vtanh.pop %v904
  %v1011 = vtanh.pop %v909
  %v1012 = vtanh.pop %v914
  %v1013 = vtanh.pop %v919
  %v1014 = vtanh.pop %v924
  %v1015 = vtanh.pop %v929
  %v1016 = vtanh.pop %v934
  %v1017 = vtanh.pop %v939
  %v1018 = vtanh.pop %v944
  %v1019 = vtanh.pop %v949
  %v1020 = vtanh.pop %v954
  %v1021 = vld [vmem:[%s11] sm:$0xff]
  %v1022 = vld [vmem:[%s11 + $0x8] sm:$0xff]
  %v1023 = vld [vmem:[%s11 + $0x10] sm:$0xff]
  %v1024 = vld [vmem:[%s11 + $0x18] sm:$0xff]
  %v1025 = vld [vmem:[%s11 + $0x20] sm:$0xff]
  %v1026 = vld [vmem:[%s11 + $0x28] sm:$0xff]
  %v1027 = vld [vmem:[%s11 + $0x30] sm:$0xff]
  %v1028 = vld [vmem:[%s11 + $0x38] sm:$0xff]
  %v1029 = vld [vmem:[%s11 + $0x40] sm:$0xff]
  %v1030 = vld [vmem:[%s11 + $0x48] sm:$0xff]
  %v1031 = vld [vmem:[%s11 + $0x50] sm:$0xff]
  %v1032 = vld [vmem:[%s11 + $0x58] sm:$0xff]
  %v1033 = vld [vmem:[%s11 + $0x60] sm:$0xff]
  %v1034 = vld [vmem:[%s11 + $0x68] sm:$0xff]
  %v1035 = vld [vmem:[%s11 + $0x70] sm:$0xff]
  %v1036 = vld [vmem:[%s11 + $0x78] sm:$0xff]
  %v1037 = vld [vmem:[%s12] sm:$0x1]
  %v1039 = vlaneseq
  %v1040 = vshrl.u32 %v1039, 7
  %v1041 = vsub.s32 0, %v1040
  %v1042 = vrot.slane %v1037, %v1041
  %1044 = vmatprep.subr.mxu0 0.0
  %1045 = vmatpush1.msra.mxu0 %v1021
  %1046 = vmatprep.subr.mxu0 0.0
  %1047 = vmatpush1.msra.mxu0 %v1022
  %1048 = vmatprep.subr.mxu0 0.0
  %1049 = vmatpush1.msra.mxu0 %v1023
  %1050 = vmatprep.subr.mxu0 0.0
  %1051 = vmatpush1.msra.mxu0 %v1024
  %1052 = vmatprep.subr.mxu0 0.0
  %1053 = vmatpush1.msra.mxu0 %v1025
  %1054 = vmatprep.subr.mxu0 0.0
  %1055 = vmatpush1.msra.mxu0 %v1026
  %1056 = vmatprep.subr.mxu0 0.0
  %1057 = vmatpush1.msra.mxu0 %v1027
  %1058 = vmatprep.subr.mxu0 0.0
  %1059 = vmatpush1.msra.mxu0 %v1028
  %1060 = vmatprep.subr.mxu0 0.0
  %1061 = vmatpush1.msra.mxu0 %v1029
  %1062 = vmatprep.subr.mxu0 0.0
  %1063 = vmatpush1.msra.mxu0 %v1030
  %1064 = vmatprep.subr.mxu0 0.0
  %1065 = vmatpush1.msra.mxu0 %v1031
  %1066 = vmatprep.subr.mxu0 0.0
  %1067 = vmatpush1.msra.mxu0 %v1032
  %1068 = vmatprep.subr.mxu0 0.0
  %1069 = vmatpush1.msra.mxu0 %v1033
  %1070 = vmatprep.subr.mxu0 0.0
  %1071 = vmatpush1.msra.mxu0 %v1034
  %1072 = vmatprep.subr.mxu0 0.0
  %1073 = vmatpush1.msra.mxu0 %v1035
  %1074 = vmatprep.subr.mxu0 0.0
  %1075 = vmatpush1.msra.mxu0 %v1036
  %1076 = vmatprep.subr.mxu0 0.0
  %1077 = vmatpush1.msra.mxu0 0.0
  %1078 = vmatprep.subr.mxu0 0.0
  %1079 = vmatpush1.msra.mxu0 0.0
  %1080 = vmatprep.subr.mxu0 0.0
  %1081 = vmatpush1.msra.mxu0 0.0
  %1082 = vmatprep.subr.mxu0 0.0
  %1083 = vmatpush1.msra.mxu0 0.0
  %1084 = vmatprep.subr.mxu0 0.0
  %1085 = vmatpush1.msra.mxu0 0.0
  %1086 = vmatprep.subr.mxu0 0.0
  %1087 = vmatpush1.msra.mxu0 0.0
  %1088 = vmatprep.subr.mxu0 0.0
  %1089 = vmatpush1.msra.mxu0 0.0
  %1090 = vmatprep.subr.mxu0 0.0
  %1091 = vmatpush1.msra.mxu0 0.0
  %1092 = vmatprep.subr.mxu0 0.0
  %1093 = vmatpush1.msra.mxu0 0.0
  %1094 = vmatprep.subr.mxu0 0.0
  %1095 = vmatpush1.msra.mxu0 0.0
  %1096 = vmatprep.subr.mxu0 0.0
  %1097 = vmatpush1.msra.mxu0 0.0
  %1098 = vmatprep.subr.mxu0 0.0
  %1099 = vmatpush1.msra.mxu0 0.0
  %1100 = vmatprep.subr.mxu0 0.0
  %1101 = vmatpush1.msra.mxu0 0.0
  %1102 = vmatprep.subr.mxu0 0.0
  %1103 = vmatpush1.msra.mxu0 0.0
  %1104 = vmatprep.subr.mxu0 0.0
  %1105 = vmatpush1.msra.mxu0 0.0
  %1106 = vmatprep.subr.mxu0 0.0
  %1107 = vmatpush1.msra.mxu0 0.0
  %1108 = vmatprep.mubr.f32.mxu0 0.0
  %1109 = vmatmul.mubr.f32.gmra.mrb[0].mxu0 %v957
  %v1110 = vpop.f32.mrb[0].mxu0
  %v1111 = vadd.f32 %v1042, %v1110
  %v1112 = vpop.f32.mrb[0].mxu0
  %1113 = vmatprep.mubr.f32.mxu0 0.0
  %1114 = vmatmul.mubr.f32.gmra.mrb[0].mxu0 %v958
  %v1115 = vpop.f32.mrb[0].mxu0
  %v1116 = vadd.f32 %v1042, %v1115
  %v1117 = vpop.f32.mrb[0].mxu0
  %1118 = vmatprep.mubr.f32.mxu0 0.0
  %1119 = vmatmul.mubr.f32.gmra.mrb[0].mxu0 %v959
  %v1120 = vpop.f32.mrb[0].mxu0
  %v1121 = vadd.f32 %v1042, %v1120
  %v1122 = vpop.f32.mrb[0].mxu0
  %1123 = vmatprep.mubr.f32.mxu0 0.0
  %1124 = vmatmul.mubr.f32.gmra.mrb[0].mxu0 %v960
  %v1125 = vpop.f32.mrb[0].mxu0
  %v1126 = vadd.f32 %v1042, %v1125
  %v1127 = vpop.f32.mrb[0].mxu0
  %1128 = vmatprep.mubr.f32.mxu0 0.0
  %1129 = vmatmul.mubr.f32.gmra.mrb[0].mxu0 %v961
  %v1130 = vpop.f32.mrb[0].mxu0
  %v1131 = vadd.f32 %v1042, %v1130
  %v1132 = vpop.f32.mrb[0].mxu0
  %1133 = vmatprep.mubr.f32.mxu0 0.0
  %1134 = vmatmul.mubr.f32.gmra.mrb[0].mxu0 %v962
  %v1135 = vpop.f32.mrb[0].mxu0
  %v1136 = vadd.f32 %v1042, %v1135
  %v1137 = vpop.f32.mrb[0].mxu0
  %1138 = vmatprep.mubr.f32.mxu0 0.0
  %1139 = vmatmul.mubr.f32.gmra.mrb[0].mxu0 %v963
  %v1140 = vpop.f32.mrb[0].mxu0
  %v1141 = vadd.f32 %v1042, %v1140
  %v1142 = vpop.f32.mrb[0].mxu0
  %1143 = vmatprep.mubr.f32.mxu0 0.0
  %1144 = vmatmul.mubr.f32.gmra.mrb[0].mxu0 %v964
  %v1145 = vpop.f32.mrb[0].mxu0
  %v1146 = vadd.f32 %v1042, %v1145
  %v1147 = vpop.f32.mrb[0].mxu0
  %1148 = vmatprep.mubr.f32.mxu0 0.0
  %1149 = vmatmul.mubr.f32.gmra.mrb[0].mxu0 %v965
  %v1150 = vpop.f32.mrb[0].mxu0
  %v1151 = vadd.f32 %v1042, %v1150
  %v1152 = vpop.f32.mrb[0].mxu0
  %1153 = vmatprep.mubr.f32.mxu0 0.0
  %1154 = vmatmul.mubr.f32.gmra.mrb[0].mxu0 %v966
  %v1155 = vpop.f32.mrb[0].mxu0
  %v1156 = vadd.f32 %v1042, %v1155
  %v1157 = vpop.f32.mrb[0].mxu0
  %1158 = vmatprep.mubr.f32.mxu0 0.0
  %1159 = vmatmul.mubr.f32.gmra.mrb[0].mxu0 %v967
  %v1160 = vpop.f32.mrb[0].mxu0
  %v1161 = vadd.f32 %v1042, %v1160
  %v1162 = vpop.f32.mrb[0].mxu0
  %1163 = vmatprep.mubr.f32.mxu0 0.0
  %1164 = vmatmul.mubr.f32.gmra.mrb[0].mxu0 %v968
  %v1165 = vpop.f32.mrb[0].mxu0
  %v1166 = vadd.f32 %v1042, %v1165
  %v1167 = vpop.f32.mrb[0].mxu0
  %1168 = vmatprep.mubr.f32.mxu0 0.0
  %1169 = vmatmul.mubr.f32.gmra.mrb[0].mxu0 %v969
  %v1170 = vpop.f32.mrb[0].mxu0
  %v1171 = vadd.f32 %v1042, %v1170
  %v1172 = vpop.f32.mrb[0].mxu0
  %1173 = vmatprep.mubr.f32.mxu0 0.0
  %1174 = vmatmul.mubr.f32.gmra.mrb[0].mxu0 %v970
  %v1175 = vpop.f32.mrb[0].mxu0
  %v1176 = vadd.f32 %v1042, %v1175
  %v1177 = vpop.f32.mrb[0].mxu0
  %1178 = vmatprep.mubr.f32.mxu0 0.0
  %1179 = vmatmul.mubr.f32.gmra.mrb[0].mxu0 %v971
  %v1180 = vpop.f32.mrb[0].mxu0
  %v1181 = vadd.f32 %v1042, %v1180
  %v1182 = vpop.f32.mrb[0].mxu0
  %1183 = vmatprep.mubr.f32.mxu0 0.0
  %1184 = vmatmul.mubr.f32.gmra.mrb[0].mxu0 %v972
  %v1185 = vpop.f32.mrb[0].mxu0
  %v1186 = vadd.f32 %v1042, %v1185
  %v1187 = vpop.f32.mrb[0].mxu0
  %1188 = vmatprep.mubr.f32.mxu0 0.0
  %1189 = vmatmul.mubr.f32.gmra.mrb[0].mxu0 %v973
  %v1190 = vpop.f32.mrb[0].mxu0
  %v1191 = vadd.f32 %v1042, %v1190
  %v1192 = vpop.f32.mrb[0].mxu0
  %1193 = vmatprep.mubr.f32.mxu0 0.0
  %1194 = vmatmul.mubr.f32.gmra.mrb[0].mxu0 %v974
  %v1195 = vpop.f32.mrb[0].mxu0
  %v1196 = vadd.f32 %v1042, %v1195
  %v1197 = vpop.f32.mrb[0].mxu0
  %1198 = vmatprep.mubr.f32.mxu0 0.0
  %1199 = vmatmul.mubr.f32.gmra.mrb[0].mxu0 %v975
  %v1200 = vpop.f32.mrb[0].mxu0
  %v1201 = vadd.f32 %v1042, %v1200
  %v1202 = vpop.f32.mrb[0].mxu0
  %1203 = vmatprep.mubr.f32.mxu0 0.0
  %1204 = vmatmul.mubr.f32.gmra.mrb[0].mxu0 %v976
  %v1205 = vpop.f32.mrb[0].mxu0
  %v1206 = vadd.f32 %v1042, %v1205
  %v1207 = vpop.f32.mrb[0].mxu0
  %1208 = vmatprep.mubr.f32.mxu0 0.0
  %1209 = vmatmul.mubr.f32.gmra.mrb[0].mxu0 %v977
  %v1210 = vpop.f32.mrb[0].mxu0
  %v1211 = vadd.f32 %v1042, %v1210
  %v1212 = vpop.f32.mrb[0].mxu0
  %1213 = vmatprep.mubr.f32.mxu0 0.0
  %1214 = vmatmul.mubr.f32.gmra.mrb[0].mxu0 %v978
  %v1215 = vpop.f32.mrb[0].mxu0
  %v1216 = vadd.f32 %v1042, %v1215
  %v1217 = vpop.f32.mrb[0].mxu0
  %1218 = vmatprep.mubr.f32.mxu0 0.0
  %1219 = vmatmul.mubr.f32.gmra.mrb[0].mxu0 %v979
  %v1220 = vpop.f32.mrb[0].mxu0
  %v1221 = vadd.f32 %v1042, %v1220
  %v1222 = vpop.f32.mrb[0].mxu0
  %1223 = vmatprep.mubr.f32.mxu0 0.0
  %1224 = vmatmul.mubr.f32.gmra.mrb[0].mxu0 %v980
  %v1225 = vpop.f32.mrb[0].mxu0
  %v1226 = vadd.f32 %v1042, %v1225
  %v1227 = vpop.f32.mrb[0].mxu0
  %1228 = vmatprep.mubr.f32.mxu0 0.0
  %1229 = vmatmul.mubr.f32.gmra.mrb[0].mxu0 %v981
  %v1230 = vpop.f32.mrb[0].mxu0
  %v1231 = vadd.f32 %v1042, %v1230
  %v1232 = vpop.f32.mrb[0].mxu0
  %1233 = vmatprep.mubr.f32.mxu0 0.0
  %1234 = vmatmul.mubr.f32.gmra.mrb[0].mxu0 %v982
  %v1235 = vpop.f32.mrb[0].mxu0
  %v1236 = vadd.f32 %v1042, %v1235
  %v1237 = vpop.f32.mrb[0].mxu0
  %1238 = vmatprep.mubr.f32.mxu0 0.0
  %1239 = vmatmul.mubr.f32.gmra.mrb[0].mxu0 %v983
  %v1240 = vpop.f32.mrb[0].mxu0
  %v1241 = vadd.f32 %v1042, %v1240
  %v1242 = vpop.f32.mrb[0].mxu0
  %1243 = vmatprep.mubr.f32.mxu0 0.0
  %1244 = vmatmul.mubr.f32.gmra.mrb[0].mxu0 %v984
  %v1245 = vpop.f32.mrb[0].mxu0
  %v1246 = vadd.f32 %v1042, %v1245
  %v1247 = vpop.f32.mrb[0].mxu0
  %1248 = vmatprep.mubr.f32.mxu0 0.0
  %1249 = vmatmul.mubr.f32.gmra.mrb[0].mxu0 %v985
  %v1250 = vpop.f32.mrb[0].mxu0
  %v1251 = vadd.f32 %v1042, %v1250
  %v1252 = vpop.f32.mrb[0].mxu0
  %1253 = vmatprep.mubr.f32.mxu0 0.0
  %1254 = vmatmul.mubr.f32.gmra.mrb[0].mxu0 %v986
  %v1255 = vpop.f32.mrb[0].mxu0
  %v1256 = vadd.f32 %v1042, %v1255
  %v1257 = vpop.f32.mrb[0].mxu0
  %1258 = vmatprep.mubr.f32.mxu0 0.0
  %1259 = vmatmul.mubr.f32.gmra.mrb[0].mxu0 %v987
  %v1260 = vpop.f32.mrb[0].mxu0
  %v1261 = vadd.f32 %v1042, %v1260
  %v1262 = vpop.f32.mrb[0].mxu0
  %1263 = vmatprep.mubr.f32.mxu0 0.0
  %1264 = vmatmul.mubr.f32.gmra.mrb[0].mxu0 %v988
  %v1265 = vpop.f32.mrb[0].mxu0
  %v1266 = vadd.f32 %v1042, %v1265
  %v1267 = vpop.f32.mrb[0].mxu0
  %1268 = vmatprep.mubr.f32.mxu0 0.0
  %1269 = vmatmul.mubr.f32.gmra.mrb[0].mxu0 %v989
  %v1270 = vpop.f32.mrb[0].mxu0
  %v1271 = vadd.f32 %v1042, %v1270
  %v1272 = vpop.f32.mrb[0].mxu0
  %1273 = vmatprep.mubr.f32.mxu0 0.0
  %1274 = vmatmul.mubr.f32.gmra.mrb[0].mxu0 %v990
  %v1275 = vpop.f32.mrb[0].mxu0
  %v1276 = vadd.f32 %v1042, %v1275
  %v1277 = vpop.f32.mrb[0].mxu0
  %1278 = vmatprep.mubr.f32.mxu0 0.0
  %1279 = vmatmul.mubr.f32.gmra.mrb[0].mxu0 %v991
  %v1280 = vpop.f32.mrb[0].mxu0
  %v1281 = vadd.f32 %v1042, %v1280
  %v1282 = vpop.f32.mrb[0].mxu0
  %1283 = vmatprep.mubr.f32.mxu0 0.0
  %1284 = vmatmul.mubr.f32.gmra.mrb[0].mxu0 %v992
  %v1285 = vpop.f32.mrb[0].mxu0
  %v1286 = vadd.f32 %v1042, %v1285
  %v1287 = vpop.f32.mrb[0].mxu0
  %1288 = vmatprep.mubr.f32.mxu0 0.0
  %1289 = vmatmul.mubr.f32.gmra.mrb[0].mxu0 %v993
  %v1290 = vpop.f32.mrb[0].mxu0
  %v1291 = vadd.f32 %v1042, %v1290
  %v1292 = vpop.f32.mrb[0].mxu0
  %1293 = vmatprep.mubr.f32.mxu0 0.0
  %1294 = vmatmul.mubr.f32.gmra.mrb[0].mxu0 %v994
  %v1295 = vpop.f32.mrb[0].mxu0
  %v1296 = vadd.f32 %v1042, %v1295
  %v1297 = vpop.f32.mrb[0].mxu0
  %1298 = vmatprep.mubr.f32.mxu0 0.0
  %1299 = vmatmul.mubr.f32.gmra.mrb[0].mxu0 %v995
  %v1300 = vpop.f32.mrb[0].mxu0
  %v1301 = vadd.f32 %v1042, %v1300
  %v1302 = vpop.f32.mrb[0].mxu0
  %1303 = vmatprep.mubr.f32.mxu0 0.0
  %1304 = vmatmul.mubr.f32.gmra.mrb[0].mxu0 %v996
  %v1305 = vpop.f32.mrb[0].mxu0
  %v1306 = vadd.f32 %v1042, %v1305
  %v1307 = vpop.f32.mrb[0].mxu0
  %1308 = vmatprep.mubr.f32.mxu0 0.0
  %1309 = vmatmul.mubr.f32.gmra.mrb[0].mxu0 %v997
  %v1310 = vpop.f32.mrb[0].mxu0
  %v1311 = vadd.f32 %v1042, %v1310
  %v1312 = vpop.f32.mrb[0].mxu0
  %1313 = vmatprep.mubr.f32.mxu0 0.0
  %1314 = vmatmul.mubr.f32.gmra.mrb[0].mxu0 %v998
  %v1315 = vpop.f32.mrb[0].mxu0
  %v1316 = vadd.f32 %v1042, %v1315
  %v1317 = vpop.f32.mrb[0].mxu0
  %1318 = vmatprep.mubr.f32.mxu0 0.0
  %1319 = vmatmul.mubr.f32.gmra.mrb[0].mxu0 %v999
  %v1320 = vpop.f32.mrb[0].mxu0
  %v1321 = vadd.f32 %v1042, %v1320
  %v1322 = vpop.f32.mrb[0].mxu0
  %1323 = vmatprep.mubr.f32.mxu0 0.0
  %1324 = vmatmul.mubr.f32.gmra.mrb[0].mxu0 %v1000
  %v1325 = vpop.f32.mrb[0].mxu0
  %v1326 = vadd.f32 %v1042, %v1325
  %v1327 = vpop.f32.mrb[0].mxu0
  %1328 = vmatprep.mubr.f32.mxu0 0.0
  %1329 = vmatmul.mubr.f32.gmra.mrb[0].mxu0 %v1001
  %v1330 = vpop.f32.mrb[0].mxu0
  %v1331 = vadd.f32 %v1042, %v1330
  %v1332 = vpop.f32.mrb[0].mxu0
  %1333 = vmatprep.mubr.f32.mxu0 0.0
  %1334 = vmatmul.mubr.f32.gmra.mrb[0].mxu0 %v1002
  %v1335 = vpop.f32.mrb[0].mxu0
  %v1336 = vadd.f32 %v1042, %v1335
  %v1337 = vpop.f32.mrb[0].mxu0
  %1338 = vmatprep.mubr.f32.mxu0 0.0
  %1339 = vmatmul.mubr.f32.gmra.mrb[0].mxu0 %v1003
  %v1340 = vpop.f32.mrb[0].mxu0
  %v1341 = vadd.f32 %v1042, %v1340
  %v1342 = vpop.f32.mrb[0].mxu0
  %1343 = vmatprep.mubr.f32.mxu0 0.0
  %1344 = vmatmul.mubr.f32.gmra.mrb[0].mxu0 %v1004
  %v1345 = vpop.f32.mrb[0].mxu0
  %v1346 = vadd.f32 %v1042, %v1345
  %v1347 = vpop.f32.mrb[0].mxu0
  %1348 = vmatprep.mubr.f32.mxu0 0.0
  %1349 = vmatmul.mubr.f32.gmra.mrb[0].mxu0 %v1005
  %v1350 = vpop.f32.mrb[0].mxu0
  %v1351 = vadd.f32 %v1042, %v1350
  %v1352 = vpop.f32.mrb[0].mxu0
  %1353 = vmatprep.mubr.f32.mxu0 0.0
  %1354 = vmatmul.mubr.f32.gmra.mrb[0].mxu0 %v1006
  %v1355 = vpop.f32.mrb[0].mxu0
  %v1356 = vadd.f32 %v1042, %v1355
  %v1357 = vpop.f32.mrb[0].mxu0
  %1358 = vmatprep.mubr.f32.mxu0 0.0
  %1359 = vmatmul.mubr.f32.gmra.mrb[0].mxu0 %v1007
  %v1360 = vpop.f32.mrb[0].mxu0
  %v1361 = vadd.f32 %v1042, %v1360
  %v1362 = vpop.f32.mrb[0].mxu0
  %1363 = vmatprep.mubr.f32.mxu0 0.0
  %1364 = vmatmul.mubr.f32.gmra.mrb[0].mxu0 %v1008
  %v1365 = vpop.f32.mrb[0].mxu0
  %v1366 = vadd.f32 %v1042, %v1365
  %v1367 = vpop.f32.mrb[0].mxu0
  %1368 = vmatprep.mubr.f32.mxu0 0.0
  %1369 = vmatmul.mubr.f32.gmra.mrb[0].mxu0 %v1009
  %v1370 = vpop.f32.mrb[0].mxu0
  %v1371 = vadd.f32 %v1042, %v1370
  %v1372 = vpop.f32.mrb[0].mxu0
  %1373 = vmatprep.mubr.f32.mxu0 0.0
  %1374 = vmatmul.mubr.f32.gmra.mrb[0].mxu0 %v1010
  %v1375 = vpop.f32.mrb[0].mxu0
  %v1376 = vadd.f32 %v1042, %v1375
  %v1377 = vpop.f32.mrb[0].mxu0
  %1378 = vmatprep.mubr.f32.mxu0 0.0
  %1379 = vmatmul.mubr.f32.gmra.mrb[0].mxu0 %v1011
  %v1380 = vpop.f32.mrb[0].mxu0
  %v1381 = vadd.f32 %v1042, %v1380
  %v1382 = vpop.f32.mrb[0].mxu0
  %1383 = vmatprep.mubr.f32.mxu0 0.0
  %1384 = vmatmul.mubr.f32.gmra.mrb[0].mxu0 %v1012
  %v1385 = vpop.f32.mrb[0].mxu0
  %v1386 = vadd.f32 %v1042, %v1385
  %v1387 = vpop.f32.mrb[0].mxu0
  %1388 = vmatprep.mubr.f32.mxu0 0.0
  %1389 = vmatmul.mubr.f32.gmra.mrb[0].mxu0 %v1013
  %v1390 = vpop.f32.mrb[0].mxu0
  %v1391 = vadd.f32 %v1042, %v1390
  %v1392 = vpop.f32.mrb[0].mxu0
  %1393 = vmatprep.mubr.f32.mxu0 0.0
  %1394 = vmatmul.mubr.f32.gmra.mrb[0].mxu0 %v1014
  %v1395 = vpop.f32.mrb[0].mxu0
  %v1396 = vadd.f32 %v1042, %v1395
  %v1397 = vpop.f32.mrb[0].mxu0
  %1398 = vmatprep.mubr.f32.mxu0 0.0
  %1399 = vmatmul.mubr.f32.gmra.mrb[0].mxu0 %v1015
  %v1400 = vpop.f32.mrb[0].mxu0
  %v1401 = vadd.f32 %v1042, %v1400
  %v1402 = vpop.f32.mrb[0].mxu0
  %1403 = vmatprep.mubr.f32.mxu0 0.0
  %1404 = vmatmul.mubr.f32.gmra.mrb[0].mxu0 %v1016
  %v1405 = vpop.f32.mrb[0].mxu0
  %v1406 = vadd.f32 %v1042, %v1405
  %v1407 = vpop.f32.mrb[0].mxu0
  %1408 = vmatprep.mubr.f32.mxu0 0.0
  %1409 = vmatmul.mubr.f32.gmra.mrb[0].mxu0 %v1017
  %v1410 = vpop.f32.mrb[0].mxu0
  %v1411 = vadd.f32 %v1042, %v1410
  %v1412 = vpop.f32.mrb[0].mxu0
  %1413 = vmatprep.mubr.f32.mxu0 0.0
  %1414 = vmatmul.mubr.f32.gmra.mrb[0].mxu0 %v1018
  %v1415 = vpop.f32.mrb[0].mxu0
  %v1416 = vadd.f32 %v1042, %v1415
  %v1417 = vpop.f32.mrb[0].mxu0
  %1418 = vmatprep.mubr.f32.mxu0 0.0
  %1419 = vmatmul.mubr.f32.gmra.mrb[0].mxu0 %v1019
  %v1420 = vpop.f32.mrb[0].mxu0
  %v1421 = vadd.f32 %v1042, %v1420
  %v1422 = vpop.f32.mrb[0].mxu0
  %1423 = vmatprep.mubr.f32.mxu0 0.0
  %1424 = vmatmul.mubr.f32.gmra.mrb[0].mxu0 %v1020
  %v1425 = vpop.f32.mrb[0].mxu0
  %v1426 = vadd.f32 %v1042, %v1425
  %v1427 = vpop.f32.mrb[0].mxu0
  %1428 = vdwg.mxu0
  %v1429 = vtanh.pop %v1111
  %v1430 = vtanh.pop %v1116
  %v1431 = vtanh.pop %v1121
  %v1432 = vtanh.pop %v1126
  %v1433 = vtanh.pop %v1131
  %v1434 = vtanh.pop %v1136
  %v1435 = vtanh.pop %v1141
  %v1436 = vtanh.pop %v1146
  %v1437 = vtanh.pop %v1151
  %v1438 = vtanh.pop %v1156
  %v1439 = vtanh.pop %v1161
  %v1440 = vtanh.pop %v1166
  %v1441 = vtanh.pop %v1171
  %v1442 = vtanh.pop %v1176
  %v1443 = vtanh.pop %v1181
  %v1444 = vtanh.pop %v1186
  %v1445 = vtanh.pop %v1191
  %v1446 = vtanh.pop %v1196
  %v1447 = vtanh.pop %v1201
  %v1448 = vtanh.pop %v1206
  %v1449 = vtanh.pop %v1211
  %v1450 = vtanh.pop %v1216
  %v1451 = vtanh.pop %v1221
  %v1452 = vtanh.pop %v1226
  %v1453 = vtanh.pop %v1231
  %v1454 = vtanh.pop %v1236
  %v1455 = vtanh.pop %v1241
  %v1456 = vtanh.pop %v1246
  %v1457 = vtanh.pop %v1251
  %v1458 = vtanh.pop %v1256
  %v1459 = vtanh.pop %v1261
  %v1460 = vtanh.pop %v1266
  %v1461 = vtanh.pop %v1271
  %v1462 = vtanh.pop %v1276
  %v1463 = vtanh.pop %v1281
  %v1464 = vtanh.pop %v1286
  %v1465 = vtanh.pop %v1291
  %v1466 = vtanh.pop %v1296
  %v1467 = vtanh.pop %v1301
  %v1468 = vtanh.pop %v1306
  %v1469 = vtanh.pop %v1311
  %v1470 = vtanh.pop %v1316
  %v1471 = vtanh.pop %v1321
  %v1472 = vtanh.pop %v1326
  %v1473 = vtanh.pop %v1331
  %v1474 = vtanh.pop %v1336
  %v1475 = vtanh.pop %v1341
  %v1476 = vtanh.pop %v1346
  %v1477 = vtanh.pop %v1351
  %v1478 = vtanh.pop %v1356
  %v1479 = vtanh.pop %v1361
  %v1480 = vtanh.pop %v1366
  %v1481 = vtanh.pop %v1371
  %v1482 = vtanh.pop %v1376
  %v1483 = vtanh.pop %v1381
  %v1484 = vtanh.pop %v1386
  %v1485 = vtanh.pop %v1391
  %v1486 = vtanh.pop %v1396
  %v1487 = vtanh.pop %v1401
  %v1488 = vtanh.pop %v1406
  %v1489 = vtanh.pop %v1411
  %v1490 = vtanh.pop %v1416
  %v1491 = vtanh.pop %v1421
  %v1492 = vtanh.pop %v1426
  %vm1493 = vcmask 261120
  %v1494 = vsel %vm1493, %v1429, 0.0
  %1495 = vadd.xlane.f32.xlu0 %v1494
  %v1496 = vpop.xlane.xlu0 %1495
  %v1497 = vsel %vm1493, %v1430, 0.0
  %1498 = vadd.xlane.f32.xlu0 %v1497
  %v1499 = vpop.xlane.xlu0 %1498
  %v1500 = vsel %vm1493, %v1431, 0.0
  %1501 = vadd.xlane.f32.xlu0 %v1500
  %v1502 = vpop.xlane.xlu0 %1501
  %v1503 = vsel %vm1493, %v1432, 0.0
  %1504 = vadd.xlane.f32.xlu0 %v1503
  %v1505 = vpop.xlane.xlu0 %1504
  %v1506 = vsel %vm1493, %v1433, 0.0
  %1507 = vadd.xlane.f32.xlu0 %v1506
  %v1508 = vpop.xlane.xlu0 %1507
  %v1509 = vsel %vm1493, %v1434, 0.0
  %1510 = vadd.xlane.f32.xlu0 %v1509
  %v1511 = vpop.xlane.xlu0 %1510
  %v1512 = vsel %vm1493, %v1435, 0.0
  %1513 = vadd.xlane.f32.xlu0 %v1512
  %v1514 = vpop.xlane.xlu0 %1513
  %v1515 = vsel %vm1493, %v1436, 0.0
  %1516 = vadd.xlane.f32.xlu0 %v1515
  %v1517 = vpop.xlane.xlu0 %1516
  %v1518 = vsel %vm1493, %v1437, 0.0
  %1519 = vadd.xlane.f32.xlu0 %v1518
  %v1520 = vpop.xlane.xlu0 %1519
  %v1521 = vsel %vm1493, %v1438, 0.0
  %1522 = vadd.xlane.f32.xlu0 %v1521
  %v1523 = vpop.xlane.xlu0 %1522
  %v1524 = vsel %vm1493, %v1439, 0.0
  %1525 = vadd.xlane.f32.xlu0 %v1524
  %v1526 = vpop.xlane.xlu0 %1525
  %v1527 = vsel %vm1493, %v1440, 0.0
  %1528 = vadd.xlane.f32.xlu0 %v1527
  %v1529 = vpop.xlane.xlu0 %1528
  %v1530 = vsel %vm1493, %v1441, 0.0
  %1531 = vadd.xlane.f32.xlu0 %v1530
  %v1532 = vpop.xlane.xlu0 %1531
  %v1533 = vsel %vm1493, %v1442, 0.0
  %1534 = vadd.xlane.f32.xlu0 %v1533
  %v1535 = vpop.xlane.xlu0 %1534
  %v1536 = vsel %vm1493, %v1443, 0.0
  %1537 = vadd.xlane.f32.xlu0 %v1536
  %v1538 = vpop.xlane.xlu0 %1537
  %v1539 = vsel %vm1493, %v1444, 0.0
  %1540 = vadd.xlane.f32.xlu0 %v1539
  %v1541 = vpop.xlane.xlu0 %1540
  %v1542 = vsel %vm1493, %v1445, 0.0
  %1543 = vadd.xlane.f32.xlu0 %v1542
  %v1544 = vpop.xlane.xlu0 %1543
  %v1545 = vsel %vm1493, %v1446, 0.0
  %1546 = vadd.xlane.f32.xlu0 %v1545
  %v1547 = vpop.xlane.xlu0 %1546
  %v1548 = vsel %vm1493, %v1447, 0.0
  %1549 = vadd.xlane.f32.xlu0 %v1548
  %v1550 = vpop.xlane.xlu0 %1549
  %v1551 = vsel %vm1493, %v1448, 0.0
  %1552 = vadd.xlane.f32.xlu0 %v1551
  %v1553 = vpop.xlane.xlu0 %1552
  %v1554 = vsel %vm1493, %v1449, 0.0
  %1555 = vadd.xlane.f32.xlu0 %v1554
  %v1556 = vpop.xlane.xlu0 %1555
  %v1557 = vsel %vm1493, %v1450, 0.0
  %1558 = vadd.xlane.f32.xlu0 %v1557
  %v1559 = vpop.xlane.xlu0 %1558
  %v1560 = vsel %vm1493, %v1451, 0.0
  %1561 = vadd.xlane.f32.xlu0 %v1560
  %v1562 = vpop.xlane.xlu0 %1561
  %v1563 = vsel %vm1493, %v1452, 0.0
  %1564 = vadd.xlane.f32.xlu0 %v1563
  %v1565 = vpop.xlane.xlu0 %1564
  %v1566 = vsel %vm1493, %v1453, 0.0
  %1567 = vadd.xlane.f32.xlu0 %v1566
  %v1568 = vpop.xlane.xlu0 %1567
  %v1569 = vsel %vm1493, %v1454, 0.0
  %1570 = vadd.xlane.f32.xlu0 %v1569
  %v1571 = vpop.xlane.xlu0 %1570
  %v1572 = vsel %vm1493, %v1455, 0.0
  %1573 = vadd.xlane.f32.xlu0 %v1572
  %v1574 = vpop.xlane.xlu0 %1573
  %v1575 = vsel %vm1493, %v1456, 0.0
  %1576 = vadd.xlane.f32.xlu0 %v1575
  %v1577 = vpop.xlane.xlu0 %1576
  %v1578 = vsel %vm1493, %v1457, 0.0
  %1579 = vadd.xlane.f32.xlu0 %v1578
  %v1580 = vpop.xlane.xlu0 %1579
  %v1581 = vsel %vm1493, %v1458, 0.0
  %1582 = vadd.xlane.f32.xlu0 %v1581
  %v1583 = vpop.xlane.xlu0 %1582
  %v1584 = vsel %vm1493, %v1459, 0.0
  %1585 = vadd.xlane.f32.xlu0 %v1584
  %v1586 = vpop.xlane.xlu0 %1585
  %v1587 = vsel %vm1493, %v1460, 0.0
  %1588 = vadd.xlane.f32.xlu0 %v1587
  %v1589 = vpop.xlane.xlu0 %1588
  %v1590 = vsel %vm1493, %v1461, 0.0
  %1591 = vadd.xlane.f32.xlu0 %v1590
  %v1592 = vpop.xlane.xlu0 %1591
  %v1593 = vsel %vm1493, %v1462, 0.0
  %1594 = vadd.xlane.f32.xlu0 %v1593
  %v1595 = vpop.xlane.xlu0 %1594
  %v1596 = vsel %vm1493, %v1463, 0.0
  %1597 = vadd.xlane.f32.xlu0 %v1596
  %v1598 = vpop.xlane.xlu0 %1597
  %v1599 = vsel %vm1493, %v1464, 0.0
  %1600 = vadd.xlane.f32.xlu0 %v1599
  %v1601 = vpop.xlane.xlu0 %1600
  %v1602 = vsel %vm1493, %v1465, 0.0
  %1603 = vadd.xlane.f32.xlu0 %v1602
  %v1604 = vpop.xlane.xlu0 %1603
  %v1605 = vsel %vm1493, %v1466, 0.0
  %1606 = vadd.xlane.f32.xlu0 %v1605
  %v1607 = vpop.xlane.xlu0 %1606
  %v1608 = vsel %vm1493, %v1467, 0.0
  %1609 = vadd.xlane.f32.xlu0 %v1608
  %v1610 = vpop.xlane.xlu0 %1609
  %v1611 = vsel %vm1493, %v1468, 0.0
  %1612 = vadd.xlane.f32.xlu0 %v1611
  %v1613 = vpop.xlane.xlu0 %1612
  %v1614 = vsel %vm1493, %v1469, 0.0
  %1615 = vadd.xlane.f32.xlu0 %v1614
  %v1616 = vpop.xlane.xlu0 %1615
  %v1617 = vsel %vm1493, %v1470, 0.0
  %1618 = vadd.xlane.f32.xlu0 %v1617
  %v1619 = vpop.xlane.xlu0 %1618
  %v1620 = vsel %vm1493, %v1471, 0.0
  %1621 = vadd.xlane.f32.xlu0 %v1620
  %v1622 = vpop.xlane.xlu0 %1621
  %v1623 = vsel %vm1493, %v1472, 0.0
  %1624 = vadd.xlane.f32.xlu0 %v1623
  %v1625 = vpop.xlane.xlu0 %1624
  %v1626 = vsel %vm1493, %v1473, 0.0
  %1627 = vadd.xlane.f32.xlu0 %v1626
  %v1628 = vpop.xlane.xlu0 %1627
  %v1629 = vsel %vm1493, %v1474, 0.0
  %1630 = vadd.xlane.f32.xlu0 %v1629
  %v1631 = vpop.xlane.xlu0 %1630
  %v1632 = vsel %vm1493, %v1475, 0.0
  %1633 = vadd.xlane.f32.xlu0 %v1632
  %v1634 = vpop.xlane.xlu0 %1633
  %v1635 = vsel %vm1493, %v1476, 0.0
  %1636 = vadd.xlane.f32.xlu0 %v1635
  %v1637 = vpop.xlane.xlu0 %1636
  %v1638 = vsel %vm1493, %v1477, 0.0
  %1639 = vadd.xlane.f32.xlu0 %v1638
  %v1640 = vpop.xlane.xlu0 %1639
  %v1641 = vsel %vm1493, %v1478, 0.0
  %1642 = vadd.xlane.f32.xlu0 %v1641
  %v1643 = vpop.xlane.xlu0 %1642
  %v1644 = vsel %vm1493, %v1479, 0.0
  %1645 = vadd.xlane.f32.xlu0 %v1644
  %v1646 = vpop.xlane.xlu0 %1645
  %v1647 = vsel %vm1493, %v1480, 0.0
  %1648 = vadd.xlane.f32.xlu0 %v1647
  %v1649 = vpop.xlane.xlu0 %1648
  %v1650 = vsel %vm1493, %v1481, 0.0
  %1651 = vadd.xlane.f32.xlu0 %v1650
  %v1652 = vpop.xlane.xlu0 %1651
  %v1653 = vsel %vm1493, %v1482, 0.0
  %1654 = vadd.xlane.f32.xlu0 %v1653
  %v1655 = vpop.xlane.xlu0 %1654
  %v1656 = vsel %vm1493, %v1483, 0.0
  %1657 = vadd.xlane.f32.xlu0 %v1656
  %v1658 = vpop.xlane.xlu0 %1657
  %v1659 = vsel %vm1493, %v1484, 0.0
  %1660 = vadd.xlane.f32.xlu0 %v1659
  %v1661 = vpop.xlane.xlu0 %1660
  %v1662 = vsel %vm1493, %v1485, 0.0
  %1663 = vadd.xlane.f32.xlu0 %v1662
  %v1664 = vpop.xlane.xlu0 %1663
  %v1665 = vsel %vm1493, %v1486, 0.0
  %1666 = vadd.xlane.f32.xlu0 %v1665
  %v1667 = vpop.xlane.xlu0 %1666
  %v1668 = vsel %vm1493, %v1487, 0.0
  %1669 = vadd.xlane.f32.xlu0 %v1668
  %v1670 = vpop.xlane.xlu0 %1669
  %v1671 = vsel %vm1493, %v1488, 0.0
  %1672 = vadd.xlane.f32.xlu0 %v1671
  %v1673 = vpop.xlane.xlu0 %1672
  %v1674 = vsel %vm1493, %v1489, 0.0
  %1675 = vadd.xlane.f32.xlu0 %v1674
  %v1676 = vpop.xlane.xlu0 %1675
  %v1677 = vsel %vm1493, %v1490, 0.0
  %1678 = vadd.xlane.f32.xlu0 %v1677
  %v1679 = vpop.xlane.xlu0 %1678
  %v1680 = vsel %vm1493, %v1491, 0.0
  %1681 = vadd.xlane.f32.xlu0 %v1680
  %v1682 = vpop.xlane.xlu0 %1681
  %v1683 = vsel %vm1493, %v1492, 0.0
  %1684 = vadd.xlane.f32.xlu0 %v1683
  %v1685 = vpop.xlane.xlu0 %1684
  %v1750 = vlaneseq
  %v1751 = vand.u32 %v1750, 127
  %v1752 = vlaneseq
  %v1753 = vshrl.u32 %v1752, 7
  %v1754 = vsub.s32 %v1751, %v1753
  %v1755 = vrot.slane %v1496, %v1754
  %v1756 = vadd.s32 %v1751, 4294967288
  %v1757 = vlaneseq
  %v1758 = vshrl.u32 %v1757, 7
  %v1759 = vsub.s32 %v1756, %v1758
  %v1760 = vrot.slane %v1499, %v1759
  %vm1761 = vcmask 130112
  %v1762 = vsel %vm1761, %v1760, %v1755
  %v1763 = vlaneseq
  %v1764 = vshrl.u32 %v1763, 7
  %v1765 = vsub.s32 %v1751, %v1764
  %v1766 = vrot.slane %v1502, %v1765
  %v1767 = vlaneseq
  %v1768 = vshrl.u32 %v1767, 7
  %v1769 = vsub.s32 %v1756, %v1768
  %v1770 = vrot.slane %v1505, %v1769
  %v1771 = vsel %vm1761, %v1770, %v1766
  %v1772 = vlaneseq
  %v1773 = vshrl.u32 %v1772, 7
  %v1774 = vsub.s32 %v1751, %v1773
  %v1775 = vrot.slane %v1508, %v1774
  %v1776 = vlaneseq
  %v1777 = vshrl.u32 %v1776, 7
  %v1778 = vsub.s32 %v1756, %v1777
  %v1779 = vrot.slane %v1511, %v1778
  %v1780 = vsel %vm1761, %v1779, %v1775
  %v1781 = vlaneseq
  %v1782 = vshrl.u32 %v1781, 7
  %v1783 = vsub.s32 %v1751, %v1782
  %v1784 = vrot.slane %v1514, %v1783
  %v1785 = vlaneseq
  %v1786 = vshrl.u32 %v1785, 7
  %v1787 = vsub.s32 %v1756, %v1786
  %v1788 = vrot.slane %v1517, %v1787
  %v1789 = vsel %vm1761, %v1788, %v1784
  %v1790 = vlaneseq
  %v1791 = vshrl.u32 %v1790, 7
  %v1792 = vsub.s32 %v1751, %v1791
  %v1793 = vrot.slane %v1520, %v1792
  %v1794 = vlaneseq
  %v1795 = vshrl.u32 %v1794, 7
  %v1796 = vsub.s32 %v1756, %v1795
  %v1797 = vrot.slane %v1523, %v1796
  %v1798 = vsel %vm1761, %v1797, %v1793
  %v1799 = vlaneseq
  %v1800 = vshrl.u32 %v1799, 7
  %v1801 = vsub.s32 %v1751, %v1800
  %v1802 = vrot.slane %v1526, %v1801
  %v1803 = vlaneseq
  %v1804 = vshrl.u32 %v1803, 7
  %v1805 = vsub.s32 %v1756, %v1804
  %v1806 = vrot.slane %v1529, %v1805
  %v1807 = vsel %vm1761, %v1806, %v1802
  %v1808 = vlaneseq
  %v1809 = vshrl.u32 %v1808, 7
  %v1810 = vsub.s32 %v1751, %v1809
  %v1811 = vrot.slane %v1532, %v1810
  %v1812 = vlaneseq
  %v1813 = vshrl.u32 %v1812, 7
  %v1814 = vsub.s32 %v1756, %v1813
  %v1815 = vrot.slane %v1535, %v1814
  %v1816 = vsel %vm1761, %v1815, %v1811
  %v1817 = vlaneseq
  %v1818 = vshrl.u32 %v1817, 7
  %v1819 = vsub.s32 %v1751, %v1818
  %v1820 = vrot.slane %v1538, %v1819
  %v1821 = vlaneseq
  %v1822 = vshrl.u32 %v1821, 7
  %v1823 = vsub.s32 %v1756, %v1822
  %v1824 = vrot.slane %v1541, %v1823
  %v1825 = vsel %vm1761, %v1824, %v1820
  %v1826 = vlaneseq
  %v1827 = vshrl.u32 %v1826, 7
  %v1828 = vsub.s32 %v1751, %v1827
  %v1829 = vrot.slane %v1544, %v1828
  %v1830 = vlaneseq
  %v1831 = vshrl.u32 %v1830, 7
  %v1832 = vsub.s32 %v1756, %v1831
  %v1833 = vrot.slane %v1547, %v1832
  %v1834 = vsel %vm1761, %v1833, %v1829
  %v1835 = vlaneseq
  %v1836 = vshrl.u32 %v1835, 7
  %v1837 = vsub.s32 %v1751, %v1836
  %v1838 = vrot.slane %v1550, %v1837
  %v1839 = vlaneseq
  %v1840 = vshrl.u32 %v1839, 7
  %v1841 = vsub.s32 %v1756, %v1840
  %v1842 = vrot.slane %v1553, %v1841
  %v1843 = vsel %vm1761, %v1842, %v1838
  %v1844 = vlaneseq
  %v1845 = vshrl.u32 %v1844, 7
  %v1846 = vsub.s32 %v1751, %v1845
  %v1847 = vrot.slane %v1556, %v1846
  %v1848 = vlaneseq
  %v1849 = vshrl.u32 %v1848, 7
  %v1850 = vsub.s32 %v1756, %v1849
  %v1851 = vrot.slane %v1559, %v1850
  %v1852 = vsel %vm1761, %v1851, %v1847
  %v1853 = vlaneseq
  %v1854 = vshrl.u32 %v1853, 7
  %v1855 = vsub.s32 %v1751, %v1854
  %v1856 = vrot.slane %v1562, %v1855
  %v1857 = vlaneseq
  %v1858 = vshrl.u32 %v1857, 7
  %v1859 = vsub.s32 %v1756, %v1858
  %v1860 = vrot.slane %v1565, %v1859
  %v1861 = vsel %vm1761, %v1860, %v1856
  %v1862 = vlaneseq
  %v1863 = vshrl.u32 %v1862, 7
  %v1864 = vsub.s32 %v1751, %v1863
  %v1865 = vrot.slane %v1568, %v1864
  %v1866 = vlaneseq
  %v1867 = vshrl.u32 %v1866, 7
  %v1868 = vsub.s32 %v1756, %v1867
  %v1869 = vrot.slane %v1571, %v1868
  %v1870 = vsel %vm1761, %v1869, %v1865
  %v1871 = vlaneseq
  %v1872 = vshrl.u32 %v1871, 7
  %v1873 = vsub.s32 %v1751, %v1872
  %v1874 = vrot.slane %v1574, %v1873
  %v1875 = vlaneseq
  %v1876 = vshrl.u32 %v1875, 7
  %v1877 = vsub.s32 %v1756, %v1876
  %v1878 = vrot.slane %v1577, %v1877
  %v1879 = vsel %vm1761, %v1878, %v1874
  %v1880 = vlaneseq
  %v1881 = vshrl.u32 %v1880, 7
  %v1882 = vsub.s32 %v1751, %v1881
  %v1883 = vrot.slane %v1580, %v1882
  %v1884 = vlaneseq
  %v1885 = vshrl.u32 %v1884, 7
  %v1886 = vsub.s32 %v1756, %v1885
  %v1887 = vrot.slane %v1583, %v1886
  %v1888 = vsel %vm1761, %v1887, %v1883
  %v1889 = vlaneseq
  %v1890 = vshrl.u32 %v1889, 7
  %v1891 = vsub.s32 %v1751, %v1890
  %v1892 = vrot.slane %v1586, %v1891
  %v1893 = vlaneseq
  %v1894 = vshrl.u32 %v1893, 7
  %v1895 = vsub.s32 %v1756, %v1894
  %v1896 = vrot.slane %v1589, %v1895
  %v1897 = vsel %vm1761, %v1896, %v1892
  %v1898 = vlaneseq
  %v1899 = vshrl.u32 %v1898, 7
  %v1900 = vsub.s32 %v1751, %v1899
  %v1901 = vrot.slane %v1592, %v1900
  %v1902 = vlaneseq
  %v1903 = vshrl.u32 %v1902, 7
  %v1904 = vsub.s32 %v1756, %v1903
  %v1905 = vrot.slane %v1595, %v1904
  %v1906 = vsel %vm1761, %v1905, %v1901
  %v1907 = vlaneseq
  %v1908 = vshrl.u32 %v1907, 7
  %v1909 = vsub.s32 %v1751, %v1908
  %v1910 = vrot.slane %v1598, %v1909
  %v1911 = vlaneseq
  %v1912 = vshrl.u32 %v1911, 7
  %v1913 = vsub.s32 %v1756, %v1912
  %v1914 = vrot.slane %v1601, %v1913
  %v1915 = vsel %vm1761, %v1914, %v1910
  %v1916 = vlaneseq
  %v1917 = vshrl.u32 %v1916, 7
  %v1918 = vsub.s32 %v1751, %v1917
  %v1919 = vrot.slane %v1604, %v1918
  %v1920 = vlaneseq
  %v1921 = vshrl.u32 %v1920, 7
  %v1922 = vsub.s32 %v1756, %v1921
  %v1923 = vrot.slane %v1607, %v1922
  %v1924 = vsel %vm1761, %v1923, %v1919
  %v1925 = vlaneseq
  %v1926 = vshrl.u32 %v1925, 7
  %v1927 = vsub.s32 %v1751, %v1926
  %v1928 = vrot.slane %v1610, %v1927
  %v1929 = vlaneseq
  %v1930 = vshrl.u32 %v1929, 7
  %v1931 = vsub.s32 %v1756, %v1930
  %v1932 = vrot.slane %v1613, %v1931
  %v1933 = vsel %vm1761, %v1932, %v1928
  %v1934 = vlaneseq
  %v1935 = vshrl.u32 %v1934, 7
  %v1936 = vsub.s32 %v1751, %v1935
  %v1937 = vrot.slane %v1616, %v1936
  %v1938 = vlaneseq
  %v1939 = vshrl.u32 %v1938, 7
  %v1940 = vsub.s32 %v1756, %v1939
  %v1941 = vrot.slane %v1619, %v1940
  %v1942 = vsel %vm1761, %v1941, %v1937
  %v1943 = vlaneseq
  %v1944 = vshrl.u32 %v1943, 7
  %v1945 = vsub.s32 %v1751, %v1944
  %v1946 = vrot.slane %v1622, %v1945
  %v1947 = vlaneseq
  %v1948 = vshrl.u32 %v1947, 7
  %v1949 = vsub.s32 %v1756, %v1948
  %v1950 = vrot.slane %v1625, %v1949
  %v1951 = vsel %vm1761, %v1950, %v1946
  %v1952 = vlaneseq
  %v1953 = vshrl.u32 %v1952, 7
  %v1954 = vsub.s32 %v1751, %v1953
  %v1955 = vrot.slane %v1628, %v1954
  %v1956 = vlaneseq
  %v1957 = vshrl.u32 %v1956, 7
  %v1958 = vsub.s32 %v1756, %v1957
  %v1959 = vrot.slane %v1631, %v1958
  %v1960 = vsel %vm1761, %v1959, %v1955
  %v1961 = vlaneseq
  %v1962 = vshrl.u32 %v1961, 7
  %v1963 = vsub.s32 %v1751, %v1962
  %v1964 = vrot.slane %v1634, %v1963
  %v1965 = vlaneseq
  %v1966 = vshrl.u32 %v1965, 7
  %v1967 = vsub.s32 %v1756, %v1966
  %v1968 = vrot.slane %v1637, %v1967
  %v1969 = vsel %vm1761, %v1968, %v1964
  %v1970 = vlaneseq
  %v1971 = vshrl.u32 %v1970, 7
  %v1972 = vsub.s32 %v1751, %v1971
  %v1973 = vrot.slane %v1640, %v1972
  %v1974 = vlaneseq
  %v1975 = vshrl.u32 %v1974, 7
  %v1976 = vsub.s32 %v1756, %v1975
  %v1977 = vrot.slane %v1643, %v1976
  %v1978 = vsel %vm1761, %v1977, %v1973
  %v1979 = vlaneseq
  %v1980 = vshrl.u32 %v1979, 7
  %v1981 = vsub.s32 %v1751, %v1980
  %v1982 = vrot.slane %v1646, %v1981
  %v1983 = vlaneseq
  %v1984 = vshrl.u32 %v1983, 7
  %v1985 = vsub.s32 %v1756, %v1984
  %v1986 = vrot.slane %v1649, %v1985
  %v1987 = vsel %vm1761, %v1986, %v1982
  %v1988 = vlaneseq
  %v1989 = vshrl.u32 %v1988, 7
  %v1990 = vsub.s32 %v1751, %v1989
  %v1991 = vrot.slane %v1652, %v1990
  %v1992 = vlaneseq
  %v1993 = vshrl.u32 %v1992, 7
  %v1994 = vsub.s32 %v1756, %v1993
  %v1995 = vrot.slane %v1655, %v1994
  %v1996 = vsel %vm1761, %v1995, %v1991
  %v1997 = vlaneseq
  %v1998 = vshrl.u32 %v1997, 7
  %v1999 = vsub.s32 %v1751, %v1998
  %v2000 = vrot.slane %v1658, %v1999
  %v2001 = vlaneseq
  %v2002 = vshrl.u32 %v2001, 7
  %v2003 = vsub.s32 %v1756, %v2002
  %v2004 = vrot.slane %v1661, %v2003
  %v2005 = vsel %vm1761, %v2004, %v2000
  %v2006 = vlaneseq
  %v2007 = vshrl.u32 %v2006, 7
  %v2008 = vsub.s32 %v1751, %v2007
  %v2009 = vrot.slane %v1664, %v2008
  %v2010 = vlaneseq
  %v2011 = vshrl.u32 %v2010, 7
  %v2012 = vsub.s32 %v1756, %v2011
  %v2013 = vrot.slane %v1667, %v2012
  %v2014 = vsel %vm1761, %v2013, %v2009
  %v2015 = vlaneseq
  %v2016 = vshrl.u32 %v2015, 7
  %v2017 = vsub.s32 %v1751, %v2016
  %v2018 = vrot.slane %v1670, %v2017
  %v2019 = vlaneseq
  %v2020 = vshrl.u32 %v2019, 7
  %v2021 = vsub.s32 %v1756, %v2020
  %v2022 = vrot.slane %v1673, %v2021
  %v2023 = vsel %vm1761, %v2022, %v2018
  %v2024 = vlaneseq
  %v2025 = vshrl.u32 %v2024, 7
  %v2026 = vsub.s32 %v1751, %v2025
  %v2027 = vrot.slane %v1676, %v2026
  %v2028 = vlaneseq
  %v2029 = vshrl.u32 %v2028, 7
  %v2030 = vsub.s32 %v1756, %v2029
  %v2031 = vrot.slane %v1679, %v2030
  %v2032 = vsel %vm1761, %v2031, %v2027
  %v2033 = vlaneseq
  %v2034 = vshrl.u32 %v2033, 7
  %v2035 = vsub.s32 %v1751, %v2034
  %v2036 = vrot.slane %v1682, %v2035
  %v2037 = vlaneseq
  %v2038 = vshrl.u32 %v2037, 7
  %v2039 = vsub.s32 %v1756, %v2038
  %v2040 = vrot.slane %v1685, %v2039
  %v2041 = vsel %vm1761, %v2040, %v2036
  %vm2042 = vcmask 1041409
  %v2043 = vsel %vm2042, %v1771, %v1762
  %vm2044 = vcmask 1042434
  %v2045 = vsel %vm2044, %v1780, %v2043
  %vm2046 = vcmask 1043459
  %v2047 = vsel %vm2046, %v1789, %v2045
  %vm2048 = vcmask 1044484
  %v2049 = vsel %vm2048, %v1798, %v2047
  %vm2050 = vcmask 1045509
  %v2051 = vsel %vm2050, %v1807, %v2049
  %vm2052 = vcmask 1046534
  %v2053 = vsel %vm2052, %v1816, %v2051
  %vm2054 = vcmask 1047559
  %v2055 = vsel %vm2054, %v1825, %v2053
  %v2056 = vsel %vm2042, %v1843, %v1834
  %v2057 = vsel %vm2044, %v1852, %v2056
  %v2058 = vsel %vm2046, %v1861, %v2057
  %v2059 = vsel %vm2048, %v1870, %v2058
  %v2060 = vsel %vm2050, %v1879, %v2059
  %v2061 = vsel %vm2052, %v1888, %v2060
  %v2062 = vsel %vm2054, %v1897, %v2061
  %v2063 = vsel %vm2042, %v1915, %v1906
  %v2064 = vsel %vm2044, %v1924, %v2063
  %v2065 = vsel %vm2046, %v1933, %v2064
  %v2066 = vsel %vm2048, %v1942, %v2065
  %v2067 = vsel %vm2050, %v1951, %v2066
  %v2068 = vsel %vm2052, %v1960, %v2067
  %v2069 = vsel %vm2054, %v1969, %v2068
  %v2070 = vsel %vm2042, %v1987, %v1978
  %v2071 = vsel %vm2044, %v1996, %v2070
  %v2072 = vsel %vm2046, %v2005, %v2071
  %v2073 = vsel %vm2048, %v2014, %v2072
  %v2074 = vsel %vm2050, %v2023, %v2073
  %v2075 = vsel %vm2052, %v2032, %v2074
  %v2076 = vsel %vm2054, %v2041, %v2075
  %v2081 = vadd.s32 %v1751, 4294967280
  %v2082 = vlaneseq
  %v2083 = vshrl.u32 %v2082, 7
  %v2084 = vsub.s32 %v2081, %v2083
  %v2085 = vrot.slane %v1496, %v2084
  %v2086 = vadd.s32 %v1751, 4294967272
  %v2087 = vlaneseq
  %v2088 = vshrl.u32 %v2087, 7
  %v2089 = vsub.s32 %v2086, %v2088
  %v2090 = vrot.slane %v1499, %v2089
  %vm2091 = vcmask 261312
  %v2092 = vsel %vm2091, %v2090, %v2085
  %v2093 = vlaneseq
  %v2094 = vshrl.u32 %v2093, 7
  %v2095 = vsub.s32 %v2081, %v2094
  %v2096 = vrot.slane %v1502, %v2095
  %v2097 = vlaneseq
  %v2098 = vshrl.u32 %v2097, 7
  %v2099 = vsub.s32 %v2086, %v2098
  %v2100 = vrot.slane %v1505, %v2099
  %v2101 = vsel %vm2091, %v2100, %v2096
  %v2102 = vlaneseq
  %v2103 = vshrl.u32 %v2102, 7
  %v2104 = vsub.s32 %v2081, %v2103
  %v2105 = vrot.slane %v1508, %v2104
  %v2106 = vlaneseq
  %v2107 = vshrl.u32 %v2106, 7
  %v2108 = vsub.s32 %v2086, %v2107
  %v2109 = vrot.slane %v1511, %v2108
  %v2110 = vsel %vm2091, %v2109, %v2105
  %v2111 = vlaneseq
  %v2112 = vshrl.u32 %v2111, 7
  %v2113 = vsub.s32 %v2081, %v2112
  %v2114 = vrot.slane %v1514, %v2113
  %v2115 = vlaneseq
  %v2116 = vshrl.u32 %v2115, 7
  %v2117 = vsub.s32 %v2086, %v2116
  %v2118 = vrot.slane %v1517, %v2117
  %v2119 = vsel %vm2091, %v2118, %v2114
  %v2120 = vlaneseq
  %v2121 = vshrl.u32 %v2120, 7
  %v2122 = vsub.s32 %v2081, %v2121
  %v2123 = vrot.slane %v1520, %v2122
  %v2124 = vlaneseq
  %v2125 = vshrl.u32 %v2124, 7
  %v2126 = vsub.s32 %v2086, %v2125
  %v2127 = vrot.slane %v1523, %v2126
  %v2128 = vsel %vm2091, %v2127, %v2123
  %v2129 = vlaneseq
  %v2130 = vshrl.u32 %v2129, 7
  %v2131 = vsub.s32 %v2081, %v2130
  %v2132 = vrot.slane %v1526, %v2131
  %v2133 = vlaneseq
  %v2134 = vshrl.u32 %v2133, 7
  %v2135 = vsub.s32 %v2086, %v2134
  %v2136 = vrot.slane %v1529, %v2135
  %v2137 = vsel %vm2091, %v2136, %v2132
  %v2138 = vlaneseq
  %v2139 = vshrl.u32 %v2138, 7
  %v2140 = vsub.s32 %v2081, %v2139
  %v2141 = vrot.slane %v1532, %v2140
  %v2142 = vlaneseq
  %v2143 = vshrl.u32 %v2142, 7
  %v2144 = vsub.s32 %v2086, %v2143
  %v2145 = vrot.slane %v1535, %v2144
  %v2146 = vsel %vm2091, %v2145, %v2141
  %v2147 = vlaneseq
  %v2148 = vshrl.u32 %v2147, 7
  %v2149 = vsub.s32 %v2081, %v2148
  %v2150 = vrot.slane %v1538, %v2149
  %v2151 = vlaneseq
  %v2152 = vshrl.u32 %v2151, 7
  %v2153 = vsub.s32 %v2086, %v2152
  %v2154 = vrot.slane %v1541, %v2153
  %v2155 = vsel %vm2091, %v2154, %v2150
  %v2156 = vlaneseq
  %v2157 = vshrl.u32 %v2156, 7
  %v2158 = vsub.s32 %v2081, %v2157
  %v2159 = vrot.slane %v1544, %v2158
  %v2160 = vlaneseq
  %v2161 = vshrl.u32 %v2160, 7
  %v2162 = vsub.s32 %v2086, %v2161
  %v2163 = vrot.slane %v1547, %v2162
  %v2164 = vsel %vm2091, %v2163, %v2159
  %v2165 = vlaneseq
  %v2166 = vshrl.u32 %v2165, 7
  %v2167 = vsub.s32 %v2081, %v2166
  %v2168 = vrot.slane %v1550, %v2167
  %v2169 = vlaneseq
  %v2170 = vshrl.u32 %v2169, 7
  %v2171 = vsub.s32 %v2086, %v2170
  %v2172 = vrot.slane %v1553, %v2171
  %v2173 = vsel %vm2091, %v2172, %v2168
  %v2174 = vlaneseq
  %v2175 = vshrl.u32 %v2174, 7
  %v2176 = vsub.s32 %v2081, %v2175
  %v2177 = vrot.slane %v1556, %v2176
  %v2178 = vlaneseq
  %v2179 = vshrl.u32 %v2178, 7
  %v2180 = vsub.s32 %v2086, %v2179
  %v2181 = vrot.slane %v1559, %v2180
  %v2182 = vsel %vm2091, %v2181, %v2177
  %v2183 = vlaneseq
  %v2184 = vshrl.u32 %v2183, 7
  %v2185 = vsub.s32 %v2081, %v2184
  %v2186 = vrot.slane %v1562, %v2185
  %v2187 = vlaneseq
  %v2188 = vshrl.u32 %v2187, 7
  %v2189 = vsub.s32 %v2086, %v2188
  %v2190 = vrot.slane %v1565, %v2189
  %v2191 = vsel %vm2091, %v2190, %v2186
  %v2192 = vlaneseq
  %v2193 = vshrl.u32 %v2192, 7
  %v2194 = vsub.s32 %v2081, %v2193
  %v2195 = vrot.slane %v1568, %v2194
  %v2196 = vlaneseq
  %v2197 = vshrl.u32 %v2196, 7
  %v2198 = vsub.s32 %v2086, %v2197
  %v2199 = vrot.slane %v1571, %v2198
  %v2200 = vsel %vm2091, %v2199, %v2195
  %v2201 = vlaneseq
  %v2202 = vshrl.u32 %v2201, 7
  %v2203 = vsub.s32 %v2081, %v2202
  %v2204 = vrot.slane %v1574, %v2203
  %v2205 = vlaneseq
  %v2206 = vshrl.u32 %v2205, 7
  %v2207 = vsub.s32 %v2086, %v2206
  %v2208 = vrot.slane %v1577, %v2207
  %v2209 = vsel %vm2091, %v2208, %v2204
  %v2210 = vlaneseq
  %v2211 = vshrl.u32 %v2210, 7
  %v2212 = vsub.s32 %v2081, %v2211
  %v2213 = vrot.slane %v1580, %v2212
  %v2214 = vlaneseq
  %v2215 = vshrl.u32 %v2214, 7
  %v2216 = vsub.s32 %v2086, %v2215
  %v2217 = vrot.slane %v1583, %v2216
  %v2218 = vsel %vm2091, %v2217, %v2213
  %v2219 = vlaneseq
  %v2220 = vshrl.u32 %v2219, 7
  %v2221 = vsub.s32 %v2081, %v2220
  %v2222 = vrot.slane %v1586, %v2221
  %v2223 = vlaneseq
  %v2224 = vshrl.u32 %v2223, 7
  %v2225 = vsub.s32 %v2086, %v2224
  %v2226 = vrot.slane %v1589, %v2225
  %v2227 = vsel %vm2091, %v2226, %v2222
  %v2228 = vlaneseq
  %v2229 = vshrl.u32 %v2228, 7
  %v2230 = vsub.s32 %v2081, %v2229
  %v2231 = vrot.slane %v1592, %v2230
  %v2232 = vlaneseq
  %v2233 = vshrl.u32 %v2232, 7
  %v2234 = vsub.s32 %v2086, %v2233
  %v2235 = vrot.slane %v1595, %v2234
  %v2236 = vsel %vm2091, %v2235, %v2231
  %v2237 = vlaneseq
  %v2238 = vshrl.u32 %v2237, 7
  %v2239 = vsub.s32 %v2081, %v2238
  %v2240 = vrot.slane %v1598, %v2239
  %v2241 = vlaneseq
  %v2242 = vshrl.u32 %v2241, 7
  %v2243 = vsub.s32 %v2086, %v2242
  %v2244 = vrot.slane %v1601, %v2243
  %v2245 = vsel %vm2091, %v2244, %v2240
  %v2246 = vlaneseq
  %v2247 = vshrl.u32 %v2246, 7
  %v2248 = vsub.s32 %v2081, %v2247
  %v2249 = vrot.slane %v1604, %v2248
  %v2250 = vlaneseq
  %v2251 = vshrl.u32 %v2250, 7
  %v2252 = vsub.s32 %v2086, %v2251
  %v2253 = vrot.slane %v1607, %v2252
  %v2254 = vsel %vm2091, %v2253, %v2249
  %v2255 = vlaneseq
  %v2256 = vshrl.u32 %v2255, 7
  %v2257 = vsub.s32 %v2081, %v2256
  %v2258 = vrot.slane %v1610, %v2257
  %v2259 = vlaneseq
  %v2260 = vshrl.u32 %v2259, 7
  %v2261 = vsub.s32 %v2086, %v2260
  %v2262 = vrot.slane %v1613, %v2261
  %v2263 = vsel %vm2091, %v2262, %v2258
  %v2264 = vlaneseq
  %v2265 = vshrl.u32 %v2264, 7
  %v2266 = vsub.s32 %v2081, %v2265
  %v2267 = vrot.slane %v1616, %v2266
  %v2268 = vlaneseq
  %v2269 = vshrl.u32 %v2268, 7
  %v2270 = vsub.s32 %v2086, %v2269
  %v2271 = vrot.slane %v1619, %v2270
  %v2272 = vsel %vm2091, %v2271, %v2267
  %v2273 = vlaneseq
  %v2274 = vshrl.u32 %v2273, 7
  %v2275 = vsub.s32 %v2081, %v2274
  %v2276 = vrot.slane %v1622, %v2275
  %v2277 = vlaneseq
  %v2278 = vshrl.u32 %v2277, 7
  %v2279 = vsub.s32 %v2086, %v2278
  %v2280 = vrot.slane %v1625, %v2279
  %v2281 = vsel %vm2091, %v2280, %v2276
  %v2282 = vlaneseq
  %v2283 = vshrl.u32 %v2282, 7
  %v2284 = vsub.s32 %v2081, %v2283
  %v2285 = vrot.slane %v1628, %v2284
  %v2286 = vlaneseq
  %v2287 = vshrl.u32 %v2286, 7
  %v2288 = vsub.s32 %v2086, %v2287
  %v2289 = vrot.slane %v1631, %v2288
  %v2290 = vsel %vm2091, %v2289, %v2285
  %v2291 = vlaneseq
  %v2292 = vshrl.u32 %v2291, 7
  %v2293 = vsub.s32 %v2081, %v2292
  %v2294 = vrot.slane %v1634, %v2293
  %v2295 = vlaneseq
  %v2296 = vshrl.u32 %v2295, 7
  %v2297 = vsub.s32 %v2086, %v2296
  %v2298 = vrot.slane %v1637, %v2297
  %v2299 = vsel %vm2091, %v2298, %v2294
  %v2300 = vlaneseq
  %v2301 = vshrl.u32 %v2300, 7
  %v2302 = vsub.s32 %v2081, %v2301
  %v2303 = vrot.slane %v1640, %v2302
  %v2304 = vlaneseq
  %v2305 = vshrl.u32 %v2304, 7
  %v2306 = vsub.s32 %v2086, %v2305
  %v2307 = vrot.slane %v1643, %v2306
  %v2308 = vsel %vm2091, %v2307, %v2303
  %v2309 = vlaneseq
  %v2310 = vshrl.u32 %v2309, 7
  %v2311 = vsub.s32 %v2081, %v2310
  %v2312 = vrot.slane %v1646, %v2311
  %v2313 = vlaneseq
  %v2314 = vshrl.u32 %v2313, 7
  %v2315 = vsub.s32 %v2086, %v2314
  %v2316 = vrot.slane %v1649, %v2315
  %v2317 = vsel %vm2091, %v2316, %v2312
  %v2318 = vlaneseq
  %v2319 = vshrl.u32 %v2318, 7
  %v2320 = vsub.s32 %v2081, %v2319
  %v2321 = vrot.slane %v1652, %v2320
  %v2322 = vlaneseq
  %v2323 = vshrl.u32 %v2322, 7
  %v2324 = vsub.s32 %v2086, %v2323
  %v2325 = vrot.slane %v1655, %v2324
  %v2326 = vsel %vm2091, %v2325, %v2321
  %v2327 = vlaneseq
  %v2328 = vshrl.u32 %v2327, 7
  %v2329 = vsub.s32 %v2081, %v2328
  %v2330 = vrot.slane %v1658, %v2329
  %v2331 = vlaneseq
  %v2332 = vshrl.u32 %v2331, 7
  %v2333 = vsub.s32 %v2086, %v2332
  %v2334 = vrot.slane %v1661, %v2333
  %v2335 = vsel %vm2091, %v2334, %v2330
  %v2336 = vlaneseq
  %v2337 = vshrl.u32 %v2336, 7
  %v2338 = vsub.s32 %v2081, %v2337
  %v2339 = vrot.slane %v1664, %v2338
  %v2340 = vlaneseq
  %v2341 = vshrl.u32 %v2340, 7
  %v2342 = vsub.s32 %v2086, %v2341
  %v2343 = vrot.slane %v1667, %v2342
  %v2344 = vsel %vm2091, %v2343, %v2339
  %v2345 = vlaneseq
  %v2346 = vshrl.u32 %v2345, 7
  %v2347 = vsub.s32 %v2081, %v2346
  %v2348 = vrot.slane %v1670, %v2347
  %v2349 = vlaneseq
  %v2350 = vshrl.u32 %v2349, 7
  %v2351 = vsub.s32 %v2086, %v2350
  %v2352 = vrot.slane %v1673, %v2351
  %v2353 = vsel %vm2091, %v2352, %v2348
  %v2354 = vlaneseq
  %v2355 = vshrl.u32 %v2354, 7
  %v2356 = vsub.s32 %v2081, %v2355
  %v2357 = vrot.slane %v1676, %v2356
  %v2358 = vlaneseq
  %v2359 = vshrl.u32 %v2358, 7
  %v2360 = vsub.s32 %v2086, %v2359
  %v2361 = vrot.slane %v1679, %v2360
  %v2362 = vsel %vm2091, %v2361, %v2357
  %v2363 = vlaneseq
  %v2364 = vshrl.u32 %v2363, 7
  %v2365 = vsub.s32 %v2081, %v2364
  %v2366 = vrot.slane %v1682, %v2365
  %v2367 = vlaneseq
  %v2368 = vshrl.u32 %v2367, 7
  %v2369 = vsub.s32 %v2086, %v2368
  %v2370 = vrot.slane %v1685, %v2369
  %v2371 = vsel %vm2091, %v2370, %v2366
  %v2372 = vsel %vm2042, %v2101, %v2092
  %v2373 = vsel %vm2044, %v2110, %v2372
  %v2374 = vsel %vm2046, %v2119, %v2373
  %v2375 = vsel %vm2048, %v2128, %v2374
  %v2376 = vsel %vm2050, %v2137, %v2375
  %v2377 = vsel %vm2052, %v2146, %v2376
  %v2378 = vsel %vm2054, %v2155, %v2377
  %v2379 = vsel %vm2042, %v2173, %v2164
  %v2380 = vsel %vm2044, %v2182, %v2379
  %v2381 = vsel %vm2046, %v2191, %v2380
  %v2382 = vsel %vm2048, %v2200, %v2381
  %v2383 = vsel %vm2050, %v2209, %v2382
  %v2384 = vsel %vm2052, %v2218, %v2383
  %v2385 = vsel %vm2054, %v2227, %v2384
  %v2386 = vsel %vm2042, %v2245, %v2236
  %v2387 = vsel %vm2044, %v2254, %v2386
  %v2388 = vsel %vm2046, %v2263, %v2387
  %v2389 = vsel %vm2048, %v2272, %v2388
  %v2390 = vsel %vm2050, %v2281, %v2389
  %v2391 = vsel %vm2052, %v2290, %v2390
  %v2392 = vsel %vm2054, %v2299, %v2391
  %v2393 = vsel %vm2042, %v2317, %v2308
  %v2394 = vsel %vm2044, %v2326, %v2393
  %v2395 = vsel %vm2046, %v2335, %v2394
  %v2396 = vsel %vm2048, %v2344, %v2395
  %v2397 = vsel %vm2050, %v2353, %v2396
  %v2398 = vsel %vm2052, %v2362, %v2397
  %v2399 = vsel %vm2054, %v2371, %v2398
  %vm2404 = vcmask 130048
  %v2405 = vsel %vm2404, %v2055, %v2378
  %v2406 = vsel %vm2404, %v2062, %v2385
  %v2407 = vsel %vm2404, %v2069, %v2392
  %v2408 = vsel %vm2404, %v2076, %v2399
  %v2409 = vmul.f32 %v2405, %v69
  %v2410 = vmul.f32 %v2406, %v70
  %v2411 = vmul.f32 %v2407, %v71
  %v2412 = vmul.f32 %v2408, %v72
  %v2413 = vld [vmem:[%s16] sm:$0xff]
  %v2414 = vld [vmem:[%s16 + $0x8] sm:$0xff]
  %v2415 = vld [vmem:[%s16 + $0x10] sm:$0xff]
  %v2416 = vld [vmem:[%s16 + $0x18] sm:$0xff]
  %v2417 = vld [vmem:[%s16 + $0x20] sm:$0xff]
  %v2418 = vld [vmem:[%s16 + $0x28] sm:$0xff]
  %v2419 = vld [vmem:[%s16 + $0x30] sm:$0xff]
  %v2420 = vld [vmem:[%s16 + $0x38] sm:$0xff]
  %v2421 = vld [vmem:[%s16 + $0x40] sm:$0xff]
  %v2422 = vld [vmem:[%s16 + $0x48] sm:$0xff]
  %v2423 = vld [vmem:[%s16 + $0x50] sm:$0xff]
  %v2424 = vld [vmem:[%s16 + $0x58] sm:$0xff]
  %v2425 = vld [vmem:[%s16 + $0x60] sm:$0xff]
  %v2426 = vld [vmem:[%s16 + $0x68] sm:$0xff]
  %v2427 = vld [vmem:[%s16 + $0x70] sm:$0xff]
  %v2428 = vld [vmem:[%s16 + $0x78] sm:$0xff]
  %v2429 = vld [vmem:[%s16 + $0x80] sm:$0xff]
  %v2430 = vld [vmem:[%s16 + $0x88] sm:$0xff]
  %v2431 = vld [vmem:[%s16 + $0x90] sm:$0xff]
  %v2432 = vld [vmem:[%s16 + $0x98] sm:$0xff]
  %v2433 = vld [vmem:[%s16 + $0xa0] sm:$0xff]
  %v2434 = vld [vmem:[%s16 + $0xa8] sm:$0xff]
  %v2435 = vld [vmem:[%s16 + $0xb0] sm:$0xff]
  %v2436 = vld [vmem:[%s16 + $0xb8] sm:$0xff]
  %v2437 = vld [vmem:[%s16 + $0xc0] sm:$0xff]
  %v2438 = vld [vmem:[%s16 + $0xc8] sm:$0xff]
  %v2439 = vld [vmem:[%s16 + $0xd0] sm:$0xff]
  %v2440 = vld [vmem:[%s16 + $0xd8] sm:$0xff]
  %v2441 = vld [vmem:[%s16 + $0xe0] sm:$0xff]
  %v2442 = vld [vmem:[%s16 + $0xe8] sm:$0xff]
  %v2443 = vld [vmem:[%s16 + $0xf0] sm:$0xff]
  %v2444 = vld [vmem:[%s16 + $0xf8] sm:$0xff]
  %v2445 = vld [vmem:[%s17] sm:$0x3]
  %v2447 = vsel %vm1493, %v363, 0
  %v2450 = vsel %vm1493, %v364, 0
  %v2453 = vsel %vm1493, %v365, 0
  %v2456 = vsel %vm1493, %v366, 0
  %2458 = vmatprep.subr.mxu0 %v2414
  %2459 = vmatpush1.msra.mxu0 %v2413
  %2460 = vmatprep.subr.mxu0 %v2416
  %2461 = vmatpush1.msra.mxu0 %v2415
  %2462 = vmatprep.subr.mxu0 %v2418
  %2463 = vmatpush1.msra.mxu0 %v2417
  %2464 = vmatprep.subr.mxu0 %v2420
  %2465 = vmatpush1.msra.mxu0 %v2419
  %2466 = vmatprep.subr.mxu0 0.0
  %2467 = vmatpush1.msra.mxu0 0.0
  %2468 = vmatprep.subr.mxu0 0.0
  %2469 = vmatpush1.msra.mxu0 0.0
  %2470 = vmatprep.subr.mxu0 0.0
  %2471 = vmatpush1.msra.mxu0 0.0
  %2472 = vmatprep.subr.mxu0 0.0
  %2473 = vmatpush1.msra.mxu0 0.0
  %2474 = vmatprep.subr.mxu0 0.0
  %2475 = vmatpush1.msra.mxu0 0.0
  %2476 = vmatprep.subr.mxu0 0.0
  %2477 = vmatpush1.msra.mxu0 0.0
  %2478 = vmatprep.subr.mxu0 0.0
  %2479 = vmatpush1.msra.mxu0 0.0
  %2480 = vmatprep.subr.mxu0 0.0
  %2481 = vmatpush1.msra.mxu0 0.0
  %2482 = vmatprep.subr.mxu0 0.0
  %2483 = vmatpush1.msra.mxu0 0.0
  %2484 = vmatprep.subr.mxu0 0.0
  %2485 = vmatpush1.msra.mxu0 0.0
  %2486 = vmatprep.subr.mxu0 0.0
  %2487 = vmatpush1.msra.mxu0 0.0
  %2488 = vmatprep.subr.mxu0 0.0
  %2489 = vmatpush1.msra.mxu0 0.0
  %2490 = vmatprep.subr.mxu0 0.0
  %2491 = vmatpush1.msra.mxu0 0.0
  %2492 = vmatprep.subr.mxu0 0.0
  %2493 = vmatpush1.msra.mxu0 0.0
  %2494 = vmatprep.subr.mxu0 0.0
  %2495 = vmatpush1.msra.mxu0 0.0
  %2496 = vmatprep.subr.mxu0 0.0
  %2497 = vmatpush1.msra.mxu0 0.0
  %2498 = vmatprep.subr.mxu0 0.0
  %2499 = vmatpush1.msra.mxu0 0.0
  %2500 = vmatprep.subr.mxu0 0.0
  %2501 = vmatpush1.msra.mxu0 0.0
  %2502 = vmatprep.subr.mxu0 0.0
  %2503 = vmatpush1.msra.mxu0 0.0
  %2504 = vmatprep.subr.mxu0 0.0
  %2505 = vmatpush1.msra.mxu0 0.0
  %2506 = vmatprep.subr.mxu0 0.0
  %2507 = vmatpush1.msra.mxu0 0.0
  %2508 = vmatprep.subr.mxu0 0.0
  %2509 = vmatpush1.msra.mxu0 0.0
  %2510 = vmatprep.subr.mxu0 0.0
  %2511 = vmatpush1.msra.mxu0 0.0
  %2512 = vmatprep.subr.mxu0 0.0
  %2513 = vmatpush1.msra.mxu0 0.0
  %2514 = vmatprep.subr.mxu0 0.0
  %2515 = vmatpush1.msra.mxu0 0.0
  %2516 = vmatprep.subr.mxu0 0.0
  %2517 = vmatpush1.msra.mxu0 0.0
  %2518 = vmatprep.subr.mxu0 0.0
  %2519 = vmatpush1.msra.mxu0 0.0
  %2520 = vmatprep.subr.mxu0 0.0
  %2521 = vmatpush1.msra.mxu0 0.0
  %2522 = vmatprep.mubr.f32.mxu0 0.0
  %2523 = vmatmul.mubr.f32.gmra.mrb[0].mxu0 %v2447
  %v2524 = vpop.f32.mrb[0].mxu0
  %v2525 = vadd.f32 0.0, %v2524
  %v2526 = vpop.f32.mrb[0].mxu0
  %v2527 = vadd.f32 0.0, %v2526
  %2528 = vmatprep.mubr.f32.mxu0 0.0
  %2529 = vmatmul.mubr.f32.gmra.mrb[0].mxu0 %v2450
  %v2530 = vpop.f32.mrb[0].mxu0
  %v2531 = vadd.f32 0.0, %v2530
  %v2532 = vpop.f32.mrb[0].mxu0
  %v2533 = vadd.f32 0.0, %v2532
  %2534 = vmatprep.mubr.f32.mxu0 0.0
  %2535 = vmatmul.mubr.f32.gmra.mrb[0].mxu0 %v2453
  %v2536 = vpop.f32.mrb[0].mxu0
  %v2537 = vadd.f32 0.0, %v2536
  %v2538 = vpop.f32.mrb[0].mxu0
  %v2539 = vadd.f32 0.0, %v2538
  %2540 = vmatprep.mubr.f32.mxu0 0.0
  %2541 = vmatmul.mubr.f32.gmra.mrb[0].mxu0 %v2456
  %v2542 = vpop.f32.mrb[0].mxu0
  %v2543 = vadd.f32 0.0, %v2542
  %v2544 = vpop.f32.mrb[0].mxu0
  %v2545 = vadd.f32 0.0, %v2544
  %2546 = vdwg.mxu0
  %v2548 = vlaneseq
  %v2549 = vshrl.u32 %v2548, 7
  %v2550 = vsub.s32 0, %v2549
  %v2551 = vrot.slane %v2445, %v2550
  %v2552 = vlaneseq
  %v2553 = vshrl.u32 %v2552, 7
  %v2554 = vsub.s32 1, %v2553
  %v2555 = vrot.slane %v2445, %v2554
  %v2558 = vadd.f32 %v2551, %v2525
  %v2559 = vadd.f32 %v2555, %v2527
  %v2560 = vadd.f32 %v2551, %v2531
  %v2561 = vadd.f32 %v2555, %v2533
  %v2562 = vadd.f32 %v2551, %v2537
  %v2563 = vadd.f32 %v2555, %v2539
  %v2564 = vadd.f32 %v2551, %v2543
  %v2565 = vadd.f32 %v2555, %v2545
  %v2566 = vld [vmem:[%s13] sm:$0xff]
  %v2567 = vld [vmem:[%s13 + $0x8] sm:$0xff]
  %v2568 = vld [vmem:[%s13 + $0x10] sm:$0xff]
  %v2569 = vld [vmem:[%s13 + $0x18] sm:$0xff]
  %2570 = vmatprep.subr.mxu0 0.0
  %2571 = vmatpush1.msra.mxu0 %v2566
  %2572 = vmatprep.subr.mxu0 0.0
  %2573 = vmatpush1.msra.mxu0 %v2567
  %2574 = vmatprep.subr.mxu0 0.0
  %2575 = vmatpush1.msra.mxu0 %v2568
  %2576 = vmatprep.subr.mxu0 0.0
  %2577 = vmatpush1.msra.mxu0 %v2569
  %2578 = vmatprep.subr.mxu0 0.0
  %2579 = vmatpush1.msra.mxu0 0.0
  %2580 = vmatprep.subr.mxu0 0.0
  %2581 = vmatpush1.msra.mxu0 0.0
  %2582 = vmatprep.subr.mxu0 0.0
  %2583 = vmatpush1.msra.mxu0 0.0
  %2584 = vmatprep.subr.mxu0 0.0
  %2585 = vmatpush1.msra.mxu0 0.0
  %2586 = vmatprep.subr.mxu0 0.0
  %2587 = vmatpush1.msra.mxu0 0.0
  %2588 = vmatprep.subr.mxu0 0.0
  %2589 = vmatpush1.msra.mxu0 0.0
  %2590 = vmatprep.subr.mxu0 0.0
  %2591 = vmatpush1.msra.mxu0 0.0
  %2592 = vmatprep.subr.mxu0 0.0
  %2593 = vmatpush1.msra.mxu0 0.0
  %2594 = vmatprep.subr.mxu0 0.0
  %2595 = vmatpush1.msra.mxu0 0.0
  %2596 = vmatprep.subr.mxu0 0.0
  %2597 = vmatpush1.msra.mxu0 0.0
  %2598 = vmatprep.subr.mxu0 0.0
  %2599 = vmatpush1.msra.mxu0 0.0
  %2600 = vmatprep.subr.mxu0 0.0
  %2601 = vmatpush1.msra.mxu0 0.0
  %2602 = vmatprep.subr.mxu0 0.0
  %2603 = vmatpush1.msra.mxu0 0.0
  %2604 = vmatprep.subr.mxu0 0.0
  %2605 = vmatpush1.msra.mxu0 0.0
  %2606 = vmatprep.subr.mxu0 0.0
  %2607 = vmatpush1.msra.mxu0 0.0
  %2608 = vmatprep.subr.mxu0 0.0
  %2609 = vmatpush1.msra.mxu0 0.0
  %2610 = vmatprep.subr.mxu0 0.0
  %2611 = vmatpush1.msra.mxu0 0.0
  %2612 = vmatprep.subr.mxu0 0.0
  %2613 = vmatpush1.msra.mxu0 0.0
  %2614 = vmatprep.subr.mxu0 0.0
  %2615 = vmatpush1.msra.mxu0 0.0
  %2616 = vmatprep.subr.mxu0 0.0
  %2617 = vmatpush1.msra.mxu0 0.0
  %2618 = vmatprep.subr.mxu0 0.0
  %2619 = vmatpush1.msra.mxu0 0.0
  %2620 = vmatprep.subr.mxu0 0.0
  %2621 = vmatpush1.msra.mxu0 0.0
  %2622 = vmatprep.subr.mxu0 0.0
  %2623 = vmatpush1.msra.mxu0 0.0
  %2624 = vmatprep.subr.mxu0 0.0
  %2625 = vmatpush1.msra.mxu0 0.0
  %2626 = vmatprep.subr.mxu0 0.0
  %2627 = vmatpush1.msra.mxu0 0.0
  %2628 = vmatprep.subr.mxu0 0.0
  %2629 = vmatpush1.msra.mxu0 0.0
  %2630 = vmatprep.subr.mxu0 0.0
  %2631 = vmatpush1.msra.mxu0 0.0
  %2632 = vmatprep.subr.mxu0 0.0
  %2633 = vmatpush1.msra.mxu0 0.0
  %2634 = vmatprep.mubr.f32.mxu0 0.0
  %2635 = vmatmul.mubr.f32.gmra.mrb[0].mxu0 %v2447
  %v2636 = vpop.f32.mrb[0].mxu0
  %v2637 = vadd.f32 0.0, %v2636
  %v2638 = vpop.f32.mrb[0].mxu0
  %2639 = vmatprep.mubr.f32.mxu0 0.0
  %2640 = vmatmul.mubr.f32.gmra.mrb[0].mxu0 %v2450
  %v2641 = vpop.f32.mrb[0].mxu0
  %v2642 = vadd.f32 0.0, %v2641
  %v2643 = vpop.f32.mrb[0].mxu0
  %2644 = vmatprep.mubr.f32.mxu0 0.0
  %2645 = vmatmul.mubr.f32.gmra.mrb[0].mxu0 %v2453
  %v2646 = vpop.f32.mrb[0].mxu0
  %v2647 = vadd.f32 0.0, %v2646
  %v2648 = vpop.f32.mrb[0].mxu0
  %2649 = vmatprep.mubr.f32.mxu0 0.0
  %2650 = vmatmul.mubr.f32.gmra.mrb[0].mxu0 %v2456
  %v2651 = vpop.f32.mrb[0].mxu0
  %v2652 = vadd.f32 0.0, %v2651
  %v2653 = vpop.f32.mrb[0].mxu0
  %2654 = vdwg.mxu0
  %v2656 = vsel %vm1493, %v65, 0
  %v2659 = vsel %vm1493, %v66, 0
  %v2662 = vsel %vm1493, %v67, 0
  %v2665 = vsel %vm1493, %v68, 0
  %2667 = vmatprep.subr.mxu0 0.0
  %2668 = vmatpush1.msra.mxu0 %v2637
  %2669 = vmatprep.subr.mxu0 0.0
  %2670 = vmatpush1.msra.mxu0 %v2642
  %2671 = vmatprep.subr.mxu0 0.0
  %2672 = vmatpush1.msra.mxu0 %v2647
  %2673 = vmatprep.subr.mxu0 0.0
  %2674 = vmatpush1.msra.mxu0 %v2652
  %2675 = vmatprep.subr.mxu0 0.0
  %2676 = vmatpush1.msra.mxu0 0.0
  %2677 = vmatprep.subr.mxu0 0.0
  %2678 = vmatpush1.msra.mxu0 0.0
  %2679 = vmatprep.subr.mxu0 0.0
  %2680 = vmatpush1.msra.mxu0 0.0
  %2681 = vmatprep.subr.mxu0 0.0
  %2682 = vmatpush1.msra.mxu0 0.0
  %2683 = vmatprep.subr.mxu0 0.0
  %2684 = vmatpush1.msra.mxu0 0.0
  %2685 = vmatprep.subr.mxu0 0.0
  %2686 = vmatpush1.msra.mxu0 0.0
  %2687 = vmatprep.subr.mxu0 0.0
  %2688 = vmatpush1.msra.mxu0 0.0
  %2689 = vmatprep.subr.mxu0 0.0
  %2690 = vmatpush1.msra.mxu0 0.0
  %2691 = vmatprep.subr.mxu0 0.0
  %2692 = vmatpush1.msra.mxu0 0.0
  %2693 = vmatprep.subr.mxu0 0.0
  %2694 = vmatpush1.msra.mxu0 0.0
  %2695 = vmatprep.subr.mxu0 0.0
  %2696 = vmatpush1.msra.mxu0 0.0
  %2697 = vmatprep.subr.mxu0 0.0
  %2698 = vmatpush1.msra.mxu0 0.0
  %2699 = vmatprep.subr.mxu0 0.0
  %2700 = vmatpush1.msra.mxu0 0.0
  %2701 = vmatprep.subr.mxu0 0.0
  %2702 = vmatpush1.msra.mxu0 0.0
  %2703 = vmatprep.subr.mxu0 0.0
  %2704 = vmatpush1.msra.mxu0 0.0
  %2705 = vmatprep.subr.mxu0 0.0
  %2706 = vmatpush1.msra.mxu0 0.0
  %2707 = vmatprep.subr.mxu0 0.0
  %2708 = vmatpush1.msra.mxu0 0.0
  %2709 = vmatprep.subr.mxu0 0.0
  %2710 = vmatpush1.msra.mxu0 0.0
  %2711 = vmatprep.subr.mxu0 0.0
  %2712 = vmatpush1.msra.mxu0 0.0
  %2713 = vmatprep.subr.mxu0 0.0
  %2714 = vmatpush1.msra.mxu0 0.0
  %2715 = vmatprep.subr.mxu0 0.0
  %2716 = vmatpush1.msra.mxu0 0.0
  %2717 = vmatprep.subr.mxu0 0.0
  %2718 = vmatpush1.msra.mxu0 0.0
  %2719 = vmatprep.subr.mxu0 0.0
  %2720 = vmatpush1.msra.mxu0 0.0
  %2721 = vmatprep.subr.mxu0 0.0
  %2722 = vmatpush1.msra.mxu0 0.0
  %2723 = vmatprep.subr.mxu0 0.0
  %2724 = vmatpush1.msra.mxu0 0.0
  %2725 = vmatprep.subr.mxu0 0.0
  %2726 = vmatpush1.msra.mxu0 0.0
  %2727 = vmatprep.subr.mxu0 0.0
  %2728 = vmatpush1.msra.mxu0 0.0
  %2729 = vmatprep.subr.mxu0 0.0
  %2730 = vmatpush1.msra.mxu0 0.0
  %2731 = vmatprep.mubr.f32.mxu0 0.0
  %2732 = vmatmul.mubr.f32.gmra.mrb[0].mxu0 %v2656
  %v2733 = vpop.f32.mrb[0].mxu0
  %v2734 = vadd.f32 0.0, %v2733
  %v2735 = vpop.f32.mrb[0].mxu0
  %2736 = vmatprep.mubr.f32.mxu0 0.0
  %2737 = vmatmul.mubr.f32.gmra.mrb[0].mxu0 %v2659
  %v2738 = vpop.f32.mrb[0].mxu0
  %v2739 = vadd.f32 0.0, %v2738
  %v2740 = vpop.f32.mrb[0].mxu0
  %2741 = vmatprep.mubr.f32.mxu0 0.0
  %2742 = vmatmul.mubr.f32.gmra.mrb[0].mxu0 %v2662
  %v2743 = vpop.f32.mrb[0].mxu0
  %v2744 = vadd.f32 0.0, %v2743
  %v2745 = vpop.f32.mrb[0].mxu0
  %2746 = vmatprep.mubr.f32.mxu0 0.0
  %2747 = vmatmul.mubr.f32.gmra.mrb[0].mxu0 %v2665
  %v2748 = vpop.f32.mrb[0].mxu0
  %v2749 = vadd.f32 0.0, %v2748
  %v2750 = vpop.f32.mrb[0].mxu0
  %2751 = vdwg.mxu0
  %v2752 = vtanh.pop %v2734
  %v2753 = vtanh.pop %v2739
  %v2754 = vtanh.pop %v2744
  %v2755 = vtanh.pop %v2749
  %v2757 = vsel %vm1493, %v2409, 0
  %v2760 = vsel %vm1493, %v2410, 0
  %v2763 = vsel %vm1493, %v2411, 0
  %v2766 = vsel %vm1493, %v2412, 0
  %2768 = vmatprep.subr.mxu0 0.0
  %2769 = vmatpush1.msra.mxu0 %v2752
  %2770 = vmatprep.subr.mxu0 0.0
  %2771 = vmatpush1.msra.mxu0 %v2753
  %2772 = vmatprep.subr.mxu0 0.0
  %2773 = vmatpush1.msra.mxu0 %v2754
  %2774 = vmatprep.subr.mxu0 0.0
  %2775 = vmatpush1.msra.mxu0 %v2755
  %2776 = vmatprep.subr.mxu0 0.0
  %2777 = vmatpush1.msra.mxu0 0.0
  %2778 = vmatprep.subr.mxu0 0.0
  %2779 = vmatpush1.msra.mxu0 0.0
  %2780 = vmatprep.subr.mxu0 0.0
  %2781 = vmatpush1.msra.mxu0 0.0
  %2782 = vmatprep.subr.mxu0 0.0
  %2783 = vmatpush1.msra.mxu0 0.0
  %2784 = vmatprep.subr.mxu0 0.0
  %2785 = vmatpush1.msra.mxu0 0.0
  %2786 = vmatprep.subr.mxu0 0.0
  %2787 = vmatpush1.msra.mxu0 0.0
  %2788 = vmatprep.subr.mxu0 0.0
  %2789 = vmatpush1.msra.mxu0 0.0
  %2790 = vmatprep.subr.mxu0 0.0
  %2791 = vmatpush1.msra.mxu0 0.0
  %2792 = vmatprep.subr.mxu0 0.0
  %2793 = vmatpush1.msra.mxu0 0.0
  %2794 = vmatprep.subr.mxu0 0.0
  %2795 = vmatpush1.msra.mxu0 0.0
  %2796 = vmatprep.subr.mxu0 0.0
  %2797 = vmatpush1.msra.mxu0 0.0
  %2798 = vmatprep.subr.mxu0 0.0
  %2799 = vmatpush1.msra.mxu0 0.0
  %2800 = vmatprep.subr.mxu0 0.0
  %2801 = vmatpush1.msra.mxu0 0.0
  %2802 = vmatprep.subr.mxu0 0.0
  %2803 = vmatpush1.msra.mxu0 0.0
  %2804 = vmatprep.subr.mxu0 0.0
  %2805 = vmatpush1.msra.mxu0 0.0
  %2806 = vmatprep.subr.mxu0 0.0
  %2807 = vmatpush1.msra.mxu0 0.0
  %2808 = vmatprep.subr.mxu0 0.0
  %2809 = vmatpush1.msra.mxu0 0.0
  %2810 = vmatprep.subr.mxu0 0.0
  %2811 = vmatpush1.msra.mxu0 0.0
  %2812 = vmatprep.subr.mxu0 0.0
  %2813 = vmatpush1.msra.mxu0 0.0
  %2814 = vmatprep.subr.mxu0 0.0
  %2815 = vmatpush1.msra.mxu0 0.0
  %2816 = vmatprep.subr.mxu0 0.0
  %2817 = vmatpush1.msra.mxu0 0.0
  %2818 = vmatprep.subr.mxu0 0.0
  %2819 = vmatpush1.msra.mxu0 0.0
  %2820 = vmatprep.subr.mxu0 0.0
  %2821 = vmatpush1.msra.mxu0 0.0
  %2822 = vmatprep.subr.mxu0 0.0
  %2823 = vmatpush1.msra.mxu0 0.0
  %2824 = vmatprep.subr.mxu0 0.0
  %2825 = vmatpush1.msra.mxu0 0.0
  %2826 = vmatprep.subr.mxu0 0.0
  %2827 = vmatpush1.msra.mxu0 0.0
  %2828 = vmatprep.subr.mxu0 0.0
  %2829 = vmatpush1.msra.mxu0 0.0
  %2830 = vmatprep.subr.mxu0 0.0
  %2831 = vmatpush1.msra.mxu0 0.0
  %2832 = vmatprep.mubr.f32.mxu0 0.0
  %2833 = vmatmul.mubr.f32.gmra.mrb[0].mxu0 %v2757
  %v2834 = vpop.f32.mrb[0].mxu0
  %v2835 = vadd.f32 0.0, %v2834
  %v2836 = vpop.f32.mrb[0].mxu0
  %2837 = vmatprep.mubr.f32.mxu0 0.0
  %2838 = vmatmul.mubr.f32.gmra.mrb[0].mxu0 %v2760
  %v2839 = vpop.f32.mrb[0].mxu0
  %v2840 = vadd.f32 0.0, %v2839
  %v2841 = vpop.f32.mrb[0].mxu0
  %2842 = vmatprep.mubr.f32.mxu0 0.0
  %2843 = vmatmul.mubr.f32.gmra.mrb[0].mxu0 %v2763
  %v2844 = vpop.f32.mrb[0].mxu0
  %v2845 = vadd.f32 0.0, %v2844
  %v2846 = vpop.f32.mrb[0].mxu0
  %2847 = vmatprep.mubr.f32.mxu0 0.0
  %2848 = vmatmul.mubr.f32.gmra.mrb[0].mxu0 %v2766
  %v2849 = vpop.f32.mrb[0].mxu0
  %v2850 = vadd.f32 0.0, %v2849
  %v2851 = vpop.f32.mrb[0].mxu0
  %2852 = vdwg.mxu0
  %v2853 = vtanh.pop %v2835
  %v2854 = vtanh.pop %v2840
  %v2855 = vtanh.pop %v2845
  %v2856 = vtanh.pop %v2850
  %v2857 = vld [vmem:[%s14] sm:$0xff]
  %v2858 = vld [vmem:[%s14 + $0x8] sm:$0xff]
  %v2859 = vld [vmem:[%s14 + $0x10] sm:$0xff]
  %v2860 = vld [vmem:[%s14 + $0x18] sm:$0xff]
  %v2861 = vld [vmem:[%s14 + $0x20] sm:$0xff]
  %v2862 = vld [vmem:[%s14 + $0x28] sm:$0xff]
  %v2863 = vld [vmem:[%s14 + $0x30] sm:$0xff]
  %v2864 = vld [vmem:[%s14 + $0x38] sm:$0xff]
  %v2866 = vsel %vm1493, %v2853, 0
  %v2869 = vsel %vm1493, %v2854, 0
  %v2872 = vsel %vm1493, %v2855, 0
  %v2875 = vsel %vm1493, %v2856, 0
  %2877 = vmatprep.subr.mxu0 0.0
  %2878 = vmatpush1.msra.mxu0 %v2861
  %2879 = vmatprep.subr.mxu0 0.0
  %2880 = vmatpush1.msra.mxu0 %v2862
  %2881 = vmatprep.subr.mxu0 0.0
  %2882 = vmatpush1.msra.mxu0 %v2863
  %2883 = vmatprep.subr.mxu0 0.0
  %2884 = vmatpush1.msra.mxu0 %v2864
  %2885 = vmatprep.subr.mxu0 0.0
  %2886 = vmatpush1.msra.mxu0 0.0
  %2887 = vmatprep.subr.mxu0 0.0
  %2888 = vmatpush1.msra.mxu0 0.0
  %2889 = vmatprep.subr.mxu0 0.0
  %2890 = vmatpush1.msra.mxu0 0.0
  %2891 = vmatprep.subr.mxu0 0.0
  %2892 = vmatpush1.msra.mxu0 0.0
  %2893 = vmatprep.subr.mxu0 0.0
  %2894 = vmatpush1.msra.mxu0 0.0
  %2895 = vmatprep.subr.mxu0 0.0
  %2896 = vmatpush1.msra.mxu0 0.0
  %2897 = vmatprep.subr.mxu0 0.0
  %2898 = vmatpush1.msra.mxu0 0.0
  %2899 = vmatprep.subr.mxu0 0.0
  %2900 = vmatpush1.msra.mxu0 0.0
  %2901 = vmatprep.subr.mxu0 0.0
  %2902 = vmatpush1.msra.mxu0 0.0
  %2903 = vmatprep.subr.mxu0 0.0
  %2904 = vmatpush1.msra.mxu0 0.0
  %2905 = vmatprep.subr.mxu0 0.0
  %2906 = vmatpush1.msra.mxu0 0.0
  %2907 = vmatprep.subr.mxu0 0.0
  %2908 = vmatpush1.msra.mxu0 0.0
  %2909 = vmatprep.subr.mxu0 0.0
  %2910 = vmatpush1.msra.mxu0 0.0
  %2911 = vmatprep.subr.mxu0 0.0
  %2912 = vmatpush1.msra.mxu0 0.0
  %2913 = vmatprep.subr.mxu0 0.0
  %2914 = vmatpush1.msra.mxu0 0.0
  %2915 = vmatprep.subr.mxu0 0.0
  %2916 = vmatpush1.msra.mxu0 0.0
  %2917 = vmatprep.subr.mxu0 0.0
  %2918 = vmatpush1.msra.mxu0 0.0
  %2919 = vmatprep.subr.mxu0 0.0
  %2920 = vmatpush1.msra.mxu0 0.0
  %2921 = vmatprep.subr.mxu0 0.0
  %2922 = vmatpush1.msra.mxu0 0.0
  %2923 = vmatprep.subr.mxu0 0.0
  %2924 = vmatpush1.msra.mxu0 0.0
  %2925 = vmatprep.subr.mxu0 0.0
  %2926 = vmatpush1.msra.mxu0 0.0
  %2927 = vmatprep.subr.mxu0 0.0
  %2928 = vmatpush1.msra.mxu0 0.0
  %2929 = vmatprep.subr.mxu0 0.0
  %2930 = vmatpush1.msra.mxu0 0.0
  %2931 = vmatprep.subr.mxu0 0.0
  %2932 = vmatpush1.msra.mxu0 0.0
  %2933 = vmatprep.subr.mxu0 0.0
  %2934 = vmatpush1.msra.mxu0 0.0
  %2935 = vmatprep.subr.mxu0 0.0
  %2936 = vmatpush1.msra.mxu0 0.0
  %2937 = vmatprep.subr.mxu0 0.0
  %2938 = vmatpush1.msra.mxu0 0.0
  %2939 = vmatprep.subr.mxu0 0.0
  %2940 = vmatpush1.msra.mxu0 0.0
  %2941 = vmatprep.mubr.f32.mxu0 0.0
  %2942 = vmatmul.mubr.f32.gmra.mrb[0].mxu0 %v2866
  %v2943 = vpop.f32.mrb[0].mxu0
  %v2944 = vadd.f32 0.0, %v2943
  %v2945 = vpop.f32.mrb[0].mxu0
  %2946 = vmatprep.mubr.f32.mxu0 0.0
  %2947 = vmatmul.mubr.f32.gmra.mrb[0].mxu0 %v2869
  %v2948 = vpop.f32.mrb[0].mxu0
  %v2949 = vadd.f32 0.0, %v2948
  %v2950 = vpop.f32.mrb[0].mxu0
  %2951 = vmatprep.mubr.f32.mxu0 0.0
  %2952 = vmatmul.mubr.f32.gmra.mrb[0].mxu0 %v2872
  %v2953 = vpop.f32.mrb[0].mxu0
  %v2954 = vadd.f32 0.0, %v2953
  %v2955 = vpop.f32.mrb[0].mxu0
  %2956 = vmatprep.mubr.f32.mxu0 0.0
  %2957 = vmatmul.mubr.f32.gmra.mrb[0].mxu0 %v2875
  %v2958 = vpop.f32.mrb[0].mxu0
  %v2959 = vadd.f32 0.0, %v2958
  %v2960 = vpop.f32.mrb[0].mxu0
  %2961 = vdwg.mxu0
  %v2963 = vsel %vm1493, %v2752, 0
  %v2966 = vsel %vm1493, %v2753, 0
  %v2969 = vsel %vm1493, %v2754, 0
  %v2972 = vsel %vm1493, %v2755, 0
  %2974 = vmatprep.subr.mxu0 0.0
  %2975 = vmatpush1.msra.mxu0 %v2857
  %2976 = vmatprep.subr.mxu0 0.0
  %2977 = vmatpush1.msra.mxu0 %v2858
  %2978 = vmatprep.subr.mxu0 0.0
  %2979 = vmatpush1.msra.mxu0 %v2859
  %2980 = vmatprep.subr.mxu0 0.0
  %2981 = vmatpush1.msra.mxu0 %v2860
  %2982 = vmatprep.subr.mxu0 0.0
  %2983 = vmatpush1.msra.mxu0 0.0
  %2984 = vmatprep.subr.mxu0 0.0
  %2985 = vmatpush1.msra.mxu0 0.0
  %2986 = vmatprep.subr.mxu0 0.0
  %2987 = vmatpush1.msra.mxu0 0.0
  %2988 = vmatprep.subr.mxu0 0.0
  %2989 = vmatpush1.msra.mxu0 0.0
  %2990 = vmatprep.subr.mxu0 0.0
  %2991 = vmatpush1.msra.mxu0 0.0
  %2992 = vmatprep.subr.mxu0 0.0
  %2993 = vmatpush1.msra.mxu0 0.0
  %2994 = vmatprep.subr.mxu0 0.0
  %2995 = vmatpush1.msra.mxu0 0.0
  %2996 = vmatprep.subr.mxu0 0.0
  %2997 = vmatpush1.msra.mxu0 0.0
  %2998 = vmatprep.subr.mxu0 0.0
  %2999 = vmatpush1.msra.mxu0 0.0
  %3000 = vmatprep.subr.mxu0 0.0
  %3001 = vmatpush1.msra.mxu0 0.0
  %3002 = vmatprep.subr.mxu0 0.0
  %3003 = vmatpush1.msra.mxu0 0.0
  %3004 = vmatprep.subr.mxu0 0.0
  %3005 = vmatpush1.msra.mxu0 0.0
  %3006 = vmatprep.subr.mxu0 0.0
  %3007 = vmatpush1.msra.mxu0 0.0
  %3008 = vmatprep.subr.mxu0 0.0
  %3009 = vmatpush1.msra.mxu0 0.0
  %3010 = vmatprep.subr.mxu0 0.0
  %3011 = vmatpush1.msra.mxu0 0.0
  %3012 = vmatprep.subr.mxu0 0.0
  %3013 = vmatpush1.msra.mxu0 0.0
  %3014 = vmatprep.subr.mxu0 0.0
  %3015 = vmatpush1.msra.mxu0 0.0
  %3016 = vmatprep.subr.mxu0 0.0
  %3017 = vmatpush1.msra.mxu0 0.0
  %3018 = vmatprep.subr.mxu0 0.0
  %3019 = vmatpush1.msra.mxu0 0.0
  %3020 = vmatprep.subr.mxu0 0.0
  %3021 = vmatpush1.msra.mxu0 0.0
  %3022 = vmatprep.subr.mxu0 0.0
  %3023 = vmatpush1.msra.mxu0 0.0
  %3024 = vmatprep.subr.mxu0 0.0
  %3025 = vmatpush1.msra.mxu0 0.0
  %3026 = vmatprep.subr.mxu0 0.0
  %3027 = vmatpush1.msra.mxu0 0.0
  %3028 = vmatprep.subr.mxu0 0.0
  %3029 = vmatpush1.msra.mxu0 0.0
  %3030 = vmatprep.subr.mxu0 0.0
  %3031 = vmatpush1.msra.mxu0 0.0
  %3032 = vmatprep.subr.mxu0 0.0
  %3033 = vmatpush1.msra.mxu0 0.0
  %3034 = vmatprep.subr.mxu0 0.0
  %3035 = vmatpush1.msra.mxu0 0.0
  %3036 = vmatprep.subr.mxu0 0.0
  %3037 = vmatpush1.msra.mxu0 0.0
  %3038 = vmatprep.mubr.f32.mxu0 0.0
  %3039 = vmatmul.mubr.f32.gmra.mrb[0].mxu0 %v2963
  %v3040 = vpop.f32.mrb[0].mxu0
  %v3041 = vadd.f32 %v2944, %v3040
  %v3042 = vpop.f32.mrb[0].mxu0
  %3043 = vmatprep.mubr.f32.mxu0 0.0
  %3044 = vmatmul.mubr.f32.gmra.mrb[0].mxu0 %v2966
  %v3045 = vpop.f32.mrb[0].mxu0
  %v3046 = vadd.f32 %v2949, %v3045
  %v3047 = vpop.f32.mrb[0].mxu0
  %3048 = vmatprep.mubr.f32.mxu0 0.0
  %3049 = vmatmul.mubr.f32.gmra.mrb[0].mxu0 %v2969
  %v3050 = vpop.f32.mrb[0].mxu0
  %v3051 = vadd.f32 %v2954, %v3050
  %v3052 = vpop.f32.mrb[0].mxu0
  %3053 = vmatprep.mubr.f32.mxu0 0.0
  %3054 = vmatmul.mubr.f32.gmra.mrb[0].mxu0 %v2972
  %v3055 = vpop.f32.mrb[0].mxu0
  %v3056 = vadd.f32 %v2959, %v3055
  %v3057 = vpop.f32.mrb[0].mxu0
  %3058 = vdwg.mxu0
  %v3059 = vld [vmem:[%s15] sm:$0x1]
  %v3060 = vlaneseq
  %v3061 = vshrl.u32 %v3060, 7
  %v3062 = vsub.s32 0, %v3061
  %v3063 = vrot.slane %v3059, %v3062
  %v3064 = vadd.f32 %v3041, %v3063
  %v3065 = vadd.f32 %v3046, %v3063
  %v3066 = vadd.f32 %v3051, %v3063
  %v3067 = vadd.f32 %v3056, %v3063
  %v3068 = vtanh.pop %v3064
  %v3069 = vtanh.pop %v3065
  %v3070 = vtanh.pop %v3066
  %v3071 = vtanh.pop %v3067
  %v3073 = vsel %vm1493, %v3068, 0
  %v3076 = vsel %vm1493, %v3069, 0
  %v3079 = vsel %vm1493, %v3070, 0
  %v3082 = vsel %vm1493, %v3071, 0
  %3084 = vmatprep.subr.mxu0 %v2422
  %3085 = vmatpush1.msra.mxu0 %v2421
  %3086 = vmatprep.subr.mxu0 %v2424
  %3087 = vmatpush1.msra.mxu0 %v2423
  %3088 = vmatprep.subr.mxu0 %v2426
  %3089 = vmatpush1.msra.mxu0 %v2425
  %3090 = vmatprep.subr.mxu0 %v2428
  %3091 = vmatpush1.msra.mxu0 %v2427
  %3092 = vmatprep.subr.mxu0 0.0
  %3093 = vmatpush1.msra.mxu0 0.0
  %3094 = vmatprep.subr.mxu0 0.0
  %3095 = vmatpush1.msra.mxu0 0.0
  %3096 = vmatprep.subr.mxu0 0.0
  %3097 = vmatpush1.msra.mxu0 0.0
  %3098 = vmatprep.subr.mxu0 0.0
  %3099 = vmatpush1.msra.mxu0 0.0
  %3100 = vmatprep.subr.mxu0 0.0
  %3101 = vmatpush1.msra.mxu0 0.0
  %3102 = vmatprep.subr.mxu0 0.0
  %3103 = vmatpush1.msra.mxu0 0.0
  %3104 = vmatprep.subr.mxu0 0.0
  %3105 = vmatpush1.msra.mxu0 0.0
  %3106 = vmatprep.subr.mxu0 0.0
  %3107 = vmatpush1.msra.mxu0 0.0
  %3108 = vmatprep.subr.mxu0 0.0
  %3109 = vmatpush1.msra.mxu0 0.0
  %3110 = vmatprep.subr.mxu0 0.0
  %3111 = vmatpush1.msra.mxu0 0.0
  %3112 = vmatprep.subr.mxu0 0.0
  %3113 = vmatpush1.msra.mxu0 0.0
  %3114 = vmatprep.subr.mxu0 0.0
  %3115 = vmatpush1.msra.mxu0 0.0
  %3116 = vmatprep.subr.mxu0 0.0
  %3117 = vmatpush1.msra.mxu0 0.0
  %3118 = vmatprep.subr.mxu0 0.0
  %3119 = vmatpush1.msra.mxu0 0.0
  %3120 = vmatprep.subr.mxu0 0.0
  %3121 = vmatpush1.msra.mxu0 0.0
  %3122 = vmatprep.subr.mxu0 0.0
  %3123 = vmatpush1.msra.mxu0 0.0
  %3124 = vmatprep.subr.mxu0 0.0
  %3125 = vmatpush1.msra.mxu0 0.0
  %3126 = vmatprep.subr.mxu0 0.0
  %3127 = vmatpush1.msra.mxu0 0.0
  %3128 = vmatprep.subr.mxu0 0.0
  %3129 = vmatpush1.msra.mxu0 0.0
  %3130 = vmatprep.subr.mxu0 0.0
  %3131 = vmatpush1.msra.mxu0 0.0
  %3132 = vmatprep.subr.mxu0 0.0
  %3133 = vmatpush1.msra.mxu0 0.0
  %3134 = vmatprep.subr.mxu0 0.0
  %3135 = vmatpush1.msra.mxu0 0.0
  %3136 = vmatprep.subr.mxu0 0.0
  %3137 = vmatpush1.msra.mxu0 0.0
  %3138 = vmatprep.subr.mxu0 0.0
  %3139 = vmatpush1.msra.mxu0 0.0
  %3140 = vmatprep.subr.mxu0 0.0
  %3141 = vmatpush1.msra.mxu0 0.0
  %3142 = vmatprep.subr.mxu0 0.0
  %3143 = vmatpush1.msra.mxu0 0.0
  %3144 = vmatprep.subr.mxu0 0.0
  %3145 = vmatpush1.msra.mxu0 0.0
  %3146 = vmatprep.subr.mxu0 0.0
  %3147 = vmatpush1.msra.mxu0 0.0
  %3148 = vmatprep.mubr.f32.mxu0 0.0
  %3149 = vmatmul.mubr.f32.gmra.mrb[0].mxu0 %v3073
  %v3150 = vpop.f32.mrb[0].mxu0
  %v3151 = vadd.f32 0.0, %v3150
  %v3152 = vpop.f32.mrb[0].mxu0
  %v3153 = vadd.f32 0.0, %v3152
  %3154 = vmatprep.mubr.f32.mxu0 0.0
  %3155 = vmatmul.mubr.f32.gmra.mrb[0].mxu0 %v3076
  %v3156 = vpop.f32.mrb[0].mxu0
  %v3157 = vadd.f32 0.0, %v3156
  %v3158 = vpop.f32.mrb[0].mxu0
  %v3159 = vadd.f32 0.0, %v3158
  %3160 = vmatprep.mubr.f32.mxu0 0.0
  %3161 = vmatmul.mubr.f32.gmra.mrb[0].mxu0 %v3079
  %v3162 = vpop.f32.mrb[0].mxu0
  %v3163 = vadd.f32 0.0, %v3162
  %v3164 = vpop.f32.mrb[0].mxu0
  %v3165 = vadd.f32 0.0, %v3164
  %3166 = vmatprep.mubr.f32.mxu0 0.0
  %3167 = vmatmul.mubr.f32.gmra.mrb[0].mxu0 %v3082
  %v3168 = vpop.f32.mrb[0].mxu0
  %v3169 = vadd.f32 0.0, %v3168
  %v3170 = vpop.f32.mrb[0].mxu0
  %v3171 = vadd.f32 0.0, %v3170
  %3172 = vdwg.mxu0
  %v3173 = vadd.f32 %v2558, %v3151
  %v3174 = vadd.f32 %v2559, %v3153
  %v3175 = vadd.f32 %v2560, %v3157
  %v3176 = vadd.f32 %v2561, %v3159
  %v3177 = vadd.f32 %v2562, %v3163
  %v3178 = vadd.f32 %v2563, %v3165
  %v3179 = vadd.f32 %v2564, %v3169
  %v3180 = vadd.f32 %v2565, %v3171
  %s3181 = scalar_lea.vmem %s13, 32
  %v3182 = vld [vmem:[%s3181] sm:$0xff]
  %v3183 = vld [vmem:[%s3181 + $0x8] sm:$0xff]
  %v3184 = vld [vmem:[%s3181 + $0x10] sm:$0xff]
  %v3185 = vld [vmem:[%s3181 + $0x18] sm:$0xff]
  %3186 = vmatprep.subr.mxu0 0.0
  %3187 = vmatpush1.msra.mxu0 %v3182
  %3188 = vmatprep.subr.mxu0 0.0
  %3189 = vmatpush1.msra.mxu0 %v3183
  %3190 = vmatprep.subr.mxu0 0.0
  %3191 = vmatpush1.msra.mxu0 %v3184
  %3192 = vmatprep.subr.mxu0 0.0
  %3193 = vmatpush1.msra.mxu0 %v3185
  %3194 = vmatprep.subr.mxu0 0.0
  %3195 = vmatpush1.msra.mxu0 0.0
  %3196 = vmatprep.subr.mxu0 0.0
  %3197 = vmatpush1.msra.mxu0 0.0
  %3198 = vmatprep.subr.mxu0 0.0
  %3199 = vmatpush1.msra.mxu0 0.0
  %3200 = vmatprep.subr.mxu0 0.0
  %3201 = vmatpush1.msra.mxu0 0.0
  %3202 = vmatprep.subr.mxu0 0.0
  %3203 = vmatpush1.msra.mxu0 0.0
  %3204 = vmatprep.subr.mxu0 0.0
  %3205 = vmatpush1.msra.mxu0 0.0
  %3206 = vmatprep.subr.mxu0 0.0
  %3207 = vmatpush1.msra.mxu0 0.0
  %3208 = vmatprep.subr.mxu0 0.0
  %3209 = vmatpush1.msra.mxu0 0.0
  %3210 = vmatprep.subr.mxu0 0.0
  %3211 = vmatpush1.msra.mxu0 0.0
  %3212 = vmatprep.subr.mxu0 0.0
  %3213 = vmatpush1.msra.mxu0 0.0
  %3214 = vmatprep.subr.mxu0 0.0
  %3215 = vmatpush1.msra.mxu0 0.0
  %3216 = vmatprep.subr.mxu0 0.0
  %3217 = vmatpush1.msra.mxu0 0.0
  %3218 = vmatprep.subr.mxu0 0.0
  %3219 = vmatpush1.msra.mxu0 0.0
  %3220 = vmatprep.subr.mxu0 0.0
  %3221 = vmatpush1.msra.mxu0 0.0
  %3222 = vmatprep.subr.mxu0 0.0
  %3223 = vmatpush1.msra.mxu0 0.0
  %3224 = vmatprep.subr.mxu0 0.0
  %3225 = vmatpush1.msra.mxu0 0.0
  %3226 = vmatprep.subr.mxu0 0.0
  %3227 = vmatpush1.msra.mxu0 0.0
  %3228 = vmatprep.subr.mxu0 0.0
  %3229 = vmatpush1.msra.mxu0 0.0
  %3230 = vmatprep.subr.mxu0 0.0
  %3231 = vmatpush1.msra.mxu0 0.0
  %3232 = vmatprep.subr.mxu0 0.0
  %3233 = vmatpush1.msra.mxu0 0.0
  %3234 = vmatprep.subr.mxu0 0.0
  %3235 = vmatpush1.msra.mxu0 0.0
  %3236 = vmatprep.subr.mxu0 0.0
  %3237 = vmatpush1.msra.mxu0 0.0
  %3238 = vmatprep.subr.mxu0 0.0
  %3239 = vmatpush1.msra.mxu0 0.0
  %3240 = vmatprep.subr.mxu0 0.0
  %3241 = vmatpush1.msra.mxu0 0.0
  %3242 = vmatprep.subr.mxu0 0.0
  %3243 = vmatpush1.msra.mxu0 0.0
  %3244 = vmatprep.subr.mxu0 0.0
  %3245 = vmatpush1.msra.mxu0 0.0
  %3246 = vmatprep.subr.mxu0 0.0
  %3247 = vmatpush1.msra.mxu0 0.0
  %3248 = vmatprep.subr.mxu0 0.0
  %3249 = vmatpush1.msra.mxu0 0.0
  %3250 = vmatprep.mubr.f32.mxu0 0.0
  %3251 = vmatmul.mubr.f32.gmra.mrb[0].mxu0 %v3073
  %v3252 = vpop.f32.mrb[0].mxu0
  %v3253 = vadd.f32 0.0, %v3252
  %v3254 = vpop.f32.mrb[0].mxu0
  %3255 = vmatprep.mubr.f32.mxu0 0.0
  %3256 = vmatmul.mubr.f32.gmra.mrb[0].mxu0 %v3076
  %v3257 = vpop.f32.mrb[0].mxu0
  %v3258 = vadd.f32 0.0, %v3257
  %v3259 = vpop.f32.mrb[0].mxu0
  %3260 = vmatprep.mubr.f32.mxu0 0.0
  %3261 = vmatmul.mubr.f32.gmra.mrb[0].mxu0 %v3079
  %v3262 = vpop.f32.mrb[0].mxu0
  %v3263 = vadd.f32 0.0, %v3262
  %v3264 = vpop.f32.mrb[0].mxu0
  %3265 = vmatprep.mubr.f32.mxu0 0.0
  %3266 = vmatmul.mubr.f32.gmra.mrb[0].mxu0 %v3082
  %v3267 = vpop.f32.mrb[0].mxu0
  %v3268 = vadd.f32 0.0, %v3267
  %v3269 = vpop.f32.mrb[0].mxu0
  %3270 = vdwg.mxu0
  %3271 = vmatprep.subr.mxu0 0.0
  %3272 = vmatpush1.msra.mxu0 %v3253
  %3273 = vmatprep.subr.mxu0 0.0
  %3274 = vmatpush1.msra.mxu0 %v3258
  %3275 = vmatprep.subr.mxu0 0.0
  %3276 = vmatpush1.msra.mxu0 %v3263
  %3277 = vmatprep.subr.mxu0 0.0
  %3278 = vmatpush1.msra.mxu0 %v3268
  %3279 = vmatprep.subr.mxu0 0.0
  %3280 = vmatpush1.msra.mxu0 0.0
  %3281 = vmatprep.subr.mxu0 0.0
  %3282 = vmatpush1.msra.mxu0 0.0
  %3283 = vmatprep.subr.mxu0 0.0
  %3284 = vmatpush1.msra.mxu0 0.0
  %3285 = vmatprep.subr.mxu0 0.0
  %3286 = vmatpush1.msra.mxu0 0.0
  %3287 = vmatprep.subr.mxu0 0.0
  %3288 = vmatpush1.msra.mxu0 0.0
  %3289 = vmatprep.subr.mxu0 0.0
  %3290 = vmatpush1.msra.mxu0 0.0
  %3291 = vmatprep.subr.mxu0 0.0
  %3292 = vmatpush1.msra.mxu0 0.0
  %3293 = vmatprep.subr.mxu0 0.0
  %3294 = vmatpush1.msra.mxu0 0.0
  %3295 = vmatprep.subr.mxu0 0.0
  %3296 = vmatpush1.msra.mxu0 0.0
  %3297 = vmatprep.subr.mxu0 0.0
  %3298 = vmatpush1.msra.mxu0 0.0
  %3299 = vmatprep.subr.mxu0 0.0
  %3300 = vmatpush1.msra.mxu0 0.0
  %3301 = vmatprep.subr.mxu0 0.0
  %3302 = vmatpush1.msra.mxu0 0.0
  %3303 = vmatprep.subr.mxu0 0.0
  %3304 = vmatpush1.msra.mxu0 0.0
  %3305 = vmatprep.subr.mxu0 0.0
  %3306 = vmatpush1.msra.mxu0 0.0
  %3307 = vmatprep.subr.mxu0 0.0
  %3308 = vmatpush1.msra.mxu0 0.0
  %3309 = vmatprep.subr.mxu0 0.0
  %3310 = vmatpush1.msra.mxu0 0.0
  %3311 = vmatprep.subr.mxu0 0.0
  %3312 = vmatpush1.msra.mxu0 0.0
  %3313 = vmatprep.subr.mxu0 0.0
  %3314 = vmatpush1.msra.mxu0 0.0
  %3315 = vmatprep.subr.mxu0 0.0
  %3316 = vmatpush1.msra.mxu0 0.0
  %3317 = vmatprep.subr.mxu0 0.0
  %3318 = vmatpush1.msra.mxu0 0.0
  %3319 = vmatprep.subr.mxu0 0.0
  %3320 = vmatpush1.msra.mxu0 0.0
  %3321 = vmatprep.subr.mxu0 0.0
  %3322 = vmatpush1.msra.mxu0 0.0
  %3323 = vmatprep.subr.mxu0 0.0
  %3324 = vmatpush1.msra.mxu0 0.0
  %3325 = vmatprep.subr.mxu0 0.0
  %3326 = vmatpush1.msra.mxu0 0.0
  %3327 = vmatprep.subr.mxu0 0.0
  %3328 = vmatpush1.msra.mxu0 0.0
  %3329 = vmatprep.subr.mxu0 0.0
  %3330 = vmatpush1.msra.mxu0 0.0
  %3331 = vmatprep.subr.mxu0 0.0
  %3332 = vmatpush1.msra.mxu0 0.0
  %3333 = vmatprep.subr.mxu0 0.0
  %3334 = vmatpush1.msra.mxu0 0.0
  %3335 = vmatprep.mubr.f32.mxu0 0.0
  %3336 = vmatmul.mubr.f32.gmra.mrb[0].mxu0 %v2656
  %v3337 = vpop.f32.mrb[0].mxu0
  %v3338 = vadd.f32 0.0, %v3337
  %v3339 = vpop.f32.mrb[0].mxu0
  %3340 = vmatprep.mubr.f32.mxu0 0.0
  %3341 = vmatmul.mubr.f32.gmra.mrb[0].mxu0 %v2659
  %v3342 = vpop.f32.mrb[0].mxu0
  %v3343 = vadd.f32 0.0, %v3342
  %v3344 = vpop.f32.mrb[0].mxu0
  %3345 = vmatprep.mubr.f32.mxu0 0.0
  %3346 = vmatmul.mubr.f32.gmra.mrb[0].mxu0 %v2662
  %v3347 = vpop.f32.mrb[0].mxu0
  %v3348 = vadd.f32 0.0, %v3347
  %v3349 = vpop.f32.mrb[0].mxu0
  %3350 = vmatprep.mubr.f32.mxu0 0.0
  %3351 = vmatmul.mubr.f32.gmra.mrb[0].mxu0 %v2665
  %v3352 = vpop.f32.mrb[0].mxu0
  %v3353 = vadd.f32 0.0, %v3352
  %v3354 = vpop.f32.mrb[0].mxu0
  %3355 = vdwg.mxu0
  %v3356 = vtanh.pop %v3338
  %v3357 = vtanh.pop %v3343
  %v3358 = vtanh.pop %v3348
  %v3359 = vtanh.pop %v3353
  %3360 = vmatprep.subr.mxu0 0.0
  %3361 = vmatpush1.msra.mxu0 %v3356
  %3362 = vmatprep.subr.mxu0 0.0
  %3363 = vmatpush1.msra.mxu0 %v3357
  %3364 = vmatprep.subr.mxu0 0.0
  %3365 = vmatpush1.msra.mxu0 %v3358
  %3366 = vmatprep.subr.mxu0 0.0
  %3367 = vmatpush1.msra.mxu0 %v3359
  %3368 = vmatprep.subr.mxu0 0.0
  %3369 = vmatpush1.msra.mxu0 0.0
  %3370 = vmatprep.subr.mxu0 0.0
  %3371 = vmatpush1.msra.mxu0 0.0
  %3372 = vmatprep.subr.mxu0 0.0
  %3373 = vmatpush1.msra.mxu0 0.0
  %3374 = vmatprep.subr.mxu0 0.0
  %3375 = vmatpush1.msra.mxu0 0.0
  %3376 = vmatprep.subr.mxu0 0.0
  %3377 = vmatpush1.msra.mxu0 0.0
  %3378 = vmatprep.subr.mxu0 0.0
  %3379 = vmatpush1.msra.mxu0 0.0
  %3380 = vmatprep.subr.mxu0 0.0
  %3381 = vmatpush1.msra.mxu0 0.0
  %3382 = vmatprep.subr.mxu0 0.0
  %3383 = vmatpush1.msra.mxu0 0.0
  %3384 = vmatprep.subr.mxu0 0.0
  %3385 = vmatpush1.msra.mxu0 0.0
  %3386 = vmatprep.subr.mxu0 0.0
  %3387 = vmatpush1.msra.mxu0 0.0
  %3388 = vmatprep.subr.mxu0 0.0
  %3389 = vmatpush1.msra.mxu0 0.0
  %3390 = vmatprep.subr.mxu0 0.0
  %3391 = vmatpush1.msra.mxu0 0.0
  %3392 = vmatprep.subr.mxu0 0.0
  %3393 = vmatpush1.msra.mxu0 0.0
  %3394 = vmatprep.subr.mxu0 0.0
  %3395 = vmatpush1.msra.mxu0 0.0
  %3396 = vmatprep.subr.mxu0 0.0
  %3397 = vmatpush1.msra.mxu0 0.0
  %3398 = vmatprep.subr.mxu0 0.0
  %3399 = vmatpush1.msra.mxu0 0.0
  %3400 = vmatprep.subr.mxu0 0.0
  %3401 = vmatpush1.msra.mxu0 0.0
  %3402 = vmatprep.subr.mxu0 0.0
  %3403 = vmatpush1.msra.mxu0 0.0
  %3404 = vmatprep.subr.mxu0 0.0
  %3405 = vmatpush1.msra.mxu0 0.0
  %3406 = vmatprep.subr.mxu0 0.0
  %3407 = vmatpush1.msra.mxu0 0.0
  %3408 = vmatprep.subr.mxu0 0.0
  %3409 = vmatpush1.msra.mxu0 0.0
  %3410 = vmatprep.subr.mxu0 0.0
  %3411 = vmatpush1.msra.mxu0 0.0
  %3412 = vmatprep.subr.mxu0 0.0
  %3413 = vmatpush1.msra.mxu0 0.0
  %3414 = vmatprep.subr.mxu0 0.0
  %3415 = vmatpush1.msra.mxu0 0.0
  %3416 = vmatprep.subr.mxu0 0.0
  %3417 = vmatpush1.msra.mxu0 0.0
  %3418 = vmatprep.subr.mxu0 0.0
  %3419 = vmatpush1.msra.mxu0 0.0
  %3420 = vmatprep.subr.mxu0 0.0
  %3421 = vmatpush1.msra.mxu0 0.0
  %3422 = vmatprep.subr.mxu0 0.0
  %3423 = vmatpush1.msra.mxu0 0.0
  %3424 = vmatprep.mubr.f32.mxu0 0.0
  %3425 = vmatmul.mubr.f32.gmra.mrb[0].mxu0 %v2757
  %v3426 = vpop.f32.mrb[0].mxu0
  %v3427 = vadd.f32 0.0, %v3426
  %v3428 = vpop.f32.mrb[0].mxu0
  %3429 = vmatprep.mubr.f32.mxu0 0.0
  %3430 = vmatmul.mubr.f32.gmra.mrb[0].mxu0 %v2760
  %v3431 = vpop.f32.mrb[0].mxu0
  %v3432 = vadd.f32 0.0, %v3431
  %v3433 = vpop.f32.mrb[0].mxu0
  %3434 = vmatprep.mubr.f32.mxu0 0.0
  %3435 = vmatmul.mubr.f32.gmra.mrb[0].mxu0 %v2763
  %v3436 = vpop.f32.mrb[0].mxu0
  %v3437 = vadd.f32 0.0, %v3436
  %v3438 = vpop.f32.mrb[0].mxu0
  %3439 = vmatprep.mubr.f32.mxu0 0.0
  %3440 = vmatmul.mubr.f32.gmra.mrb[0].mxu0 %v2766
  %v3441 = vpop.f32.mrb[0].mxu0
  %v3442 = vadd.f32 0.0, %v3441
  %v3443 = vpop.f32.mrb[0].mxu0
  %3444 = vdwg.mxu0
  %v3445 = vtanh.pop %v3427
  %v3446 = vtanh.pop %v3432
  %v3447 = vtanh.pop %v3437
  %v3448 = vtanh.pop %v3442
  %s3449 = scalar_lea.vmem %s14, 64
  %v3450 = vld [vmem:[%s3449] sm:$0xff]
  %v3451 = vld [vmem:[%s3449 + $0x8] sm:$0xff]
  %v3452 = vld [vmem:[%s3449 + $0x10] sm:$0xff]
  %v3453 = vld [vmem:[%s3449 + $0x18] sm:$0xff]
  %v3454 = vld [vmem:[%s3449 + $0x20] sm:$0xff]
  %v3455 = vld [vmem:[%s3449 + $0x28] sm:$0xff]
  %v3456 = vld [vmem:[%s3449 + $0x30] sm:$0xff]
  %v3457 = vld [vmem:[%s3449 + $0x38] sm:$0xff]
  %v3459 = vsel %vm1493, %v3445, 0
  %v3462 = vsel %vm1493, %v3446, 0
  %v3465 = vsel %vm1493, %v3447, 0
  %v3468 = vsel %vm1493, %v3448, 0
  %3470 = vmatprep.subr.mxu0 0.0
  %3471 = vmatpush1.msra.mxu0 %v3454
  %3472 = vmatprep.subr.mxu0 0.0
  %3473 = vmatpush1.msra.mxu0 %v3455
  %3474 = vmatprep.subr.mxu0 0.0
  %3475 = vmatpush1.msra.mxu0 %v3456
  %3476 = vmatprep.subr.mxu0 0.0
  %3477 = vmatpush1.msra.mxu0 %v3457
  %3478 = vmatprep.subr.mxu0 0.0
  %3479 = vmatpush1.msra.mxu0 0.0
  %3480 = vmatprep.subr.mxu0 0.0
  %3481 = vmatpush1.msra.mxu0 0.0
  %3482 = vmatprep.subr.mxu0 0.0
  %3483 = vmatpush1.msra.mxu0 0.0
  %3484 = vmatprep.subr.mxu0 0.0
  %3485 = vmatpush1.msra.mxu0 0.0
  %3486 = vmatprep.subr.mxu0 0.0
  %3487 = vmatpush1.msra.mxu0 0.0
  %3488 = vmatprep.subr.mxu0 0.0
  %3489 = vmatpush1.msra.mxu0 0.0
  %3490 = vmatprep.subr.mxu0 0.0
  %3491 = vmatpush1.msra.mxu0 0.0
  %3492 = vmatprep.subr.mxu0 0.0
  %3493 = vmatpush1.msra.mxu0 0.0
  %3494 = vmatprep.subr.mxu0 0.0
  %3495 = vmatpush1.msra.mxu0 0.0
  %3496 = vmatprep.subr.mxu0 0.0
  %3497 = vmatpush1.msra.mxu0 0.0
  %3498 = vmatprep.subr.mxu0 0.0
  %3499 = vmatpush1.msra.mxu0 0.0
  %3500 = vmatprep.subr.mxu0 0.0
  %3501 = vmatpush1.msra.mxu0 0.0
  %3502 = vmatprep.subr.mxu0 0.0
  %3503 = vmatpush1.msra.mxu0 0.0
  %3504 = vmatprep.subr.mxu0 0.0
  %3505 = vmatpush1.msra.mxu0 0.0
  %3506 = vmatprep.subr.mxu0 0.0
  %3507 = vmatpush1.msra.mxu0 0.0
  %3508 = vmatprep.subr.mxu0 0.0
  %3509 = vmatpush1.msra.mxu0 0.0
  %3510 = vmatprep.subr.mxu0 0.0
  %3511 = vmatpush1.msra.mxu0 0.0
  %3512 = vmatprep.subr.mxu0 0.0
  %3513 = vmatpush1.msra.mxu0 0.0
  %3514 = vmatprep.subr.mxu0 0.0
  %3515 = vmatpush1.msra.mxu0 0.0
  %3516 = vmatprep.subr.mxu0 0.0
  %3517 = vmatpush1.msra.mxu0 0.0
  %3518 = vmatprep.subr.mxu0 0.0
  %3519 = vmatpush1.msra.mxu0 0.0
  %3520 = vmatprep.subr.mxu0 0.0
  %3521 = vmatpush1.msra.mxu0 0.0
  %3522 = vmatprep.subr.mxu0 0.0
  %3523 = vmatpush1.msra.mxu0 0.0
  %3524 = vmatprep.subr.mxu0 0.0
  %3525 = vmatpush1.msra.mxu0 0.0
  %3526 = vmatprep.subr.mxu0 0.0
  %3527 = vmatpush1.msra.mxu0 0.0
  %3528 = vmatprep.subr.mxu0 0.0
  %3529 = vmatpush1.msra.mxu0 0.0
  %3530 = vmatprep.subr.mxu0 0.0
  %3531 = vmatpush1.msra.mxu0 0.0
  %3532 = vmatprep.subr.mxu0 0.0
  %3533 = vmatpush1.msra.mxu0 0.0
  %3534 = vmatprep.mubr.f32.mxu0 0.0
  %3535 = vmatmul.mubr.f32.gmra.mrb[0].mxu0 %v3459
  %v3536 = vpop.f32.mrb[0].mxu0
  %v3537 = vadd.f32 0.0, %v3536
  %v3538 = vpop.f32.mrb[0].mxu0
  %3539 = vmatprep.mubr.f32.mxu0 0.0
  %3540 = vmatmul.mubr.f32.gmra.mrb[0].mxu0 %v3462
  %v3541 = vpop.f32.mrb[0].mxu0
  %v3542 = vadd.f32 0.0, %v3541
  %v3543 = vpop.f32.mrb[0].mxu0
  %3544 = vmatprep.mubr.f32.mxu0 0.0
  %3545 = vmatmul.mubr.f32.gmra.mrb[0].mxu0 %v3465
  %v3546 = vpop.f32.mrb[0].mxu0
  %v3547 = vadd.f32 0.0, %v3546
  %v3548 = vpop.f32.mrb[0].mxu0
  %3549 = vmatprep.mubr.f32.mxu0 0.0
  %3550 = vmatmul.mubr.f32.gmra.mrb[0].mxu0 %v3468
  %v3551 = vpop.f32.mrb[0].mxu0
  %v3552 = vadd.f32 0.0, %v3551
  %v3553 = vpop.f32.mrb[0].mxu0
  %3554 = vdwg.mxu0
  %v3556 = vsel %vm1493, %v3356, 0
  %v3559 = vsel %vm1493, %v3357, 0
  %v3562 = vsel %vm1493, %v3358, 0
  %v3565 = vsel %vm1493, %v3359, 0
  %3567 = vmatprep.subr.mxu0 0.0
  %3568 = vmatpush1.msra.mxu0 %v3450
  %3569 = vmatprep.subr.mxu0 0.0
  %3570 = vmatpush1.msra.mxu0 %v3451
  %3571 = vmatprep.subr.mxu0 0.0
  %3572 = vmatpush1.msra.mxu0 %v3452
  %3573 = vmatprep.subr.mxu0 0.0
  %3574 = vmatpush1.msra.mxu0 %v3453
  %3575 = vmatprep.subr.mxu0 0.0
  %3576 = vmatpush1.msra.mxu0 0.0
  %3577 = vmatprep.subr.mxu0 0.0
  %3578 = vmatpush1.msra.mxu0 0.0
  %3579 = vmatprep.subr.mxu0 0.0
  %3580 = vmatpush1.msra.mxu0 0.0
  %3581 = vmatprep.subr.mxu0 0.0
  %3582 = vmatpush1.msra.mxu0 0.0
  %3583 = vmatprep.subr.mxu0 0.0
  %3584 = vmatpush1.msra.mxu0 0.0
  %3585 = vmatprep.subr.mxu0 0.0
  %3586 = vmatpush1.msra.mxu0 0.0
  %3587 = vmatprep.subr.mxu0 0.0
  %3588 = vmatpush1.msra.mxu0 0.0
  %3589 = vmatprep.subr.mxu0 0.0
  %3590 = vmatpush1.msra.mxu0 0.0
  %3591 = vmatprep.subr.mxu0 0.0
  %3592 = vmatpush1.msra.mxu0 0.0
  %3593 = vmatprep.subr.mxu0 0.0
  %3594 = vmatpush1.msra.mxu0 0.0
  %3595 = vmatprep.subr.mxu0 0.0
  %3596 = vmatpush1.msra.mxu0 0.0
  %3597 = vmatprep.subr.mxu0 0.0
  %3598 = vmatpush1.msra.mxu0 0.0
  %3599 = vmatprep.subr.mxu0 0.0
  %3600 = vmatpush1.msra.mxu0 0.0
  %3601 = vmatprep.subr.mxu0 0.0
  %3602 = vmatpush1.msra.mxu0 0.0
  %3603 = vmatprep.subr.mxu0 0.0
  %3604 = vmatpush1.msra.mxu0 0.0
  %3605 = vmatprep.subr.mxu0 0.0
  %3606 = vmatpush1.msra.mxu0 0.0
  %3607 = vmatprep.subr.mxu0 0.0
  %3608 = vmatpush1.msra.mxu0 0.0
  %3609 = vmatprep.subr.mxu0 0.0
  %3610 = vmatpush1.msra.mxu0 0.0
  %3611 = vmatprep.subr.mxu0 0.0
  %3612 = vmatpush1.msra.mxu0 0.0
  %3613 = vmatprep.subr.mxu0 0.0
  %3614 = vmatpush1.msra.mxu0 0.0
  %3615 = vmatprep.subr.mxu0 0.0
  %3616 = vmatpush1.msra.mxu0 0.0
  %3617 = vmatprep.subr.mxu0 0.0
  %3618 = vmatpush1.msra.mxu0 0.0
  %3619 = vmatprep.subr.mxu0 0.0
  %3620 = vmatpush1.msra.mxu0 0.0
  %3621 = vmatprep.subr.mxu0 0.0
  %3622 = vmatpush1.msra.mxu0 0.0
  %3623 = vmatprep.subr.mxu0 0.0
  %3624 = vmatpush1.msra.mxu0 0.0
  %3625 = vmatprep.subr.mxu0 0.0
  %3626 = vmatpush1.msra.mxu0 0.0
  %3627 = vmatprep.subr.mxu0 0.0
  %3628 = vmatpush1.msra.mxu0 0.0
  %3629 = vmatprep.subr.mxu0 0.0
  %3630 = vmatpush1.msra.mxu0 0.0
  %3631 = vmatprep.mubr.f32.mxu0 0.0
  %3632 = vmatmul.mubr.f32.gmra.mrb[0].mxu0 %v3556
  %v3633 = vpop.f32.mrb[0].mxu0
  %v3634 = vadd.f32 %v3537, %v3633
  %v3635 = vpop.f32.mrb[0].mxu0
  %3636 = vmatprep.mubr.f32.mxu0 0.0
  %3637 = vmatmul.mubr.f32.gmra.mrb[0].mxu0 %v3559
  %v3638 = vpop.f32.mrb[0].mxu0
  %v3639 = vadd.f32 %v3542, %v3638
  %v3640 = vpop.f32.mrb[0].mxu0
  %3641 = vmatprep.mubr.f32.mxu0 0.0
  %3642 = vmatmul.mubr.f32.gmra.mrb[0].mxu0 %v3562
  %v3643 = vpop.f32.mrb[0].mxu0
  %v3644 = vadd.f32 %v3547, %v3643
  %v3645 = vpop.f32.mrb[0].mxu0
  %3646 = vmatprep.mubr.f32.mxu0 0.0
  %3647 = vmatmul.mubr.f32.gmra.mrb[0].mxu0 %v3565
  %v3648 = vpop.f32.mrb[0].mxu0
  %v3649 = vadd.f32 %v3552, %v3648
  %v3650 = vpop.f32.mrb[0].mxu0
  %3651 = vdwg.mxu0
  %v3652 = vld [vmem:[%s15 + $0x1] sm:$0x1]
  %v3653 = vlaneseq
  %v3654 = vshrl.u32 %v3653, 7
  %v3655 = vsub.s32 0, %v3654
  %v3656 = vrot.slane %v3652, %v3655
  %v3657 = vadd.f32 %v3634, %v3656
  %v3658 = vadd.f32 %v3639, %v3656
  %v3659 = vadd.f32 %v3644, %v3656
  %v3660 = vadd.f32 %v3649, %v3656
  %v3661 = vtanh.pop %v3657
  %v3662 = vtanh.pop %v3658
  %v3663 = vtanh.pop %v3659
  %v3664 = vtanh.pop %v3660
  %v3666 = vsel %vm1493, %v3661, 0
  %v3669 = vsel %vm1493, %v3662, 0
  %v3672 = vsel %vm1493, %v3663, 0
  %v3675 = vsel %vm1493, %v3664, 0
  %3677 = vmatprep.subr.mxu0 %v2430
  %3678 = vmatpush1.msra.mxu0 %v2429
  %3679 = vmatprep.subr.mxu0 %v2432
  %3680 = vmatpush1.msra.mxu0 %v2431
  %3681 = vmatprep.subr.mxu0 %v2434
  %3682 = vmatpush1.msra.mxu0 %v2433
  %3683 = vmatprep.subr.mxu0 %v2436
  %3684 = vmatpush1.msra.mxu0 %v2435
  %3685 = vmatprep.subr.mxu0 0.0
  %3686 = vmatpush1.msra.mxu0 0.0
  %3687 = vmatprep.subr.mxu0 0.0
  %3688 = vmatpush1.msra.mxu0 0.0
  %3689 = vmatprep.subr.mxu0 0.0
  %3690 = vmatpush1.msra.mxu0 0.0
  %3691 = vmatprep.subr.mxu0 0.0
  %3692 = vmatpush1.msra.mxu0 0.0
  %3693 = vmatprep.subr.mxu0 0.0
  %3694 = vmatpush1.msra.mxu0 0.0
  %3695 = vmatprep.subr.mxu0 0.0
  %3696 = vmatpush1.msra.mxu0 0.0
  %3697 = vmatprep.subr.mxu0 0.0
  %3698 = vmatpush1.msra.mxu0 0.0
  %3699 = vmatprep.subr.mxu0 0.0
  %3700 = vmatpush1.msra.mxu0 0.0
  %3701 = vmatprep.subr.mxu0 0.0
  %3702 = vmatpush1.msra.mxu0 0.0
  %3703 = vmatprep.subr.mxu0 0.0
  %3704 = vmatpush1.msra.mxu0 0.0
  %3705 = vmatprep.subr.mxu0 0.0
  %3706 = vmatpush1.msra.mxu0 0.0
  %3707 = vmatprep.subr.mxu0 0.0
  %3708 = vmatpush1.msra.mxu0 0.0
  %3709 = vmatprep.subr.mxu0 0.0
  %3710 = vmatpush1.msra.mxu0 0.0
  %3711 = vmatprep.subr.mxu0 0.0
  %3712 = vmatpush1.msra.mxu0 0.0
  %3713 = vmatprep.subr.mxu0 0.0
  %3714 = vmatpush1.msra.mxu0 0.0
  %3715 = vmatprep.subr.mxu0 0.0
  %3716 = vmatpush1.msra.mxu0 0.0
  %3717 = vmatprep.subr.mxu0 0.0
  %3718 = vmatpush1.msra.mxu0 0.0
  %3719 = vmatprep.subr.mxu0 0.0
  %3720 = vmatpush1.msra.mxu0 0.0
  %3721 = vmatprep.subr.mxu0 0.0
  %3722 = vmatpush1.msra.mxu0 0.0
  %3723 = vmatprep.subr.mxu0 0.0
  %3724 = vmatpush1.msra.mxu0 0.0
  %3725 = vmatprep.subr.mxu0 0.0
  %3726 = vmatpush1.msra.mxu0 0.0
  %3727 = vmatprep.subr.mxu0 0.0
  %3728 = vmatpush1.msra.mxu0 0.0
  %3729 = vmatprep.subr.mxu0 0.0
  %3730 = vmatpush1.msra.mxu0 0.0
  %3731 = vmatprep.subr.mxu0 0.0
  %3732 = vmatpush1.msra.mxu0 0.0
  %3733 = vmatprep.subr.mxu0 0.0
  %3734 = vmatpush1.msra.mxu0 0.0
  %3735 = vmatprep.subr.mxu0 0.0
  %3736 = vmatpush1.msra.mxu0 0.0
  %3737 = vmatprep.subr.mxu0 0.0
  %3738 = vmatpush1.msra.mxu0 0.0
  %3739 = vmatprep.subr.mxu0 0.0
  %3740 = vmatpush1.msra.mxu0 0.0
  %3741 = vmatprep.mubr.f32.mxu0 0.0
  %3742 = vmatmul.mubr.f32.gmra.mrb[0].mxu0 %v3666
  %v3743 = vpop.f32.mrb[0].mxu0
  %v3744 = vadd.f32 0.0, %v3743
  %v3745 = vpop.f32.mrb[0].mxu0
  %v3746 = vadd.f32 0.0, %v3745
  %3747 = vmatprep.mubr.f32.mxu0 0.0
  %3748 = vmatmul.mubr.f32.gmra.mrb[0].mxu0 %v3669
  %v3749 = vpop.f32.mrb[0].mxu0
  %v3750 = vadd.f32 0.0, %v3749
  %v3751 = vpop.f32.mrb[0].mxu0
  %v3752 = vadd.f32 0.0, %v3751
  %3753 = vmatprep.mubr.f32.mxu0 0.0
  %3754 = vmatmul.mubr.f32.gmra.mrb[0].mxu0 %v3672
  %v3755 = vpop.f32.mrb[0].mxu0
  %v3756 = vadd.f32 0.0, %v3755
  %v3757 = vpop.f32.mrb[0].mxu0
  %v3758 = vadd.f32 0.0, %v3757
  %3759 = vmatprep.mubr.f32.mxu0 0.0
  %3760 = vmatmul.mubr.f32.gmra.mrb[0].mxu0 %v3675
  %v3761 = vpop.f32.mrb[0].mxu0
  %v3762 = vadd.f32 0.0, %v3761
  %v3763 = vpop.f32.mrb[0].mxu0
  %v3764 = vadd.f32 0.0, %v3763
  %3765 = vdwg.mxu0
  %v3766 = vadd.f32 %v3173, %v3744
  %v3767 = vadd.f32 %v3174, %v3746
  %v3768 = vadd.f32 %v3175, %v3750
  %v3769 = vadd.f32 %v3176, %v3752
  %v3770 = vadd.f32 %v3177, %v3756
  %v3771 = vadd.f32 %v3178, %v3758
  %v3772 = vadd.f32 %v3179, %v3762
  %v3773 = vadd.f32 %v3180, %v3764
  %s3774 = scalar_lea.vmem %s13, 64
  %v3775 = vld [vmem:[%s3774] sm:$0xff]
  %v3776 = vld [vmem:[%s3774 + $0x8] sm:$0xff]
  %v3777 = vld [vmem:[%s3774 + $0x10] sm:$0xff]
  %v3778 = vld [vmem:[%s3774 + $0x18] sm:$0xff]
  %3779 = vmatprep.subr.mxu0 0.0
  %3780 = vmatpush1.msra.mxu0 %v3775
  %3781 = vmatprep.subr.mxu0 0.0
  %3782 = vmatpush1.msra.mxu0 %v3776
  %3783 = vmatprep.subr.mxu0 0.0
  %3784 = vmatpush1.msra.mxu0 %v3777
  %3785 = vmatprep.subr.mxu0 0.0
  %3786 = vmatpush1.msra.mxu0 %v3778
  %3787 = vmatprep.subr.mxu0 0.0
  %3788 = vmatpush1.msra.mxu0 0.0
  %3789 = vmatprep.subr.mxu0 0.0
  %3790 = vmatpush1.msra.mxu0 0.0
  %3791 = vmatprep.subr.mxu0 0.0
  %3792 = vmatpush1.msra.mxu0 0.0
  %3793 = vmatprep.subr.mxu0 0.0
  %3794 = vmatpush1.msra.mxu0 0.0
  %3795 = vmatprep.subr.mxu0 0.0
  %3796 = vmatpush1.msra.mxu0 0.0
  %3797 = vmatprep.subr.mxu0 0.0
  %3798 = vmatpush1.msra.mxu0 0.0
  %3799 = vmatprep.subr.mxu0 0.0
  %3800 = vmatpush1.msra.mxu0 0.0
  %3801 = vmatprep.subr.mxu0 0.0
  %3802 = vmatpush1.msra.mxu0 0.0
  %3803 = vmatprep.subr.mxu0 0.0
  %3804 = vmatpush1.msra.mxu0 0.0
  %3805 = vmatprep.subr.mxu0 0.0
  %3806 = vmatpush1.msra.mxu0 0.0
  %3807 = vmatprep.subr.mxu0 0.0
  %3808 = vmatpush1.msra.mxu0 0.0
  %3809 = vmatprep.subr.mxu0 0.0
  %3810 = vmatpush1.msra.mxu0 0.0
  %3811 = vmatprep.subr.mxu0 0.0
  %3812 = vmatpush1.msra.mxu0 0.0
  %3813 = vmatprep.subr.mxu0 0.0
  %3814 = vmatpush1.msra.mxu0 0.0
  %3815 = vmatprep.subr.mxu0 0.0
  %3816 = vmatpush1.msra.mxu0 0.0
  %3817 = vmatprep.subr.mxu0 0.0
  %3818 = vmatpush1.msra.mxu0 0.0
  %3819 = vmatprep.subr.mxu0 0.0
  %3820 = vmatpush1.msra.mxu0 0.0
  %3821 = vmatprep.subr.mxu0 0.0
  %3822 = vmatpush1.msra.mxu0 0.0
  %3823 = vmatprep.subr.mxu0 0.0
  %3824 = vmatpush1.msra.mxu0 0.0
  %3825 = vmatprep.subr.mxu0 0.0
  %3826 = vmatpush1.msra.mxu0 0.0
  %3827 = vmatprep.subr.mxu0 0.0
  %3828 = vmatpush1.msra.mxu0 0.0
  %3829 = vmatprep.subr.mxu0 0.0
  %3830 = vmatpush1.msra.mxu0 0.0
  %3831 = vmatprep.subr.mxu0 0.0
  %3832 = vmatpush1.msra.mxu0 0.0
  %3833 = vmatprep.subr.mxu0 0.0
  %3834 = vmatpush1.msra.mxu0 0.0
  %3835 = vmatprep.subr.mxu0 0.0
  %3836 = vmatpush1.msra.mxu0 0.0
  %3837 = vmatprep.subr.mxu0 0.0
  %3838 = vmatpush1.msra.mxu0 0.0
  %3839 = vmatprep.subr.mxu0 0.0
  %3840 = vmatpush1.msra.mxu0 0.0
  %3841 = vmatprep.subr.mxu0 0.0
  %3842 = vmatpush1.msra.mxu0 0.0
  %3843 = vmatprep.mubr.f32.mxu0 0.0
  %3844 = vmatmul.mubr.f32.gmra.mrb[0].mxu0 %v3666
  %v3845 = vpop.f32.mrb[0].mxu0
  %v3846 = vadd.f32 0.0, %v3845
  %v3847 = vpop.f32.mrb[0].mxu0
  %3848 = vmatprep.mubr.f32.mxu0 0.0
  %3849 = vmatmul.mubr.f32.gmra.mrb[0].mxu0 %v3669
  %v3850 = vpop.f32.mrb[0].mxu0
  %v3851 = vadd.f32 0.0, %v3850
  %v3852 = vpop.f32.mrb[0].mxu0
  %3853 = vmatprep.mubr.f32.mxu0 0.0
  %3854 = vmatmul.mubr.f32.gmra.mrb[0].mxu0 %v3672
  %v3855 = vpop.f32.mrb[0].mxu0
  %v3856 = vadd.f32 0.0, %v3855
  %v3857 = vpop.f32.mrb[0].mxu0
  %3858 = vmatprep.mubr.f32.mxu0 0.0
  %3859 = vmatmul.mubr.f32.gmra.mrb[0].mxu0 %v3675
  %v3860 = vpop.f32.mrb[0].mxu0
  %v3861 = vadd.f32 0.0, %v3860
  %v3862 = vpop.f32.mrb[0].mxu0
  %3863 = vdwg.mxu0
  %3864 = vmatprep.subr.mxu0 0.0
  %3865 = vmatpush1.msra.mxu0 %v3846
  %3866 = vmatprep.subr.mxu0 0.0
  %3867 = vmatpush1.msra.mxu0 %v3851
  %3868 = vmatprep.subr.mxu0 0.0
  %3869 = vmatpush1.msra.mxu0 %v3856
  %3870 = vmatprep.subr.mxu0 0.0
  %3871 = vmatpush1.msra.mxu0 %v3861
  %3872 = vmatprep.subr.mxu0 0.0
  %3873 = vmatpush1.msra.mxu0 0.0
  %3874 = vmatprep.subr.mxu0 0.0
  %3875 = vmatpush1.msra.mxu0 0.0
  %3876 = vmatprep.subr.mxu0 0.0
  %3877 = vmatpush1.msra.mxu0 0.0
  %3878 = vmatprep.subr.mxu0 0.0
  %3879 = vmatpush1.msra.mxu0 0.0
  %3880 = vmatprep.subr.mxu0 0.0
  %3881 = vmatpush1.msra.mxu0 0.0
  %3882 = vmatprep.subr.mxu0 0.0
  %3883 = vmatpush1.msra.mxu0 0.0
  %3884 = vmatprep.subr.mxu0 0.0
  %3885 = vmatpush1.msra.mxu0 0.0
  %3886 = vmatprep.subr.mxu0 0.0
  %3887 = vmatpush1.msra.mxu0 0.0
  %3888 = vmatprep.subr.mxu0 0.0
  %3889 = vmatpush1.msra.mxu0 0.0
  %3890 = vmatprep.subr.mxu0 0.0
  %3891 = vmatpush1.msra.mxu0 0.0
  %3892 = vmatprep.subr.mxu0 0.0
  %3893 = vmatpush1.msra.mxu0 0.0
  %3894 = vmatprep.subr.mxu0 0.0
  %3895 = vmatpush1.msra.mxu0 0.0
  %3896 = vmatprep.subr.mxu0 0.0
  %3897 = vmatpush1.msra.mxu0 0.0
  %3898 = vmatprep.subr.mxu0 0.0
  %3899 = vmatpush1.msra.mxu0 0.0
  %3900 = vmatprep.subr.mxu0 0.0
  %3901 = vmatpush1.msra.mxu0 0.0
  %3902 = vmatprep.subr.mxu0 0.0
  %3903 = vmatpush1.msra.mxu0 0.0
  %3904 = vmatprep.subr.mxu0 0.0
  %3905 = vmatpush1.msra.mxu0 0.0
  %3906 = vmatprep.subr.mxu0 0.0
  %3907 = vmatpush1.msra.mxu0 0.0
  %3908 = vmatprep.subr.mxu0 0.0
  %3909 = vmatpush1.msra.mxu0 0.0
  %3910 = vmatprep.subr.mxu0 0.0
  %3911 = vmatpush1.msra.mxu0 0.0
  %3912 = vmatprep.subr.mxu0 0.0
  %3913 = vmatpush1.msra.mxu0 0.0
  %3914 = vmatprep.subr.mxu0 0.0
  %3915 = vmatpush1.msra.mxu0 0.0
  %3916 = vmatprep.subr.mxu0 0.0
  %3917 = vmatpush1.msra.mxu0 0.0
  %3918 = vmatprep.subr.mxu0 0.0
  %3919 = vmatpush1.msra.mxu0 0.0
  %3920 = vmatprep.subr.mxu0 0.0
  %3921 = vmatpush1.msra.mxu0 0.0
  %3922 = vmatprep.subr.mxu0 0.0
  %3923 = vmatpush1.msra.mxu0 0.0
  %3924 = vmatprep.subr.mxu0 0.0
  %3925 = vmatpush1.msra.mxu0 0.0
  %3926 = vmatprep.subr.mxu0 0.0
  %3927 = vmatpush1.msra.mxu0 0.0
  %3928 = vmatprep.mubr.f32.mxu0 0.0
  %3929 = vmatmul.mubr.f32.gmra.mrb[0].mxu0 %v2656
  %v3930 = vpop.f32.mrb[0].mxu0
  %v3931 = vadd.f32 0.0, %v3930
  %v3932 = vpop.f32.mrb[0].mxu0
  %3933 = vmatprep.mubr.f32.mxu0 0.0
  %3934 = vmatmul.mubr.f32.gmra.mrb[0].mxu0 %v2659
  %v3935 = vpop.f32.mrb[0].mxu0
  %v3936 = vadd.f32 0.0, %v3935
  %v3937 = vpop.f32.mrb[0].mxu0
  %3938 = vmatprep.mubr.f32.mxu0 0.0
  %3939 = vmatmul.mubr.f32.gmra.mrb[0].mxu0 %v2662
  %v3940 = vpop.f32.mrb[0].mxu0
  %v3941 = vadd.f32 0.0, %v3940
  %v3942 = vpop.f32.mrb[0].mxu0
  %3943 = vmatprep.mubr.f32.mxu0 0.0
  %3944 = vmatmul.mubr.f32.gmra.mrb[0].mxu0 %v2665
  %v3945 = vpop.f32.mrb[0].mxu0
  %v3946 = vadd.f32 0.0, %v3945
  %v3947 = vpop.f32.mrb[0].mxu0
  %3948 = vdwg.mxu0
  %v3949 = vtanh.pop %v3931
  %v3950 = vtanh.pop %v3936
  %v3951 = vtanh.pop %v3941
  %v3952 = vtanh.pop %v3946
  %3953 = vmatprep.subr.mxu0 0.0
  %3954 = vmatpush1.msra.mxu0 %v3949
  %3955 = vmatprep.subr.mxu0 0.0
  %3956 = vmatpush1.msra.mxu0 %v3950
  %3957 = vmatprep.subr.mxu0 0.0
  %3958 = vmatpush1.msra.mxu0 %v3951
  %3959 = vmatprep.subr.mxu0 0.0
  %3960 = vmatpush1.msra.mxu0 %v3952
  %3961 = vmatprep.subr.mxu0 0.0
  %3962 = vmatpush1.msra.mxu0 0.0
  %3963 = vmatprep.subr.mxu0 0.0
  %3964 = vmatpush1.msra.mxu0 0.0
  %3965 = vmatprep.subr.mxu0 0.0
  %3966 = vmatpush1.msra.mxu0 0.0
  %3967 = vmatprep.subr.mxu0 0.0
  %3968 = vmatpush1.msra.mxu0 0.0
  %3969 = vmatprep.subr.mxu0 0.0
  %3970 = vmatpush1.msra.mxu0 0.0
  %3971 = vmatprep.subr.mxu0 0.0
  %3972 = vmatpush1.msra.mxu0 0.0
  %3973 = vmatprep.subr.mxu0 0.0
  %3974 = vmatpush1.msra.mxu0 0.0
  %3975 = vmatprep.subr.mxu0 0.0
  %3976 = vmatpush1.msra.mxu0 0.0
  %3977 = vmatprep.subr.mxu0 0.0
  %3978 = vmatpush1.msra.mxu0 0.0
  %3979 = vmatprep.subr.mxu0 0.0
  %3980 = vmatpush1.msra.mxu0 0.0
  %3981 = vmatprep.subr.mxu0 0.0
  %3982 = vmatpush1.msra.mxu0 0.0
  %3983 = vmatprep.subr.mxu0 0.0
  %3984 = vmatpush1.msra.mxu0 0.0
  %3985 = vmatprep.subr.mxu0 0.0
  %3986 = vmatpush1.msra.mxu0 0.0
  %3987 = vmatprep.subr.mxu0 0.0
  %3988 = vmatpush1.msra.mxu0 0.0
  %3989 = vmatprep.subr.mxu0 0.0
  %3990 = vmatpush1.msra.mxu0 0.0
  %3991 = vmatprep.subr.mxu0 0.0
  %3992 = vmatpush1.msra.mxu0 0.0
  %3993 = vmatprep.subr.mxu0 0.0
  %3994 = vmatpush1.msra.mxu0 0.0
  %3995 = vmatprep.subr.mxu0 0.0
  %3996 = vmatpush1.msra.mxu0 0.0
  %3997 = vmatprep.subr.mxu0 0.0
  %3998 = vmatpush1.msra.mxu0 0.0
  %3999 = vmatprep.subr.mxu0 0.0
  %4000 = vmatpush1.msra.mxu0 0.0
  %4001 = vmatprep.subr.mxu0 0.0
  %4002 = vmatpush1.msra.mxu0 0.0
  %4003 = vmatprep.subr.mxu0 0.0
  %4004 = vmatpush1.msra.mxu0 0.0
  %4005 = vmatprep.subr.mxu0 0.0
  %4006 = vmatpush1.msra.mxu0 0.0
  %4007 = vmatprep.subr.mxu0 0.0
  %4008 = vmatpush1.msra.mxu0 0.0
  %4009 = vmatprep.subr.mxu0 0.0
  %4010 = vmatpush1.msra.mxu0 0.0
  %4011 = vmatprep.subr.mxu0 0.0
  %4012 = vmatpush1.msra.mxu0 0.0
  %4013 = vmatprep.subr.mxu0 0.0
  %4014 = vmatpush1.msra.mxu0 0.0
  %4015 = vmatprep.subr.mxu0 0.0
  %4016 = vmatpush1.msra.mxu0 0.0
  %4017 = vmatprep.mubr.f32.mxu0 0.0
  %4018 = vmatmul.mubr.f32.gmra.mrb[0].mxu0 %v2757
  %v4019 = vpop.f32.mrb[0].mxu0
  %v4020 = vadd.f32 0.0, %v4019
  %v4021 = vpop.f32.mrb[0].mxu0
  %4022 = vmatprep.mubr.f32.mxu0 0.0
  %4023 = vmatmul.mubr.f32.gmra.mrb[0].mxu0 %v2760
  %v4024 = vpop.f32.mrb[0].mxu0
  %v4025 = vadd.f32 0.0, %v4024
  %v4026 = vpop.f32.mrb[0].mxu0
  %4027 = vmatprep.mubr.f32.mxu0 0.0
  %4028 = vmatmul.mubr.f32.gmra.mrb[0].mxu0 %v2763
  %v4029 = vpop.f32.mrb[0].mxu0
  %v4030 = vadd.f32 0.0, %v4029
  %v4031 = vpop.f32.mrb[0].mxu0
  %4032 = vmatprep.mubr.f32.mxu0 0.0
  %4033 = vmatmul.mubr.f32.gmra.mrb[0].mxu0 %v2766
  %v4034 = vpop.f32.mrb[0].mxu0
  %v4035 = vadd.f32 0.0, %v4034
  %v4036 = vpop.f32.mrb[0].mxu0
  %4037 = vdwg.mxu0
  %v4038 = vtanh.pop %v4020
  %v4039 = vtanh.pop %v4025
  %v4040 = vtanh.pop %v4030
  %v4041 = vtanh.pop %v4035
  %s4042 = scalar_lea.vmem %s14, 128
  %v4043 = vld [vmem:[%s4042] sm:$0xff]
  %v4044 = vld [vmem:[%s4042 + $0x8] sm:$0xff]
  %v4045 = vld [vmem:[%s4042 + $0x10] sm:$0xff]
  %v4046 = vld [vmem:[%s4042 + $0x18] sm:$0xff]
  %v4047 = vld [vmem:[%s4042 + $0x20] sm:$0xff]
  %v4048 = vld [vmem:[%s4042 + $0x28] sm:$0xff]
  %v4049 = vld [vmem:[%s4042 + $0x30] sm:$0xff]
  %v4050 = vld [vmem:[%s4042 + $0x38] sm:$0xff]
  %v4052 = vsel %vm1493, %v4038, 0
  %v4055 = vsel %vm1493, %v4039, 0
  %v4058 = vsel %vm1493, %v4040, 0
  %v4061 = vsel %vm1493, %v4041, 0
  %4063 = vmatprep.subr.mxu0 0.0
  %4064 = vmatpush1.msra.mxu0 %v4047
  %4065 = vmatprep.subr.mxu0 0.0
  %4066 = vmatpush1.msra.mxu0 %v4048
  %4067 = vmatprep.subr.mxu0 0.0
  %4068 = vmatpush1.msra.mxu0 %v4049
  %4069 = vmatprep.subr.mxu0 0.0
  %4070 = vmatpush1.msra.mxu0 %v4050
  %4071 = vmatprep.subr.mxu0 0.0
  %4072 = vmatpush1.msra.mxu0 0.0
  %4073 = vmatprep.subr.mxu0 0.0
  %4074 = vmatpush1.msra.mxu0 0.0
  %4075 = vmatprep.subr.mxu0 0.0
  %4076 = vmatpush1.msra.mxu0 0.0
  %4077 = vmatprep.subr.mxu0 0.0
  %4078 = vmatpush1.msra.mxu0 0.0
  %4079 = vmatprep.subr.mxu0 0.0
  %4080 = vmatpush1.msra.mxu0 0.0
  %4081 = vmatprep.subr.mxu0 0.0
  %4082 = vmatpush1.msra.mxu0 0.0
  %4083 = vmatprep.subr.mxu0 0.0
  %4084 = vmatpush1.msra.mxu0 0.0
  %4085 = vmatprep.subr.mxu0 0.0
  %4086 = vmatpush1.msra.mxu0 0.0
  %4087 = vmatprep.subr.mxu0 0.0
  %4088 = vmatpush1.msra.mxu0 0.0
  %4089 = vmatprep.subr.mxu0 0.0
  %4090 = vmatpush1.msra.mxu0 0.0
  %4091 = vmatprep.subr.mxu0 0.0
  %4092 = vmatpush1.msra.mxu0 0.0
  %4093 = vmatprep.subr.mxu0 0.0
  %4094 = vmatpush1.msra.mxu0 0.0
  %4095 = vmatprep.subr.mxu0 0.0
  %4096 = vmatpush1.msra.mxu0 0.0
  %4097 = vmatprep.subr.mxu0 0.0
  %4098 = vmatpush1.msra.mxu0 0.0
  %4099 = vmatprep.subr.mxu0 0.0
  %4100 = vmatpush1.msra.mxu0 0.0
  %4101 = vmatprep.subr.mxu0 0.0
  %4102 = vmatpush1.msra.mxu0 0.0
  %4103 = vmatprep.subr.mxu0 0.0
  %4104 = vmatpush1.msra.mxu0 0.0
  %4105 = vmatprep.subr.mxu0 0.0
  %4106 = vmatpush1.msra.mxu0 0.0
  %4107 = vmatprep.subr.mxu0 0.0
  %4108 = vmatpush1.msra.mxu0 0.0
  %4109 = vmatprep.subr.mxu0 0.0
  %4110 = vmatpush1.msra.mxu0 0.0
  %4111 = vmatprep.subr.mxu0 0.0
  %4112 = vmatpush1.msra.mxu0 0.0
  %4113 = vmatprep.subr.mxu0 0.0
  %4114 = vmatpush1.msra.mxu0 0.0
  %4115 = vmatprep.subr.mxu0 0.0
  %4116 = vmatpush1.msra.mxu0 0.0
  %4117 = vmatprep.subr.mxu0 0.0
  %4118 = vmatpush1.msra.mxu0 0.0
  %4119 = vmatprep.subr.mxu0 0.0
  %4120 = vmatpush1.msra.mxu0 0.0
  %4121 = vmatprep.subr.mxu0 0.0
  %4122 = vmatpush1.msra.mxu0 0.0
  %4123 = vmatprep.subr.mxu0 0.0
  %4124 = vmatpush1.msra.mxu0 0.0
  %4125 = vmatprep.subr.mxu0 0.0
  %4126 = vmatpush1.msra.mxu0 0.0
  %4127 = vmatprep.mubr.f32.mxu0 0.0
  %4128 = vmatmul.mubr.f32.gmra.mrb[0].mxu0 %v4052
  %v4129 = vpop.f32.mrb[0].mxu0
  %v4130 = vadd.f32 0.0, %v4129
  %v4131 = vpop.f32.mrb[0].mxu0
  %4132 = vmatprep.mubr.f32.mxu0 0.0
  %4133 = vmatmul.mubr.f32.gmra.mrb[0].mxu0 %v4055
  %v4134 = vpop.f32.mrb[0].mxu0
  %v4135 = vadd.f32 0.0, %v4134
  %v4136 = vpop.f32.mrb[0].mxu0
  %4137 = vmatprep.mubr.f32.mxu0 0.0
  %4138 = vmatmul.mubr.f32.gmra.mrb[0].mxu0 %v4058
  %v4139 = vpop.f32.mrb[0].mxu0
  %v4140 = vadd.f32 0.0, %v4139
  %v4141 = vpop.f32.mrb[0].mxu0
  %4142 = vmatprep.mubr.f32.mxu0 0.0
  %4143 = vmatmul.mubr.f32.gmra.mrb[0].mxu0 %v4061
  %v4144 = vpop.f32.mrb[0].mxu0
  %v4145 = vadd.f32 0.0, %v4144
  %v4146 = vpop.f32.mrb[0].mxu0
  %4147 = vdwg.mxu0
  %v4149 = vsel %vm1493, %v3949, 0
  %v4152 = vsel %vm1493, %v3950, 0
  %v4155 = vsel %vm1493, %v3951, 0
  %v4158 = vsel %vm1493, %v3952, 0
  %4160 = vmatprep.subr.mxu0 0.0
  %4161 = vmatpush1.msra.mxu0 %v4043
  %4162 = vmatprep.subr.mxu0 0.0
  %4163 = vmatpush1.msra.mxu0 %v4044
  %4164 = vmatprep.subr.mxu0 0.0
  %4165 = vmatpush1.msra.mxu0 %v4045
  %4166 = vmatprep.subr.mxu0 0.0
  %4167 = vmatpush1.msra.mxu0 %v4046
  %4168 = vmatprep.subr.mxu0 0.0
  %4169 = vmatpush1.msra.mxu0 0.0
  %4170 = vmatprep.subr.mxu0 0.0
  %4171 = vmatpush1.msra.mxu0 0.0
  %4172 = vmatprep.subr.mxu0 0.0
  %4173 = vmatpush1.msra.mxu0 0.0
  %4174 = vmatprep.subr.mxu0 0.0
  %4175 = vmatpush1.msra.mxu0 0.0
  %4176 = vmatprep.subr.mxu0 0.0
  %4177 = vmatpush1.msra.mxu0 0.0
  %4178 = vmatprep.subr.mxu0 0.0
  %4179 = vmatpush1.msra.mxu0 0.0
  %4180 = vmatprep.subr.mxu0 0.0
  %4181 = vmatpush1.msra.mxu0 0.0
  %4182 = vmatprep.subr.mxu0 0.0
  %4183 = vmatpush1.msra.mxu0 0.0
  %4184 = vmatprep.subr.mxu0 0.0
  %4185 = vmatpush1.msra.mxu0 0.0
  %4186 = vmatprep.subr.mxu0 0.0
  %4187 = vmatpush1.msra.mxu0 0.0
  %4188 = vmatprep.subr.mxu0 0.0
  %4189 = vmatpush1.msra.mxu0 0.0
  %4190 = vmatprep.subr.mxu0 0.0
  %4191 = vmatpush1.msra.mxu0 0.0
  %4192 = vmatprep.subr.mxu0 0.0
  %4193 = vmatpush1.msra.mxu0 0.0
  %4194 = vmatprep.subr.mxu0 0.0
  %4195 = vmatpush1.msra.mxu0 0.0
  %4196 = vmatprep.subr.mxu0 0.0
  %4197 = vmatpush1.msra.mxu0 0.0
  %4198 = vmatprep.subr.mxu0 0.0
  %4199 = vmatpush1.msra.mxu0 0.0
  %4200 = vmatprep.subr.mxu0 0.0
  %4201 = vmatpush1.msra.mxu0 0.0
  %4202 = vmatprep.subr.mxu0 0.0
  %4203 = vmatpush1.msra.mxu0 0.0
  %4204 = vmatprep.subr.mxu0 0.0
  %4205 = vmatpush1.msra.mxu0 0.0
  %4206 = vmatprep.subr.mxu0 0.0
  %4207 = vmatpush1.msra.mxu0 0.0
  %4208 = vmatprep.subr.mxu0 0.0
  %4209 = vmatpush1.msra.mxu0 0.0
  %4210 = vmatprep.subr.mxu0 0.0
  %4211 = vmatpush1.msra.mxu0 0.0
  %4212 = vmatprep.subr.mxu0 0.0
  %4213 = vmatpush1.msra.mxu0 0.0
  %4214 = vmatprep.subr.mxu0 0.0
  %4215 = vmatpush1.msra.mxu0 0.0
  %4216 = vmatprep.subr.mxu0 0.0
  %4217 = vmatpush1.msra.mxu0 0.0
  %4218 = vmatprep.subr.mxu0 0.0
  %4219 = vmatpush1.msra.mxu0 0.0
  %4220 = vmatprep.subr.mxu0 0.0
  %4221 = vmatpush1.msra.mxu0 0.0
  %4222 = vmatprep.subr.mxu0 0.0
  %4223 = vmatpush1.msra.mxu0 0.0
  %4224 = vmatprep.mubr.f32.mxu0 0.0
  %4225 = vmatmul.mubr.f32.gmra.mrb[0].mxu0 %v4149
  %v4226 = vpop.f32.mrb[0].mxu0
  %v4227 = vadd.f32 %v4130, %v4226
  %v4228 = vpop.f32.mrb[0].mxu0
  %4229 = vmatprep.mubr.f32.mxu0 0.0
  %4230 = vmatmul.mubr.f32.gmra.mrb[0].mxu0 %v4152
  %v4231 = vpop.f32.mrb[0].mxu0
  %v4232 = vadd.f32 %v4135, %v4231
  %v4233 = vpop.f32.mrb[0].mxu0
  %4234 = vmatprep.mubr.f32.mxu0 0.0
  %4235 = vmatmul.mubr.f32.gmra.mrb[0].mxu0 %v4155
  %v4236 = vpop.f32.mrb[0].mxu0
  %v4237 = vadd.f32 %v4140, %v4236
  %v4238 = vpop.f32.mrb[0].mxu0
  %4239 = vmatprep.mubr.f32.mxu0 0.0
  %4240 = vmatmul.mubr.f32.gmra.mrb[0].mxu0 %v4158
  %v4241 = vpop.f32.mrb[0].mxu0
  %v4242 = vadd.f32 %v4145, %v4241
  %v4243 = vpop.f32.mrb[0].mxu0
  %4244 = vdwg.mxu0
  %v4245 = vld [vmem:[%s15 + $0x2] sm:$0x1]
  %v4246 = vlaneseq
  %v4247 = vshrl.u32 %v4246, 7
  %v4248 = vsub.s32 0, %v4247
  %v4249 = vrot.slane %v4245, %v4248
  %v4250 = vadd.f32 %v4227, %v4249
  %v4251 = vadd.f32 %v4232, %v4249
  %v4252 = vadd.f32 %v4237, %v4249
  %v4253 = vadd.f32 %v4242, %v4249
  %v4254 = vtanh.pop %v4250
  %v4255 = vtanh.pop %v4251
  %v4256 = vtanh.pop %v4252
  %v4257 = vtanh.pop %v4253
  %v4259 = vsel %vm1493, %v4254, 0
  %v4262 = vsel %vm1493, %v4255, 0
  %v4265 = vsel %vm1493, %v4256, 0
  %v4268 = vsel %vm1493, %v4257, 0
  %4270 = vmatprep.subr.mxu0 %v2438
  %4271 = vmatpush1.msra.mxu0 %v2437
  %4272 = vmatprep.subr.mxu0 %v2440
  %4273 = vmatpush1.msra.mxu0 %v2439
  %4274 = vmatprep.subr.mxu0 %v2442
  %4275 = vmatpush1.msra.mxu0 %v2441
  %4276 = vmatprep.subr.mxu0 %v2444
  %4277 = vmatpush1.msra.mxu0 %v2443
  %4278 = vmatprep.subr.mxu0 0.0
  %4279 = vmatpush1.msra.mxu0 0.0
  %4280 = vmatprep.subr.mxu0 0.0
  %4281 = vmatpush1.msra.mxu0 0.0
  %4282 = vmatprep.subr.mxu0 0.0
  %4283 = vmatpush1.msra.mxu0 0.0
  %4284 = vmatprep.subr.mxu0 0.0
  %4285 = vmatpush1.msra.mxu0 0.0
  %4286 = vmatprep.subr.mxu0 0.0
  %4287 = vmatpush1.msra.mxu0 0.0
  %4288 = vmatprep.subr.mxu0 0.0
  %4289 = vmatpush1.msra.mxu0 0.0
  %4290 = vmatprep.subr.mxu0 0.0
  %4291 = vmatpush1.msra.mxu0 0.0
  %4292 = vmatprep.subr.mxu0 0.0
  %4293 = vmatpush1.msra.mxu0 0.0
  %4294 = vmatprep.subr.mxu0 0.0
  %4295 = vmatpush1.msra.mxu0 0.0
  %4296 = vmatprep.subr.mxu0 0.0
  %4297 = vmatpush1.msra.mxu0 0.0
  %4298 = vmatprep.subr.mxu0 0.0
  %4299 = vmatpush1.msra.mxu0 0.0
  %4300 = vmatprep.subr.mxu0 0.0
  %4301 = vmatpush1.msra.mxu0 0.0
  %4302 = vmatprep.subr.mxu0 0.0
  %4303 = vmatpush1.msra.mxu0 0.0
  %4304 = vmatprep.subr.mxu0 0.0
  %4305 = vmatpush1.msra.mxu0 0.0
  %4306 = vmatprep.subr.mxu0 0.0
  %4307 = vmatpush1.msra.mxu0 0.0
  %4308 = vmatprep.subr.mxu0 0.0
  %4309 = vmatpush1.msra.mxu0 0.0
  %4310 = vmatprep.subr.mxu0 0.0
  %4311 = vmatpush1.msra.mxu0 0.0
  %4312 = vmatprep.subr.mxu0 0.0
  %4313 = vmatpush1.msra.mxu0 0.0
  %4314 = vmatprep.subr.mxu0 0.0
  %4315 = vmatpush1.msra.mxu0 0.0
  %4316 = vmatprep.subr.mxu0 0.0
  %4317 = vmatpush1.msra.mxu0 0.0
  %4318 = vmatprep.subr.mxu0 0.0
  %4319 = vmatpush1.msra.mxu0 0.0
  %4320 = vmatprep.subr.mxu0 0.0
  %4321 = vmatpush1.msra.mxu0 0.0
  %4322 = vmatprep.subr.mxu0 0.0
  %4323 = vmatpush1.msra.mxu0 0.0
  %4324 = vmatprep.subr.mxu0 0.0
  %4325 = vmatpush1.msra.mxu0 0.0
  %4326 = vmatprep.subr.mxu0 0.0
  %4327 = vmatpush1.msra.mxu0 0.0
  %4328 = vmatprep.subr.mxu0 0.0
  %4329 = vmatpush1.msra.mxu0 0.0
  %4330 = vmatprep.subr.mxu0 0.0
  %4331 = vmatpush1.msra.mxu0 0.0
  %4332 = vmatprep.subr.mxu0 0.0
  %4333 = vmatpush1.msra.mxu0 0.0
  %4334 = vmatprep.mubr.f32.mxu0 0.0
  %4335 = vmatmul.mubr.f32.gmra.mrb[0].mxu0 %v4259
  %v4336 = vpop.f32.mrb[0].mxu0
  %v4337 = vadd.f32 0.0, %v4336
  %v4338 = vpop.f32.mrb[0].mxu0
  %v4339 = vadd.f32 0.0, %v4338
  %4340 = vmatprep.mubr.f32.mxu0 0.0
  %4341 = vmatmul.mubr.f32.gmra.mrb[0].mxu0 %v4262
  %v4342 = vpop.f32.mrb[0].mxu0
  %v4343 = vadd.f32 0.0, %v4342
  %v4344 = vpop.f32.mrb[0].mxu0
  %v4345 = vadd.f32 0.0, %v4344
  %4346 = vmatprep.mubr.f32.mxu0 0.0
  %4347 = vmatmul.mubr.f32.gmra.mrb[0].mxu0 %v4265
  %v4348 = vpop.f32.mrb[0].mxu0
  %v4349 = vadd.f32 0.0, %v4348
  %v4350 = vpop.f32.mrb[0].mxu0
  %v4351 = vadd.f32 0.0, %v4350
  %4352 = vmatprep.mubr.f32.mxu0 0.0
  %4353 = vmatmul.mubr.f32.gmra.mrb[0].mxu0 %v4268
  %v4354 = vpop.f32.mrb[0].mxu0
  %v4355 = vadd.f32 0.0, %v4354
  %v4356 = vpop.f32.mrb[0].mxu0
  %v4357 = vadd.f32 0.0, %v4356
  %4358 = vdwg.mxu0
  %v4359 = vadd.f32 %v3766, %v4337
  %v4360 = vadd.f32 %v3767, %v4339
  %v4361 = vadd.f32 %v3768, %v4343
  %v4362 = vadd.f32 %v3769, %v4345
  %v4363 = vadd.f32 %v3770, %v4349
  %v4364 = vadd.f32 %v3771, %v4351
  %v4365 = vadd.f32 %v3772, %v4355
  %v4366 = vadd.f32 %v3773, %v4357
  %v4367 = vtanh.pop %v4359
  %v4368 = vtanh.pop %v4360
  %v4369 = vtanh.pop %v4361
  %v4370 = vtanh.pop %v4362
  %v4371 = vtanh.pop %v4363
  %v4372 = vtanh.pop %v4364
  %v4373 = vtanh.pop %v4365
  %v4374 = vtanh.pop %v4366
  %v4375 = vld [vmem:[%s18] sm:$0xff]
  %v4376 = vld [vmem:[%s18 + $0x8] sm:$0xff]
  %v4377 = vld [vmem:[%s18 + $0x10] sm:$0xff]
  %v4378 = vld [vmem:[%s18 + $0x18] sm:$0xff]
  %v4379 = vld [vmem:[%s18 + $0x20] sm:$0xff]
  %v4380 = vld [vmem:[%s18 + $0x28] sm:$0xff]
  %v4381 = vld [vmem:[%s18 + $0x30] sm:$0xff]
  %v4382 = vld [vmem:[%s18 + $0x38] sm:$0xff]
  %v4383 = vld [vmem:[%s18 + $0x40] sm:$0xff]
  %v4384 = vld [vmem:[%s18 + $0x48] sm:$0xff]
  %v4385 = vld [vmem:[%s18 + $0x50] sm:$0xff]
  %v4386 = vld [vmem:[%s18 + $0x58] sm:$0xff]
  %v4387 = vld [vmem:[%s18 + $0x60] sm:$0xff]
  %v4388 = vld [vmem:[%s18 + $0x68] sm:$0xff]
  %v4389 = vld [vmem:[%s18 + $0x70] sm:$0xff]
  %v4390 = vld [vmem:[%s18 + $0x78] sm:$0xff]
  %v4391 = vld [vmem:[%s18 + $0x80] sm:$0xff]
  %v4392 = vld [vmem:[%s18 + $0x88] sm:$0xff]
  %v4393 = vld [vmem:[%s18 + $0x90] sm:$0xff]
  %v4394 = vld [vmem:[%s18 + $0x98] sm:$0xff]
  %v4395 = vld [vmem:[%s18 + $0xa0] sm:$0xff]
  %v4396 = vld [vmem:[%s18 + $0xa8] sm:$0xff]
  %v4397 = vld [vmem:[%s18 + $0xb0] sm:$0xff]
  %v4398 = vld [vmem:[%s18 + $0xb8] sm:$0xff]
  %v4399 = vld [vmem:[%s18 + $0xc0] sm:$0xff]
  %v4400 = vld [vmem:[%s18 + $0xc8] sm:$0xff]
  %v4401 = vld [vmem:[%s18 + $0xd0] sm:$0xff]
  %v4402 = vld [vmem:[%s18 + $0xd8] sm:$0xff]
  %v4403 = vld [vmem:[%s18 + $0xe0] sm:$0xff]
  %v4404 = vld [vmem:[%s18 + $0xe8] sm:$0xff]
  %v4405 = vld [vmem:[%s18 + $0xf0] sm:$0xff]
  %v4406 = vld [vmem:[%s18 + $0xf8] sm:$0xff]
  %v4407 = vld [vmem:[%s19] sm:$0x1]
  %v4409 = vlaneseq
  %v4410 = vshrl.u32 %v4409, 7
  %v4411 = vsub.s32 0, %v4410
  %v4412 = vrot.slane %v4407, %v4411
  %4414 = vmatprep.subr.mxu0 0.0
  %4415 = vmatpush1.msra.mxu0 %v4375
  %4416 = vmatprep.subr.mxu0 0.0
  %4417 = vmatpush1.msra.mxu0 %v4376
  %4418 = vmatprep.subr.mxu0 0.0
  %4419 = vmatpush1.msra.mxu0 %v4377
  %4420 = vmatprep.subr.mxu0 0.0
  %4421 = vmatpush1.msra.mxu0 %v4378
  %4422 = vmatprep.subr.mxu0 0.0
  %4423 = vmatpush1.msra.mxu0 %v4379
  %4424 = vmatprep.subr.mxu0 0.0
  %4425 = vmatpush1.msra.mxu0 %v4380
  %4426 = vmatprep.subr.mxu0 0.0
  %4427 = vmatpush1.msra.mxu0 %v4381
  %4428 = vmatprep.subr.mxu0 0.0
  %4429 = vmatpush1.msra.mxu0 %v4382
  %4430 = vmatprep.subr.mxu0 0.0
  %4431 = vmatpush1.msra.mxu0 %v4383
  %4432 = vmatprep.subr.mxu0 0.0
  %4433 = vmatpush1.msra.mxu0 %v4384
  %4434 = vmatprep.subr.mxu0 0.0
  %4435 = vmatpush1.msra.mxu0 %v4385
  %4436 = vmatprep.subr.mxu0 0.0
  %4437 = vmatpush1.msra.mxu0 %v4386
  %4438 = vmatprep.subr.mxu0 0.0
  %4439 = vmatpush1.msra.mxu0 %v4387
  %4440 = vmatprep.subr.mxu0 0.0
  %4441 = vmatpush1.msra.mxu0 %v4388
  %4442 = vmatprep.subr.mxu0 0.0
  %4443 = vmatpush1.msra.mxu0 %v4389
  %4444 = vmatprep.subr.mxu0 0.0
  %4445 = vmatpush1.msra.mxu0 %v4390
  %4446 = vmatprep.subr.mxu0 0.0
  %4447 = vmatpush1.msra.mxu0 %v4391
  %4448 = vmatprep.subr.mxu0 0.0
  %4449 = vmatpush1.msra.mxu0 %v4392
  %4450 = vmatprep.subr.mxu0 0.0
  %4451 = vmatpush1.msra.mxu0 %v4393
  %4452 = vmatprep.subr.mxu0 0.0
  %4453 = vmatpush1.msra.mxu0 %v4394
  %4454 = vmatprep.subr.mxu0 0.0
  %4455 = vmatpush1.msra.mxu0 %v4395
  %4456 = vmatprep.subr.mxu0 0.0
  %4457 = vmatpush1.msra.mxu0 %v4396
  %4458 = vmatprep.subr.mxu0 0.0
  %4459 = vmatpush1.msra.mxu0 %v4397
  %4460 = vmatprep.subr.mxu0 0.0
  %4461 = vmatpush1.msra.mxu0 %v4398
  %4462 = vmatprep.subr.mxu0 0.0
  %4463 = vmatpush1.msra.mxu0 %v4399
  %4464 = vmatprep.subr.mxu0 0.0
  %4465 = vmatpush1.msra.mxu0 %v4400
  %4466 = vmatprep.subr.mxu0 0.0
  %4467 = vmatpush1.msra.mxu0 %v4401
  %4468 = vmatprep.subr.mxu0 0.0
  %4469 = vmatpush1.msra.mxu0 %v4402
  %4470 = vmatprep.subr.mxu0 0.0
  %4471 = vmatpush1.msra.mxu0 %v4403
  %4472 = vmatprep.subr.mxu0 0.0
  %4473 = vmatpush1.msra.mxu0 %v4404
  %4474 = vmatprep.subr.mxu0 0.0
  %4475 = vmatpush1.msra.mxu0 %v4405
  %4476 = vmatprep.subr.mxu0 0.0
  %4477 = vmatpush1.msra.mxu0 %v4406
  %4478 = vmatprep.mubr.f32.mxu0 %v4368
  %4479 = vmatmul.mubr.f32.gmra.mrb[0].mxu0 %v4367
  %v4480 = vpop.f32.mrb[0].mxu0
  %v4481 = vadd.f32 %v4412, %v4480
  %v4482 = vpop.f32.mrb[0].mxu0
  %4483 = vmatprep.mubr.f32.mxu0 %v4370
  %4484 = vmatmul.mubr.f32.gmra.mrb[0].mxu0 %v4369
  %v4485 = vpop.f32.mrb[0].mxu0
  %v4486 = vadd.f32 %v4412, %v4485
  %v4487 = vpop.f32.mrb[0].mxu0
  %4488 = vmatprep.mubr.f32.mxu0 %v4372
  %4489 = vmatmul.mubr.f32.gmra.mrb[0].mxu0 %v4371
  %v4490 = vpop.f32.mrb[0].mxu0
  %v4491 = vadd.f32 %v4412, %v4490
  %v4492 = vpop.f32.mrb[0].mxu0
  %4493 = vmatprep.mubr.f32.mxu0 %v4374
  %4494 = vmatmul.mubr.f32.gmra.mrb[0].mxu0 %v4373
  %v4495 = vpop.f32.mrb[0].mxu0
  %v4496 = vadd.f32 %v4412, %v4495
  %v4497 = vpop.f32.mrb[0].mxu0
  %4498 = vdwg.mxu0
  %v4499 = vmul.f32 %v4481, 1.442695
  %v4500 = vpow.pop %v4499
  %v4501 = vmul.f32 %v4486, 1.442695
  %v4502 = vpow.pop %v4501
  %v4503 = vmul.f32 %v4491, 1.442695
  %v4504 = vpow.pop %v4503
  %v4505 = vmul.f32 %v4496, 1.442695
  %v4506 = vpow.pop %v4505
  %4511 = vrot.lane.b32.xlu0 %v4500, 96
  %v4512 = vpop.permute.xlu0 %4511
  %4513 = vrot.lane.b32.xlu0 %v4502, 96
  %v4514 = vpop.permute.xlu0 %4513
  %4515 = vrot.lane.b32.xlu0 %v4504, 96
  %v4516 = vpop.permute.xlu0 %4515
  %4517 = vrot.lane.b32.xlu0 %v4506, 96
  %v4518 = vpop.permute.xlu0 %4517
  %v4523 = vmul.f32 %v141, %v4512
  %v4524 = vmul.f32 %v142, %v4514
  %v4525 = vmul.f32 %v143, %v4516
  %v4526 = vmul.f32 %v144, %v4518
  %v4527 = vadd.f32 %v4523, %v4481
  %v4528 = vadd.f32 %v4524, %v4486
  %v4529 = vadd.f32 %v4525, %v4491
  %v4530 = vadd.f32 %v4526, %v4496
  %4535 = vrot.lane.b32.xlu0 %v4527, 64
  %v4536 = vpop.permute.xlu0 %4535
  %4537 = vrot.lane.b32.xlu0 %v4528, 64
  %v4538 = vpop.permute.xlu0 %4537
  %4539 = vrot.lane.b32.xlu0 %v4529, 64
  %v4540 = vpop.permute.xlu0 %4539
  %4541 = vrot.lane.b32.xlu0 %v4530, 64
  %v4542 = vpop.permute.xlu0 %4541
  %vm4547 = vcmask 523264
  %v4548 = vsel %vm4547, %v4481, %v4536
  %v4549 = vsel %vm4547, %v4486, %v4538
  %v4550 = vsel %vm4547, %v4491, %v4540
  %v4551 = vsel %vm4547, %v4496, %v4542
  %vm4552 = vcmask 785408
  %v4553 = vsel %vm4552, %v4548, 0.0
  %v4554 = vsel %vm4552, %v4549, 0.0
  %v4555 = vsel %vm4552, %v4550, 0.0
  %v4556 = vsel %vm4552, %v4551, 0.0
  %4557 = vst [vmem:[%s20] sm:$0xff] %v4553
  %4558 = vst [vmem:[%s20 + $0x8] sm:$0xff] %v4554
  %4559 = vst [vmem:[%s20 + $0x10] sm:$0xff] %v4555
  %4560 = vst [vmem:[%s20 + $0x18] sm:$0xff] %v4556
  // Predicated region
  $region82: #{graph_encoder_forward.1} parent=0 // pred_check
    _
  $region83: #{graph_encoder_forward.1} parent=0 // pred_check_branch
    %4562 = sbr.rel (0) target = $region85
  $region84: #{graph_encoder_forward.1} parent=0 // pred_region
    _
  $region85: #{graph_encoder_forward.1} parent=0 // pred_fallthru
    _
  // Predicated region
  $region86: #{graph_encoder_forward.1} parent=0 // pred_check
    _
  $region87: #{graph_encoder_forward.1} parent=0 // pred_check_branch
    %4564 = sbr.rel (0) target = $region89
  $region88: #{graph_encoder_forward.1} parent=0 // pred_region
    _
  $region89: #{graph_encoder_forward.1} parent=0 // pred_fallthru
    _

</llo_original>
